<compile_context>
chip_gen: v7x
topology: tpu7x:2x2x1
jax: 0.10.0
libtpu: 0.0.40
codegen_flags: <defaults>
</compile_context>

<pallas_src>
import functools

import jax
import jax.numpy as jnp
from jax.experimental import pallas as pl
from jax.experimental.pallas import tpu as pltpu


_BN_EPS = 1e-5
_TC = 128                       # lane-dense output-channel tile
_VMEM_LIMIT = 32 * 1024 * 1024


def _round_up(x, m):
    return (x + m - 1) // m * m


# ----------------------------------------------------------------------------
# Fused per-layer kernel: Conv2d(k4,s2,p1) + bias + LeakyReLU(0.2) + BatchNorm.
# Grid = (C_pad // TC, phase, N).  phase 0: stats; phase 1: recompute + apply.
# ----------------------------------------------------------------------------
def _fused_layer_kernel(x_ref, w0_ref, w1_ref, pgb_ref, o_ref,
                        stats_ref, ss_ref, *, m1, wo, inv_count):
    phase = pl.program_id(1)
    n = pl.program_id(2)

    # Conv as two matmuls over the "half im2col" layout (see _build_taps):
    # rows [0, m1) are the a=0 H-tap, rows [wo, wo+m1) are the a=1 H-tap.
    t0 = x_ref[pl.ds(0, m1), :]
    t1 = x_ref[pl.ds(wo, m1), :]
    y = jnp.dot(t0, w0_ref[...], preferred_element_type=jnp.float32)
    y = y + jnp.dot(t1, w1_ref[...], preferred_element_type=jnp.float32)
    y = y + pgb_ref[0:1, :]                      # bias (row 0 of packed params)
    y = jnp.maximum(y, 0.2 * y)                  # LeakyReLU(0.2)

    @pl.when((phase == 0) & (n == 0))
    def _():
        stats_ref[...] = jnp.zeros_like(stats_ref)

    @pl.when(phase == 0)
    def _():
        stats_ref[...] += jnp.concatenate(
            [jnp.sum(y, axis=0, keepdims=True),
             jnp.sum(y * y, axis=0, keepdims=True)], axis=0)

    @pl.when((phase == 1) & (n == 0))
    def _():
        mean = stats_ref[0:1, :] * inv_count
        var = stats_ref[1:2, :] * inv_count - mean * mean
        inv = jax.lax.rsqrt(var + _BN_EPS)
        scale = pgb_ref[1:2, :] * inv            # gamma * rsqrt(var+eps)
        shift = pgb_ref[2:3, :] - mean * scale   # beta - mean*scale
        ss_ref[...] = jnp.concatenate([scale, shift], axis=0)

    @pl.when(phase == 1)
    def _():
        o_ref[...] = (y * ss_ref[0:1, :] + ss_ref[1:2, :]).astype(o_ref.dtype)


# ----------------------------------------------------------------------------
# XLA glue: compact tap layout (~2x input, bf16) for k=4, s=2, p=1.
#   x5[n, p*Wo + j, ((b*2+dh)*2+dw)*C + c] = xpad[n, 2p+dh, 2(j+b)+dw, c]
# so out[n, i*Wo + j] = x5[n, i*Wo + j] @ W0  +  x5[n, (i+1)*Wo + j] @ W1.
# ----------------------------------------------------------------------------
def _build_taps(x_nhwc):
    N, H, W, C = x_nhwc.shape
    Ho, Wo = H // 2, W // 2
    xp = jnp.pad(x_nhwc, ((0, 0), (1, 1), (1, 1), (0, 0)))
    x2 = xp.reshape(N, Ho + 1, 2, Wo + 1, 2, C)
    x2 = jnp.transpose(x2, (0, 1, 3, 2, 4, 5))            # [n, p, q, dh, dw, c]
    x4 = jnp.stack([x2[:, :, :Wo], x2[:, :, 1:Wo + 1]], axis=3)
    return x4.reshape(N, (Ho + 1) * Wo, 8 * C)            # [n, p*Wo+j, (b,dh,dw,c)]


# ----------------------------------------------------------------------------
# One encoder block.
# ----------------------------------------------------------------------------
def _encoder_layer(x_nhwc, w0, w1, pgb, c_out, out_dtype):
    N, H, W, C = x_nhwc.shape
    Ho, Wo = H // 2, W // 2
    M1, M1p, K2 = Ho * Wo, (Ho + 1) * Wo, 8 * C
    C_pad = w0.shape[1]

    x5 = _build_taps(x_nhwc)                               # (N, M1p, K2) bf16
    grid = (C_pad // _TC, 2, N)

    out = pl.pallas_call(
        functools.partial(_fused_layer_kernel, m1=M1, wo=Wo,
                          inv_count=1.0 / (N * M1)),
        out_shape=jax.ShapeDtypeStruct((N, M1, C_pad), out_dtype),
        grid_spec=pltpu.PrefetchScalarGridSpec(
            num_scalar_prefetch=0,
            grid=grid,
            in_specs=[
                pl.BlockSpec((None, M1p, K2), lambda c, p, n: (n, 0, 0)),  # taps
                pl.BlockSpec((K2, _TC), lambda c, p, n: (0, c)),           # W (a=0)
                pl.BlockSpec((K2, _TC), lambda c, p, n: (0, c)),           # W (a=1)
                pl.BlockSpec((3, _TC), lambda c, p, n: (0, c)),            # bias/g/b
            ],
            out_specs=pl.BlockSpec((None, M1, _TC), lambda c, p, n: (n, 0, c)),
            scratch_shapes=[pltpu.VMEM((2, _TC), jnp.float32),   # sum / sumsq
                            pltpu.VMEM((2, _TC), jnp.float32)]), # scale / shift
        compiler_params=pltpu.CompilerParams(
            dimension_semantics=("parallel", "arbitrary", "arbitrary"),
            vmem_limit_bytes=_VMEM_LIMIT),
    )(x5, w0, w1, pgb)

    return out[:, :, :c_out].reshape(N, Ho, Wo, c_out)


# ----------------------------------------------------------------------------
# Parameter preparation (hoisted out of the forward pass).
# ----------------------------------------------------------------------------
def prepare_params(params):
    """Returns ((W_a0, W_a1, packed bias/gamma/beta), ...) and static C_out's."""
    prepared, c_outs = [], []
    for (w, b, g, bt) in params:
        c_out, c_in = w.shape[0], w.shape[1]
        c_pad = _round_up(c_out, _TC)
        # (C_out, C_in, KH, KW) -> (KH, KW, C_in, C_out) -> split KH=(a,dh),
        # KW=(b,dw) -> (a, b, dh, dw, c, o) -> (2, 8*C_in, C_out).
        wt = jnp.transpose(w, (2, 3, 1, 0)).reshape(2, 2, 2, 2, c_in, c_out)
        wt = jnp.transpose(wt, (0, 2, 1, 3, 4, 5)).reshape(2, 8 * c_in, c_out)
        wt = jnp.pad(wt, ((0, 0), (0, 0), (0, c_pad - c_out))).astype(jnp.bfloat16)
        pad = (0, c_pad - c_out)
        pgb = jnp.stack([jnp.pad(b, pad), jnp.pad(g, pad), jnp.pad(bt, pad)]
                        ).astype(jnp.float32)              # (3, C_pad)
        prepared.append((wt[0], wt[1], pgb))
        c_outs.append(c_out)
    return tuple(prepared), tuple(c_outs)


@functools.partial(jax.jit, static_argnums=(2,))
def encoder_forward(x_nchw, prepared, c_outs):
    h = jnp.transpose(x_nchw, (0, 2, 3, 1)).astype(jnp.bfloat16)   # NCHW -> NHWC
    n_layers = len(c_outs)
    for li, ((w0, w1, pgb), c_out) in enumerate(zip(prepared, c_outs)):
        out_dtype = jnp.float32 if li == n_layers - 1 else jnp.bfloat16
        h = _encoder_layer(h, w0, w1, pgb, c_out, out_dtype)
    # PyTorch's .view(batch, -1) flattens in NCHW order -> one transpose back.
    h = jnp.transpose(h, (0, 3, 1, 2))
    return h.reshape(h.shape[0], -1)


# ----------------------------------------------------------------------------
# Pure-JAX f32 reference (for correctness check).
# ----------------------------------------------------------------------------
def encoder_forward_ref(x_nchw, params):
    h = x_nchw
    for (w, b, g, bt) in params:
        y = jax.lax.conv_general_dilated(
            h, w, window_strides=(2, 2), padding=((1, 1), (1, 1)),
            dimension_numbers=("NCHW", "OIHW", "NCHW"),
        ) + b.reshape(1, -1, 1, 1)
        y = jnp.where(y > 0, y, 0.2 * y)
        mean = jnp.mean(y, axis=(0, 2, 3), keepdims=True)
        var = jnp.mean(jnp.square(y - mean), axis=(0, 2, 3), keepdims=True)
        y = (y - mean) * jax.lax.rsqrt(var + _BN_EPS)
        h = g.reshape(1, -1, 1, 1) * y + bt.reshape(1, -1, 1, 1)
    return h.reshape(h.shape[0], -1)


# ----------------------------------------------------------------------------
# Deterministic parameter init (shapes per the PyTorch module __init__).
# ----------------------------------------------------------------------------
def init_params(key, nc, nef):
    chans = [(nc, nef), (nef, nef * 2), (nef * 2, nef * 4), (nef * 4, nef * 8)]
    params = []
    for (cin, cout) in chans:
        key, kw, kb, kg, kbt = jax.random.split(key, 5)
        w = 0.1 * jax.random.normal(kw, (cout, cin, 4, 4), jnp.float32)
        b = 0.1 * jax.random.normal(kb, (cout,), jnp.float32)
        g = 1.0 + 0.1 * jax.random.normal(kg, (cout,), jnp.float32)
        bt = 0.1 * jax.random.normal(kbt, (cout,), jnp.float32)
        params.append((w, b, g, bt))
    return params


if __name__ == "__main__":
    # Small shapes: nc=4, nef=8, isize=32 -> spatial 32 -> 16 -> 8 -> 4 -> 2
    nc, nef, isize, batch = 4, 8, 32, 2
    key = jax.random.PRNGKey(0)
    kx, kp = jax.random.split(key)
    x = jax.random.normal(kx, (batch, nc, isize, isize), jnp.float32)
    params = init_params(kp, nc, nef)
    prepared, c_outs = prepare_params(params)

    out = jax.block_until_ready(encoder_forward(x, prepared, c_outs))
    ref = jax.block_until_ready(encoder_forward_ref(x, params))

    assert out.shape == (batch, nef * 8 * (isize // 16) ** 2), out.shape
    # Tolerance accounts for bf16 MXU inputs / bf16 inter-layer activations
    # (f32 accumulation and epilogue).
    err = float(jnp.max(jnp.abs(out - ref)))
    assert jnp.allclose(out, ref, rtol=5e-2, atol=5e-2), (
        f"mismatch vs reference: max abs err {err}")
    print("KERNEL_OK")
</pallas_src>

<mosaic_0001>
module attributes {stable_mosaic.version = 11 : i64} {
  func.func @_fused_layer_kernel(%arg0: i32, %arg1: i32, %arg2: i32, %arg3: memref<1x272x32xbf16, #tpu.memory_space<vmem>>, %arg4: memref<32x128xbf16, #tpu.memory_space<vmem>>, %arg5: memref<32x128xbf16, #tpu.memory_space<vmem>>, %arg6: memref<3x128xf32, #tpu.memory_space<vmem>>, %arg7: memref<1x256x128xbf16, #tpu.memory_space<vmem>>, %arg8: memref<2x128xf32, #tpu.memory_space<vmem>>, %arg9: memref<2x128xf32, #tpu.memory_space<vmem>>) attributes {dimension_semantics = [#tpu.dimension_semantics<parallel>, #tpu.dimension_semantics<arbitrary>, #tpu.dimension_semantics<arbitrary>], iteration_bounds = array<i64: 1, 2, 2>, scalar_prefetch = 0 : i64, scratch_operands = 2 : i64, tpu.core_type = #tpu.core_type<tc>, window_params = [{transform_indices = @transform_0, window_bounds = array<i64: 1, 272, 32>}, {transform_indices = @transform_1, window_bounds = array<i64: 32, 128>}, {transform_indices = @transform_2, window_bounds = array<i64: 32, 128>}, {transform_indices = @transform_3, window_bounds = array<i64: 3, 128>}, {transform_indices = @transform_4, window_bounds = array<i64: 1, 256, 128>}]} {
    %c0 = arith.constant 0 : index
    %c0_0 = arith.constant 0 : index
    %c0_1 = arith.constant 0 : index
    %0 = vector.load %arg3[%c0, %c0_0, %c0_1] : memref<1x272x32xbf16, #tpu.memory_space<vmem>>, vector<1x256x32xbf16>
    %1 = vector.shape_cast %0 : vector<1x256x32xbf16> to vector<256x32xbf16>
    %c0_2 = arith.constant 0 : index
    %c16 = arith.constant 16 : index
    %c0_3 = arith.constant 0 : index
    %2 = vector.load %arg3[%c0_2, %c16, %c0_3] : memref<1x272x32xbf16, #tpu.memory_space<vmem>>, vector<1x256x32xbf16>
    %3 = vector.shape_cast %2 : vector<1x256x32xbf16> to vector<256x32xbf16>
    %c0_4 = arith.constant 0 : index
    %c0_5 = arith.constant 0 : index
    %4 = vector.load %arg4[%c0_4, %c0_5] : memref<32x128xbf16, #tpu.memory_space<vmem>>, vector<32x128xbf16>
    %cst = arith.constant dense<0.000000e+00> : vector<256x128xf32>
    %5 = tpu.matmul %1, %4, %cst {dimension_numbers = #tpu.dot_dimension_numbers<[1], [0], [0], [1], [0, 0, 1, 1], [], []>} : vector<256x32xbf16>, vector<32x128xbf16>, vector<256x128xf32> -> vector<256x128xf32>
    %c0_6 = arith.constant 0 : index
    %c0_7 = arith.constant 0 : index
    %6 = vector.load %arg5[%c0_6, %c0_7] : memref<32x128xbf16, #tpu.memory_space<vmem>>, vector<32x128xbf16>
    %cst_8 = arith.constant dense<0.000000e+00> : vector<256x128xf32>
    %7 = tpu.matmul %3, %6, %cst_8 {dimension_numbers = #tpu.dot_dimension_numbers<[1], [0], [0], [1], [0, 0, 1, 1], [], []>} : vector<256x32xbf16>, vector<32x128xbf16>, vector<256x128xf32> -> vector<256x128xf32>
    %8 = arith.addf %5, %7 : vector<256x128xf32>
    %c0_9 = arith.constant 0 : index
    %c0_10 = arith.constant 0 : index
    %9 = vector.load %arg6[%c0_9, %c0_10] : memref<3x128xf32, #tpu.memory_space<vmem>>, vector<1x128xf32>
    %10 = vector.broadcast %9 : vector<1x128xf32> to vector<256x128xf32>
    %11 = arith.addf %8, %10 : vector<256x128xf32>
    %cst_11 = arith.constant 2.000000e-01 : f32
    %12 = vector.broadcast %cst_11 : f32 to vector<256x128xf32>
    %13 = arith.mulf %12, %11 : vector<256x128xf32>
    %14 = arith.maximumf %11, %13 : vector<256x128xf32>
    %c0_i32 = arith.constant 0 : i32
    %15 = arith.cmpi eq, %arg1, %c0_i32 : i32
    %c0_i32_12 = arith.constant 0 : i32
    %16 = arith.cmpi eq, %arg2, %c0_i32_12 : i32
    %17 = arith.andi %15, %16 : i1
    %18 = arith.extui %17 : i1 to i32
    %c0_i32_13 = arith.constant 0 : i32
    %19 = arith.cmpi ne, %18, %c0_i32_13 : i32
    scf.if %19 {
      %cst_20 = arith.constant 0.000000e+00 : f32
      %31 = vector.broadcast %cst_20 : f32 to vector<2x128xf32>
      %c0_21 = arith.constant 0 : index
      %c0_22 = arith.constant 0 : index
      %32 = vector.load %arg8[%c0_21, %c0_22] : memref<2x128xf32, #tpu.memory_space<vmem>>, vector<2x128xf32>
      tpu.vector_store %arg8[%c0_21, %c0_22], %31 {strides = array<i32>} : memref<2x128xf32, #tpu.memory_space<vmem>>, vector<2x128xf32>,
    } else {
    }
    %c0_i32_14 = arith.constant 0 : i32
    %20 = arith.cmpi eq, %arg1, %c0_i32_14 : i32
    %21 = arith.extui %20 : i1 to i32
    %c0_i32_15 = arith.constant 0 : i32
    %22 = arith.cmpi ne, %21, %c0_i32_15 : i32
    scf.if %22 {
      %c0_20 = arith.constant 0 : index
      %c0_21 = arith.constant 0 : index
      %31 = vector.load %arg8[%c0_20, %c0_21] : memref<2x128xf32, #tpu.memory_space<vmem>>, vector<2x128xf32>
      %cst_22 = arith.constant dense<0.000000e+00> : vector<128xf32>
      %32 = vector.multi_reduction <add>, %14, %cst_22 [0] : vector<256x128xf32> to vector<128xf32>
      %33 = vector.shape_cast %32 : vector<128xf32> to vector<1x128xf32>
      %34 = arith.mulf %14, %14 : vector<256x128xf32>
      %cst_23 = arith.constant dense<0.000000e+00> : vector<128xf32>
      %35 = vector.multi_reduction <add>, %34, %cst_23 [0] : vector<256x128xf32> to vector<128xf32>
      %36 = vector.shape_cast %35 : vector<128xf32> to vector<1x128xf32>
      %37 = tpu.concatenate %33, %36 in 0 : vector<1x128xf32>, vector<1x128xf32> -> vector<2x128xf32>
      %38 = arith.addf %31, %37 : vector<2x128xf32>
      %c0_24 = arith.constant 0 : index
      %c0_25 = arith.constant 0 : index
      %39 = vector.load %arg8[%c0_24, %c0_25] : memref<2x128xf32, #tpu.memory_space<vmem>>, vector<2x128xf32>
      tpu.vector_store %arg8[%c0_24, %c0_25], %38 {strides = array<i32>} : memref<2x128xf32, #tpu.memory_space<vmem>>, vector<2x128xf32>,
    } else {
    }
    %c1_i32 = arith.constant 1 : i32
    %23 = arith.cmpi eq, %arg1, %c1_i32 : i32
    %c0_i32_16 = arith.constant 0 : i32
    %24 = arith.cmpi eq, %arg2, %c0_i32_16 : i32
    %25 = arith.andi %23, %24 : i1
    %26 = arith.extui %25 : i1 to i32
    %c0_i32_17 = arith.constant 0 : i32
    %27 = arith.cmpi ne, %26, %c0_i32_17 : i32
    scf.if %27 {
      %c0_20 = arith.constant 0 : index
      %c0_21 = arith.constant 0 : index
      %31 = vector.load %arg8[%c0_20, %c0_21] : memref<2x128xf32, #tpu.memory_space<vmem>>, vector<1x128xf32>
      %cst_22 = arith.constant 0.001953125 : f32
      %32 = vector.broadcast %cst_22 : f32 to vector<1x128xf32>
      %33 = arith.mulf %31, %32 : vector<1x128xf32>
      %c1 = arith.constant 1 : index
      %c0_23 = arith.constant 0 : index
      %34 = vector.load %arg8[%c1, %c0_23] : memref<2x128xf32, #tpu.memory_space<vmem>>, vector<1x128xf32>
      %cst_24 = arith.constant 0.001953125 : f32
      %35 = vector.broadcast %cst_24 : f32 to vector<1x128xf32>
      %36 = arith.mulf %34, %35 : vector<1x128xf32>
      %37 = arith.mulf %33, %33 : vector<1x128xf32>
      %38 = arith.subf %36, %37 : vector<1x128xf32>
      %cst_25 = arith.constant 9.99999974E-6 : f32
      %39 = vector.broadcast %cst_25 : f32 to vector<1x128xf32>
      %40 = arith.addf %38, %39 : vector<1x128xf32>
      %41 = math.rsqrt %40 : vector<1x128xf32>
      %c1_26 = arith.constant 1 : index
      %c0_27 = arith.constant 0 : index
      %42 = vector.load %arg6[%c1_26, %c0_27] : memref<3x128xf32, #tpu.memory_space<vmem>>, vector<1x128xf32>
      %43 = arith.mulf %42, %41 : vector<1x128xf32>
      %c2 = arith.constant 2 : index
      %c0_28 = arith.constant 0 : index
      %44 = vector.load %arg6[%c2, %c0_28] : memref<3x128xf32, #tpu.memory_space<vmem>>, vector<1x128xf32>
      %45 = arith.mulf %33, %43 : vector<1x128xf32>
      %46 = arith.subf %44, %45 : vector<1x128xf32>
      %47 = tpu.concatenate %43, %46 in 0 : vector<1x128xf32>, vector<1x128xf32> -> vector<2x128xf32>
      %c0_29 = arith.constant 0 : index
      %c0_30 = arith.constant 0 : index
      %48 = vector.load %arg9[%c0_29, %c0_30] : memref<2x128xf32, #tpu.memory_space<vmem>>, vector<2x128xf32>
      tpu.vector_store %arg9[%c0_29, %c0_30], %47 {strides = array<i32>} : memref<2x128xf32, #tpu.memory_space<vmem>>, vector<2x128xf32>,
    } else {
    }
    %c1_i32_18 = arith.constant 1 : i32
    %28 = arith.cmpi eq, %arg1, %c1_i32_18 : i32
    %29 = arith.extui %28 : i1 to i32
    %c0_i32_19 = arith.constant 0 : i32
    %30 = arith.cmpi ne, %29, %c0_i32_19 : i32
    scf.if %30 {
      %c0_20 = arith.constant 0 : index
      %c0_21 = arith.constant 0 : index
      %31 = vector.load %arg9[%c0_20, %c0_21] : memref<2x128xf32, #tpu.memory_space<vmem>>, vector<1x128xf32>
      %32 = vector.broadcast %31 : vector<1x128xf32> to vector<256x128xf32>
      %33 = arith.mulf %14, %32 : vector<256x128xf32>
      %c1 = arith.constant 1 : index
      %c0_22 = arith.constant 0 : index
      %34 = vector.load %arg9[%c1, %c0_22] : memref<2x128xf32, #tpu.memory_space<vmem>>, vector<1x128xf32>
      %35 = vector.broadcast %34 : vector<1x128xf32> to vector<256x128xf32>
      %36 = arith.addf %33, %35 : vector<256x128xf32>
      %37 = arith.truncf %36 : vector<256x128xf32> to vector<256x128xbf16>
      %c0_23 = arith.constant 0 : index
      %c0_24 = arith.constant 0 : index
      %c0_25 = arith.constant 0 : index
      %38 = vector.load %arg7[%c0_23, %c0_24, %c0_25] : memref<1x256x128xbf16, #tpu.memory_space<vmem>>, vector<1x256x128xbf16>
      %39 = vector.shape_cast %38 : vector<1x256x128xbf16> to vector<256x128xbf16>
      %40 = vector.shape_cast %37 : vector<256x128xbf16> to vector<1x256x128xbf16>
      tpu.vector_store %arg7[%c0_23, %c0_24, %c0_25], %40 {strides = array<i32>} : memref<1x256x128xbf16, #tpu.memory_space<vmem>>, vector<1x256x128xbf16>,
    } else {
    }
    return
  }
  func.func @transform_0(%arg0: i32, %arg1: i32, %arg2: i32) -> (i32, i32, i32) {
    %c0_i32 = arith.constant 0 : i32
    %c0_i32_0 = arith.constant 0 : i32
    %c0_i32_1 = arith.constant 0 : i32
    return %arg2, %c0_i32, %c0_i32_0 : i32, i32, i32
  }
  func.func @transform_1(%arg0: i32, %arg1: i32, %arg2: i32) -> (i32, i32) {
    %c0_i32 = arith.constant 0 : i32
    %c0_i32_0 = arith.constant 0 : i32
    return %c0_i32, %arg0 : i32, i32
  }
  func.func @transform_2(%arg0: i32, %arg1: i32, %arg2: i32) -> (i32, i32) {
    %c0_i32 = arith.constant 0 : i32
    %c0_i32_0 = arith.constant 0 : i32
    return %c0_i32, %arg0 : i32, i32
  }
  func.func @transform_3(%arg0: i32, %arg1: i32, %arg2: i32) -> (i32, i32) {
    %c0_i32 = arith.constant 0 : i32
    %c0_i32_0 = arith.constant 0 : i32
    return %c0_i32, %arg0 : i32, i32
  }
  func.func @transform_4(%arg0: i32, %arg1: i32, %arg2: i32) -> (i32, i32, i32) {
    %c0_i32 = arith.constant 0 : i32
    %c0_i32_0 = arith.constant 0 : i32
    return %arg2, %c0_i32, %arg0 : i32, i32, i32
  }
}

module attributes {stable_mosaic.version = 11 : i64} {
  func.func @_fused_layer_kernel(%arg0: i32, %arg1: i32, %arg2: i32, %arg3: memref<1x72x64xbf16, #tpu.memory_space<vmem>>, %arg4: memref<64x128xbf16, #tpu.memory_space<vmem>>, %arg5: memref<64x128xbf16, #tpu.memory_space<vmem>>, %arg6: memref<3x128xf32, #tpu.memory_space<vmem>>, %arg7: memref<1x64x128xbf16, #tpu.memory_space<vmem>>, %arg8: memref<2x128xf32, #tpu.memory_space<vmem>>, %arg9: memref<2x128xf32, #tpu.memory_space<vmem>>) attributes {dimension_semantics = [#tpu.dimension_semantics<parallel>, #tpu.dimension_semantics<arbitrary>, #tpu.dimension_semantics<arbitrary>], iteration_bounds = array<i64: 1, 2, 2>, scalar_prefetch = 0 : i64, scratch_operands = 2 : i64, tpu.core_type = #tpu.core_type<tc>, window_params = [{transform_indices = @transform_0, window_bounds = array<i64: 1, 72, 64>}, {transform_indices = @transform_1, window_bounds = array<i64: 64, 128>}, {transform_indices = @transform_2, window_bounds = array<i64: 64, 128>}, {transform_indices = @transform_3, window_bounds = array<i64: 3, 128>}, {transform_indices = @transform_4, window_bounds = array<i64: 1, 64, 128>}]} {
    %c0 = arith.constant 0 : index
    %c0_0 = arith.constant 0 : index
    %c0_1 = arith.constant 0 : index
    %0 = vector.load %arg3[%c0, %c0_0, %c0_1] : memref<1x72x64xbf16, #tpu.memory_space<vmem>>, vector<1x64x64xbf16>
    %1 = vector.shape_cast %0 : vector<1x64x64xbf16> to vector<64x64xbf16>
    %c0_2 = arith.constant 0 : index
    %c8 = arith.constant 8 : index
    %c0_3 = arith.constant 0 : index
    %2 = vector.load %arg3[%c0_2, %c8, %c0_3] : memref<1x72x64xbf16, #tpu.memory_space<vmem>>, vector<1x64x64xbf16>
    %3 = vector.shape_cast %2 : vector<1x64x64xbf16> to vector<64x64xbf16>
    %c0_4 = arith.constant 0 : index
    %c0_5 = arith.constant 0 : index
    %4 = vector.load %arg4[%c0_4, %c0_5] : memref<64x128xbf16, #tpu.memory_space<vmem>>, vector<64x128xbf16>
    %cst = arith.constant dense<0.000000e+00> : vector<64x128xf32>
    %5 = tpu.matmul %1, %4, %cst {dimension_numbers = #tpu.dot_dimension_numbers<[1], [0], [0], [1], [0, 0, 1, 1], [], []>} : vector<64x64xbf16>, vector<64x128xbf16>, vector<64x128xf32> -> vector<64x128xf32>
    %c0_6 = arith.constant 0 : index
    %c0_7 = arith.constant 0 : index
    %6 = vector.load %arg5[%c0_6, %c0_7] : memref<64x128xbf16, #tpu.memory_space<vmem>>, vector<64x128xbf16>
    %cst_8 = arith.constant dense<0.000000e+00> : vector<64x128xf32>
    %7 = tpu.matmul %3, %6, %cst_8 {dimension_numbers = #tpu.dot_dimension_numbers<[1], [0], [0], [1], [0, 0, 1, 1], [], []>} : vector<64x64xbf16>, vector<64x128xbf16>, vector<64x128xf32> -> vector<64x128xf32>
    %8 = arith.addf %5, %7 : vector<64x128xf32>
    %c0_9 = arith.constant 0 : index
    %c0_10 = arith.constant 0 : index
    %9 = vector.load %arg6[%c0_9, %c0_10] : memref<3x128xf32, #tpu.memory_space<vmem>>, vector<1x128xf32>
    %10 = vector.broadcast %9 : vector<1x128xf32> to vector<64x128xf32>
    %11 = arith.addf %8, %10 : vector<64x128xf32>
    %cst_11 = arith.constant 2.000000e-01 : f32
    %12 = vector.broadcast %cst_11 : f32 to vector<64x128xf32>
    %13 = arith.mulf %12, %11 : vector<64x128xf32>
    %14 = arith.maximumf %11, %13 : vector<64x128xf32>
    %c0_i32 = arith.constant 0 : i32
    %15 = arith.cmpi eq, %arg1, %c0_i32 : i32
    %c0_i32_12 = arith.constant 0 : i32
    %16 = arith.cmpi eq, %arg2, %c0_i32_12 : i32
    %17 = arith.andi %15, %16 : i1
    %18 = arith.extui %17 : i1 to i32
    %c0_i32_13 = arith.constant 0 : i32
    %19 = arith.cmpi ne, %18, %c0_i32_13 : i32
    scf.if %19 {
      %cst_20 = arith.constant 0.000000e+00 : f32
      %31 = vector.broadcast %cst_20 : f32 to vector<2x128xf32>
      %c0_21 = arith.constant 0 : index
      %c0_22 = arith.constant 0 : index
      %32 = vector.load %arg8[%c0_21, %c0_22] : memref<2x128xf32, #tpu.memory_space<vmem>>, vector<2x128xf32>
      tpu.vector_store %arg8[%c0_21, %c0_22], %31 {strides = array<i32>} : memref<2x128xf32, #tpu.memory_space<vmem>>, vector<2x128xf32>,
    } else {
    }
    %c0_i32_14 = arith.constant 0 : i32
    %20 = arith.cmpi eq, %arg1, %c0_i32_14 : i32
    %21 = arith.extui %20 : i1 to i32
    %c0_i32_15 = arith.constant 0 : i32
    %22 = arith.cmpi ne, %21, %c0_i32_15 : i32
    scf.if %22 {
      %c0_20 = arith.constant 0 : index
      %c0_21 = arith.constant 0 : index
      %31 = vector.load %arg8[%c0_20, %c0_21] : memref<2x128xf32, #tpu.memory_space<vmem>>, vector<2x128xf32>
      %cst_22 = arith.constant dense<0.000000e+00> : vector<128xf32>
      %32 = vector.multi_reduction <add>, %14, %cst_22 [0] : vector<64x128xf32> to vector<128xf32>
      %33 = vector.shape_cast %32 : vector<128xf32> to vector<1x128xf32>
      %34 = arith.mulf %14, %14 : vector<64x128xf32>
      %cst_23 = arith.constant dense<0.000000e+00> : vector<128xf32>
      %35 = vector.multi_reduction <add>, %34, %cst_23 [0] : vector<64x128xf32> to vector<128xf32>
      %36 = vector.shape_cast %35 : vector<128xf32> to vector<1x128xf32>
      %37 = tpu.concatenate %33, %36 in 0 : vector<1x128xf32>, vector<1x128xf32> -> vector<2x128xf32>
      %38 = arith.addf %31, %37 : vector<2x128xf32>
      %c0_24 = arith.constant 0 : index
      %c0_25 = arith.constant 0 : index
      %39 = vector.load %arg8[%c0_24, %c0_25] : memref<2x128xf32, #tpu.memory_space<vmem>>, vector<2x128xf32>
      tpu.vector_store %arg8[%c0_24, %c0_25], %38 {strides = array<i32>} : memref<2x128xf32, #tpu.memory_space<vmem>>, vector<2x128xf32>,
    } else {
    }
    %c1_i32 = arith.constant 1 : i32
    %23 = arith.cmpi eq, %arg1, %c1_i32 : i32
    %c0_i32_16 = arith.constant 0 : i32
    %24 = arith.cmpi eq, %arg2, %c0_i32_16 : i32
    %25 = arith.andi %23, %24 : i1
    %26 = arith.extui %25 : i1 to i32
    %c0_i32_17 = arith.constant 0 : i32
    %27 = arith.cmpi ne, %26, %c0_i32_17 : i32
    scf.if %27 {
      %c0_20 = arith.constant 0 : index
      %c0_21 = arith.constant 0 : index
      %31 = vector.load %arg8[%c0_20, %c0_21] : memref<2x128xf32, #tpu.memory_space<vmem>>, vector<1x128xf32>
      %cst_22 = arith.constant 7.812500e-03 : f32
      %32 = vector.broadcast %cst_22 : f32 to vector<1x128xf32>
      %33 = arith.mulf %31, %32 : vector<1x128xf32>
      %c1 = arith.constant 1 : index
      %c0_23 = arith.constant 0 : index
      %34 = vector.load %arg8[%c1, %c0_23] : memref<2x128xf32, #tpu.memory_space<vmem>>, vector<1x128xf32>
      %cst_24 = arith.constant 7.812500e-03 : f32
      %35 = vector.broadcast %cst_24 : f32 to vector<1x128xf32>
      %36 = arith.mulf %34, %35 : vector<1x128xf32>
      %37 = arith.mulf %33, %33 : vector<1x128xf32>
      %38 = arith.subf %36, %37 : vector<1x128xf32>
      %cst_25 = arith.constant 9.99999974E-6 : f32
      %39 = vector.broadcast %cst_25 : f32 to vector<1x128xf32>
      %40 = arith.addf %38, %39 : vector<1x128xf32>
      %41 = math.rsqrt %40 : vector<1x128xf32>
      %c1_26 = arith.constant 1 : index
      %c0_27 = arith.constant 0 : index
      %42 = vector.load %arg6[%c1_26, %c0_27] : memref<3x128xf32, #tpu.memory_space<vmem>>, vector<1x128xf32>
      %43 = arith.mulf %42, %41 : vector<1x128xf32>
      %c2 = arith.constant 2 : index
      %c0_28 = arith.constant 0 : index
      %44 = vector.load %arg6[%c2, %c0_28] : memref<3x128xf32, #tpu.memory_space<vmem>>, vector<1x128xf32>
      %45 = arith.mulf %33, %43 : vector<1x128xf32>
      %46 = arith.subf %44, %45 : vector<1x128xf32>
      %47 = tpu.concatenate %43, %46 in 0 : vector<1x128xf32>, vector<1x128xf32> -> vector<2x128xf32>
      %c0_29 = arith.constant 0 : index
      %c0_30 = arith.constant 0 : index
      %48 = vector.load %arg9[%c0_29, %c0_30] : memref<2x128xf32, #tpu.memory_space<vmem>>, vector<2x128xf32>
      tpu.vector_store %arg9[%c0_29, %c0_30], %47 {strides = array<i32>} : memref<2x128xf32, #tpu.memory_space<vmem>>, vector<2x128xf32>,
    } else {
    }
    %c1_i32_18 = arith.constant 1 : i32
    %28 = arith.cmpi eq, %arg1, %c1_i32_18 : i32
    %29 = arith.extui %28 : i1 to i32
    %c0_i32_19 = arith.constant 0 : i32
    %30 = arith.cmpi ne, %29, %c0_i32_19 : i32
    scf.if %30 {
      %c0_20 = arith.constant 0 : index
      %c0_21 = arith.constant 0 : index
      %31 = vector.load %arg9[%c0_20, %c0_21] : memref<2x128xf32, #tpu.memory_space<vmem>>, vector<1x128xf32>
      %32 = vector.broadcast %31 : vector<1x128xf32> to vector<64x128xf32>
      %33 = arith.mulf %14, %32 : vector<64x128xf32>
      %c1 = arith.constant 1 : index
      %c0_22 = arith.constant 0 : index
      %34 = vector.load %arg9[%c1, %c0_22] : memref<2x128xf32, #tpu.memory_space<vmem>>, vector<1x128xf32>
      %35 = vector.broadcast %34 : vector<1x128xf32> to vector<64x128xf32>
      %36 = arith.addf %33, %35 : vector<64x128xf32>
      %37 = arith.truncf %36 : vector<64x128xf32> to vector<64x128xbf16>
      %c0_23 = arith.constant 0 : index
      %c0_24 = arith.constant 0 : index
      %c0_25 = arith.constant 0 : index
      %38 = vector.load %arg7[%c0_23, %c0_24, %c0_25] : memref<1x64x128xbf16, #tpu.memory_space<vmem>>, vector<1x64x128xbf16>
      %39 = vector.shape_cast %38 : vector<1x64x128xbf16> to vector<64x128xbf16>
      %40 = vector.shape_cast %37 : vector<64x128xbf16> to vector<1x64x128xbf16>
      tpu.vector_store %arg7[%c0_23, %c0_24, %c0_25], %40 {strides = array<i32>} : memref<1x64x128xbf16, #tpu.memory_space<vmem>>, vector<1x64x128xbf16>,
    } else {
    }
    return
  }
  func.func @transform_0(%arg0: i32, %arg1: i32, %arg2: i32) -> (i32, i32, i32) {
    %c0_i32 = arith.constant 0 : i32
    %c0_i32_0 = arith.constant 0 : i32
    %c0_i32_1 = arith.constant 0 : i32
    return %arg2, %c0_i32, %c0_i32_0 : i32, i32, i32
  }
  func.func @transform_1(%arg0: i32, %arg1: i32, %arg2: i32) -> (i32, i32) {
    %c0_i32 = arith.constant 0 : i32
    %c0_i32_0 = arith.constant 0 : i32
    return %c0_i32, %arg0 : i32, i32
  }
  func.func @transform_2(%arg0: i32, %arg1: i32, %arg2: i32) -> (i32, i32) {
    %c0_i32 = arith.constant 0 : i32
    %c0_i32_0 = arith.constant 0 : i32
    return %c0_i32, %arg0 : i32, i32
  }
  func.func @transform_3(%arg0: i32, %arg1: i32, %arg2: i32) -> (i32, i32) {
    %c0_i32 = arith.constant 0 : i32
    %c0_i32_0 = arith.constant 0 : i32
    return %c0_i32, %arg0 : i32, i32
  }
  func.func @transform_4(%arg0: i32, %arg1: i32, %arg2: i32) -> (i32, i32, i32) {
    %c0_i32 = arith.constant 0 : i32
    %c0_i32_0 = arith.constant 0 : i32
    return %arg2, %c0_i32, %arg0 : i32, i32, i32
  }
}

module attributes {stable_mosaic.version = 11 : i64} {
  func.func @_fused_layer_kernel(%arg0: i32, %arg1: i32, %arg2: i32, %arg3: memref<1x20x128xbf16, #tpu.memory_space<vmem>>, %arg4: memref<128x128xbf16, #tpu.memory_space<vmem>>, %arg5: memref<128x128xbf16, #tpu.memory_space<vmem>>, %arg6: memref<3x128xf32, #tpu.memory_space<vmem>>, %arg7: memref<1x16x128xbf16, #tpu.memory_space<vmem>>, %arg8: memref<2x128xf32, #tpu.memory_space<vmem>>, %arg9: memref<2x128xf32, #tpu.memory_space<vmem>>) attributes {dimension_semantics = [#tpu.dimension_semantics<parallel>, #tpu.dimension_semantics<arbitrary>, #tpu.dimension_semantics<arbitrary>], iteration_bounds = array<i64: 1, 2, 2>, scalar_prefetch = 0 : i64, scratch_operands = 2 : i64, tpu.core_type = #tpu.core_type<tc>, window_params = [{transform_indices = @transform_0, window_bounds = array<i64: 1, 20, 128>}, {transform_indices = @transform_1, window_bounds = array<i64: 128, 128>}, {transform_indices = @transform_2, window_bounds = array<i64: 128, 128>}, {transform_indices = @transform_3, window_bounds = array<i64: 3, 128>}, {transform_indices = @transform_4, window_bounds = array<i64: 1, 16, 128>}]} {
    %c0 = arith.constant 0 : index
    %c0_0 = arith.constant 0 : index
    %c0_1 = arith.constant 0 : index
    %0 = vector.load %arg3[%c0, %c0_0, %c0_1] : memref<1x20x128xbf16, #tpu.memory_space<vmem>>, vector<1x16x128xbf16>
    %1 = vector.shape_cast %0 : vector<1x16x128xbf16> to vector<16x128xbf16>
    %c0_2 = arith.constant 0 : index
    %c4 = arith.constant 4 : index
    %c0_3 = arith.constant 0 : index
    %2 = vector.load %arg3[%c0_2, %c4, %c0_3] : memref<1x20x128xbf16, #tpu.memory_space<vmem>>, vector<1x16x128xbf16>
    %3 = vector.shape_cast %2 : vector<1x16x128xbf16> to vector<16x128xbf16>
    %c0_4 = arith.constant 0 : index
    %c0_5 = arith.constant 0 : index
    %4 = vector.load %arg4[%c0_4, %c0_5] : memref<128x128xbf16, #tpu.memory_space<vmem>>, vector<128x128xbf16>
    %cst = arith.constant dense<0.000000e+00> : vector<16x128xf32>
    %5 = tpu.matmul %1, %4, %cst {dimension_numbers = #tpu.dot_dimension_numbers<[1], [0], [0], [1], [0, 0, 1, 1], [], []>} : vector<16x128xbf16>, vector<128x128xbf16>, vector<16x128xf32> -> vector<16x128xf32>
    %c0_6 = arith.constant 0 : index
    %c0_7 = arith.constant 0 : index
    %6 = vector.load %arg5[%c0_6, %c0_7] : memref<128x128xbf16, #tpu.memory_space<vmem>>, vector<128x128xbf16>
    %cst_8 = arith.constant dense<0.000000e+00> : vector<16x128xf32>
    %7 = tpu.matmul %3, %6, %cst_8 {dimension_numbers = #tpu.dot_dimension_numbers<[1], [0], [0], [1], [0, 0, 1, 1], [], []>} : vector<16x128xbf16>, vector<128x128xbf16>, vector<16x128xf32> -> vector<16x128xf32>
    %8 = arith.addf %5, %7 : vector<16x128xf32>
    %c0_9 = arith.constant 0 : index
    %c0_10 = arith.constant 0 : index
    %9 = vector.load %arg6[%c0_9, %c0_10] : memref<3x128xf32, #tpu.memory_space<vmem>>, vector<1x128xf32>
    %10 = vector.broadcast %9 : vector<1x128xf32> to vector<16x128xf32>
    %11 = arith.addf %8, %10 : vector<16x128xf32>
    %cst_11 = arith.constant 2.000000e-01 : f32
    %12 = vector.broadcast %cst_11 : f32 to vector<16x128xf32>
    %13 = arith.mulf %12, %11 : vector<16x128xf32>
    %14 = arith.maximumf %11, %13 : vector<16x128xf32>
    %c0_i32 = arith.constant 0 : i32
    %15 = arith.cmpi eq, %arg1, %c0_i32 : i32
    %c0_i32_12 = arith.constant 0 : i32
    %16 = arith.cmpi eq, %arg2, %c0_i32_12 : i32
    %17 = arith.andi %15, %16 : i1
    %18 = arith.extui %17 : i1 to i32
    %c0_i32_13 = arith.constant 0 : i32
    %19 = arith.cmpi ne, %18, %c0_i32_13 : i32
    scf.if %19 {
      %cst_20 = arith.constant 0.000000e+00 : f32
      %31 = vector.broadcast %cst_20 : f32 to vector<2x128xf32>
      %c0_21 = arith.constant 0 : index
      %c0_22 = arith.constant 0 : index
      %32 = vector.load %arg8[%c0_21, %c0_22] : memref<2x128xf32, #tpu.memory_space<vmem>>, vector<2x128xf32>
      tpu.vector_store %arg8[%c0_21, %c0_22], %31 {strides = array<i32>} : memref<2x128xf32, #tpu.memory_space<vmem>>, vector<2x128xf32>,
    } else {
    }
    %c0_i32_14 = arith.constant 0 : i32
    %20 = arith.cmpi eq, %arg1, %c0_i32_14 : i32
    %21 = arith.extui %20 : i1 to i32
    %c0_i32_15 = arith.constant 0 : i32
    %22 = arith.cmpi ne, %21, %c0_i32_15 : i32
    scf.if %22 {
      %c0_20 = arith.constant 0 : index
      %c0_21 = arith.constant 0 : index
      %31 = vector.load %arg8[%c0_20, %c0_21] : memref<2x128xf32, #tpu.memory_space<vmem>>, vector<2x128xf32>
      %cst_22 = arith.constant dense<0.000000e+00> : vector<128xf32>
      %32 = vector.multi_reduction <add>, %14, %cst_22 [0] : vector<16x128xf32> to vector<128xf32>
      %33 = vector.shape_cast %32 : vector<128xf32> to vector<1x128xf32>
      %34 = arith.mulf %14, %14 : vector<16x128xf32>
      %cst_23 = arith.constant dense<0.000000e+00> : vector<128xf32>
      %35 = vector.multi_reduction <add>, %34, %cst_23 [0] : vector<16x128xf32> to vector<128xf32>
      %36 = vector.shape_cast %35 : vector<128xf32> to vector<1x128xf32>
      %37 = tpu.concatenate %33, %36 in 0 : vector<1x128xf32>, vector<1x128xf32> -> vector<2x128xf32>
      %38 = arith.addf %31, %37 : vector<2x128xf32>
      %c0_24 = arith.constant 0 : index
      %c0_25 = arith.constant 0 : index
      %39 = vector.load %arg8[%c0_24, %c0_25] : memref<2x128xf32, #tpu.memory_space<vmem>>, vector<2x128xf32>
      tpu.vector_store %arg8[%c0_24, %c0_25], %38 {strides = array<i32>} : memref<2x128xf32, #tpu.memory_space<vmem>>, vector<2x128xf32>,
    } else {
    }
    %c1_i32 = arith.constant 1 : i32
    %23 = arith.cmpi eq, %arg1, %c1_i32 : i32
    %c0_i32_16 = arith.constant 0 : i32
    %24 = arith.cmpi eq, %arg2, %c0_i32_16 : i32
    %25 = arith.andi %23, %24 : i1
    %26 = arith.extui %25 : i1 to i32
    %c0_i32_17 = arith.constant 0 : i32
    %27 = arith.cmpi ne, %26, %c0_i32_17 : i32
    scf.if %27 {
      %c0_20 = arith.constant 0 : index
      %c0_21 = arith.constant 0 : index
      %31 = vector.load %arg8[%c0_20, %c0_21] : memref<2x128xf32, #tpu.memory_space<vmem>>, vector<1x128xf32>
      %cst_22 = arith.constant 3.125000e-02 : f32
      %32 = vector.broadcast %cst_22 : f32 to vector<1x128xf32>
      %33 = arith.mulf %31, %32 : vector<1x128xf32>
      %c1 = arith.constant 1 : index
      %c0_23 = arith.constant 0 : index
      %34 = vector.load %arg8[%c1, %c0_23] : memref<2x128xf32, #tpu.memory_space<vmem>>, vector<1x128xf32>
      %cst_24 = arith.constant 3.125000e-02 : f32
      %35 = vector.broadcast %cst_24 : f32 to vector<1x128xf32>
      %36 = arith.mulf %34, %35 : vector<1x128xf32>
      %37 = arith.mulf %33, %33 : vector<1x128xf32>
      %38 = arith.subf %36, %37 : vector<1x128xf32>
      %cst_25 = arith.constant 9.99999974E-6 : f32
      %39 = vector.broadcast %cst_25 : f32 to vector<1x128xf32>
      %40 = arith.addf %38, %39 : vector<1x128xf32>
      %41 = math.rsqrt %40 : vector<1x128xf32>
      %c1_26 = arith.constant 1 : index
      %c0_27 = arith.constant 0 : index
      %42 = vector.load %arg6[%c1_26, %c0_27] : memref<3x128xf32, #tpu.memory_space<vmem>>, vector<1x128xf32>
      %43 = arith.mulf %42, %41 : vector<1x128xf32>
      %c2 = arith.constant 2 : index
      %c0_28 = arith.constant 0 : index
      %44 = vector.load %arg6[%c2, %c0_28] : memref<3x128xf32, #tpu.memory_space<vmem>>, vector<1x128xf32>
      %45 = arith.mulf %33, %43 : vector<1x128xf32>
      %46 = arith.subf %44, %45 : vector<1x128xf32>
      %47 = tpu.concatenate %43, %46 in 0 : vector<1x128xf32>, vector<1x128xf32> -> vector<2x128xf32>
      %c0_29 = arith.constant 0 : index
      %c0_30 = arith.constant 0 : index
      %48 = vector.load %arg9[%c0_29, %c0_30] : memref<2x128xf32, #tpu.memory_space<vmem>>, vector<2x128xf32>
      tpu.vector_store %arg9[%c0_29, %c0_30], %47 {strides = array<i32>} : memref<2x128xf32, #tpu.memory_space<vmem>>, vector<2x128xf32>,
    } else {
    }
    %c1_i32_18 = arith.constant 1 : i32
    %28 = arith.cmpi eq, %arg1, %c1_i32_18 : i32
    %29 = arith.extui %28 : i1 to i32
    %c0_i32_19 = arith.constant 0 : i32
    %30 = arith.cmpi ne, %29, %c0_i32_19 : i32
    scf.if %30 {
      %c0_20 = arith.constant 0 : index
      %c0_21 = arith.constant 0 : index
      %31 = vector.load %arg9[%c0_20, %c0_21] : memref<2x128xf32, #tpu.memory_space<vmem>>, vector<1x128xf32>
      %32 = vector.broadcast %31 : vector<1x128xf32> to vector<16x128xf32>
      %33 = arith.mulf %14, %32 : vector<16x128xf32>
      %c1 = arith.constant 1 : index
      %c0_22 = arith.constant 0 : index
      %34 = vector.load %arg9[%c1, %c0_22] : memref<2x128xf32, #tpu.memory_space<vmem>>, vector<1x128xf32>
      %35 = vector.broadcast %34 : vector<1x128xf32> to vector<16x128xf32>
      %36 = arith.addf %33, %35 : vector<16x128xf32>
      %37 = arith.truncf %36 : vector<16x128xf32> to vector<16x128xbf16>
      %c0_23 = arith.constant 0 : index
      %c0_24 = arith.constant 0 : index
      %c0_25 = arith.constant 0 : index
      %38 = vector.load %arg7[%c0_23, %c0_24, %c0_25] : memref<1x16x128xbf16, #tpu.memory_space<vmem>>, vector<1x16x128xbf16>
      %39 = vector.shape_cast %38 : vector<1x16x128xbf16> to vector<16x128xbf16>
      %40 = vector.shape_cast %37 : vector<16x128xbf16> to vector<1x16x128xbf16>
      tpu.vector_store %arg7[%c0_23, %c0_24, %c0_25], %40 {strides = array<i32>} : memref<1x16x128xbf16, #tpu.memory_space<vmem>>, vector<1x16x128xbf16>,
    } else {
    }
    return
  }
  func.func @transform_0(%arg0: i32, %arg1: i32, %arg2: i32) -> (i32, i32, i32) {
    %c0_i32 = arith.constant 0 : i32
    %c0_i32_0 = arith.constant 0 : i32
    %c0_i32_1 = arith.constant 0 : i32
    return %arg2, %c0_i32, %c0_i32_0 : i32, i32, i32
  }
  func.func @transform_1(%arg0: i32, %arg1: i32, %arg2: i32) -> (i32, i32) {
    %c0_i32 = arith.constant 0 : i32
    %c0_i32_0 = arith.constant 0 : i32
    return %c0_i32, %arg0 : i32, i32
  }
  func.func @transform_2(%arg0: i32, %arg1: i32, %arg2: i32) -> (i32, i32) {
    %c0_i32 = arith.constant 0 : i32
    %c0_i32_0 = arith.constant 0 : i32
    return %c0_i32, %arg0 : i32, i32
  }
  func.func @transform_3(%arg0: i32, %arg1: i32, %arg2: i32) -> (i32, i32) {
    %c0_i32 = arith.constant 0 : i32
    %c0_i32_0 = arith.constant 0 : i32
    return %c0_i32, %arg0 : i32, i32
  }
  func.func @transform_4(%arg0: i32, %arg1: i32, %arg2: i32) -> (i32, i32, i32) {
    %c0_i32 = arith.constant 0 : i32
    %c0_i32_0 = arith.constant 0 : i32
    return %arg2, %c0_i32, %arg0 : i32, i32, i32
  }
}

module attributes {stable_mosaic.version = 11 : i64} {
  func.func @_fused_layer_kernel(%arg0: i32, %arg1: i32, %arg2: i32, %arg3: memref<1x6x256xbf16, #tpu.memory_space<vmem>>, %arg4: memref<256x128xbf16, #tpu.memory_space<vmem>>, %arg5: memref<256x128xbf16, #tpu.memory_space<vmem>>, %arg6: memref<3x128xf32, #tpu.memory_space<vmem>>, %arg7: memref<1x4x128xf32, #tpu.memory_space<vmem>>, %arg8: memref<2x128xf32, #tpu.memory_space<vmem>>, %arg9: memref<2x128xf32, #tpu.memory_space<vmem>>) attributes {dimension_semantics = [#tpu.dimension_semantics<parallel>, #tpu.dimension_semantics<arbitrary>, #tpu.dimension_semantics<arbitrary>], iteration_bounds = array<i64: 1, 2, 2>, scalar_prefetch = 0 : i64, scratch_operands = 2 : i64, tpu.core_type = #tpu.core_type<tc>, window_params = [{transform_indices = @transform_0, window_bounds = array<i64: 1, 6, 256>}, {transform_indices = @transform_1, window_bounds = array<i64: 256, 128>}, {transform_indices = @transform_2, window_bounds = array<i64: 256, 128>}, {transform_indices = @transform_3, window_bounds = array<i64: 3, 128>}, {transform_indices = @transform_4, window_bounds = array<i64: 1, 4, 128>}]} {
    %c0 = arith.constant 0 : index
    %c0_0 = arith.constant 0 : index
    %c0_1 = arith.constant 0 : index
    %0 = vector.load %arg3[%c0, %c0_0, %c0_1] : memref<1x6x256xbf16, #tpu.memory_space<vmem>>, vector<1x4x256xbf16>
    %1 = vector.shape_cast %0 : vector<1x4x256xbf16> to vector<4x256xbf16>
    %c0_2 = arith.constant 0 : index
    %c2 = arith.constant 2 : index
    %c0_3 = arith.constant 0 : index
    %2 = vector.load %arg3[%c0_2, %c2, %c0_3] : memref<1x6x256xbf16, #tpu.memory_space<vmem>>, vector<1x4x256xbf16>
    %3 = vector.shape_cast %2 : vector<1x4x256xbf16> to vector<4x256xbf16>
    %c0_4 = arith.constant 0 : index
    %c0_5 = arith.constant 0 : index
    %4 = vector.load %arg4[%c0_4, %c0_5] : memref<256x128xbf16, #tpu.memory_space<vmem>>, vector<256x128xbf16>
    %cst = arith.constant dense<0.000000e+00> : vector<4x128xf32>
    %5 = tpu.matmul %1, %4, %cst {dimension_numbers = #tpu.dot_dimension_numbers<[1], [0], [0], [1], [0, 0, 1, 1], [], []>} : vector<4x256xbf16>, vector<256x128xbf16>, vector<4x128xf32> -> vector<4x128xf32>
    %c0_6 = arith.constant 0 : index
    %c0_7 = arith.constant 0 : index
    %6 = vector.load %arg5[%c0_6, %c0_7] : memref<256x128xbf16, #tpu.memory_space<vmem>>, vector<256x128xbf16>
    %cst_8 = arith.constant dense<0.000000e+00> : vector<4x128xf32>
    %7 = tpu.matmul %3, %6, %cst_8 {dimension_numbers = #tpu.dot_dimension_numbers<[1], [0], [0], [1], [0, 0, 1, 1], [], []>} : vector<4x256xbf16>, vector<256x128xbf16>, vector<4x128xf32> -> vector<4x128xf32>
    %8 = arith.addf %5, %7 : vector<4x128xf32>
    %c0_9 = arith.constant 0 : index
    %c0_10 = arith.constant 0 : index
    %9 = vector.load %arg6[%c0_9, %c0_10] : memref<3x128xf32, #tpu.memory_space<vmem>>, vector<1x128xf32>
    %10 = vector.broadcast %9 : vector<1x128xf32> to vector<4x128xf32>
    %11 = arith.addf %8, %10 : vector<4x128xf32>
    %cst_11 = arith.constant 2.000000e-01 : f32
    %12 = vector.broadcast %cst_11 : f32 to vector<4x128xf32>
    %13 = arith.mulf %12, %11 : vector<4x128xf32>
    %14 = arith.maximumf %11, %13 : vector<4x128xf32>
    %c0_i32 = arith.constant 0 : i32
    %15 = arith.cmpi eq, %arg1, %c0_i32 : i32
    %c0_i32_12 = arith.constant 0 : i32
    %16 = arith.cmpi eq, %arg2, %c0_i32_12 : i32
    %17 = arith.andi %15, %16 : i1
    %18 = arith.extui %17 : i1 to i32
    %c0_i32_13 = arith.constant 0 : i32
    %19 = arith.cmpi ne, %18, %c0_i32_13 : i32
    scf.if %19 {
      %cst_20 = arith.constant 0.000000e+00 : f32
      %31 = vector.broadcast %cst_20 : f32 to vector<2x128xf32>
      %c0_21 = arith.constant 0 : index
      %c0_22 = arith.constant 0 : index
      %32 = vector.load %arg8[%c0_21, %c0_22] : memref<2x128xf32, #tpu.memory_space<vmem>>, vector<2x128xf32>
      tpu.vector_store %arg8[%c0_21, %c0_22], %31 {strides = array<i32>} : memref<2x128xf32, #tpu.memory_space<vmem>>, vector<2x128xf32>,
    } else {
    }
    %c0_i32_14 = arith.constant 0 : i32
    %20 = arith.cmpi eq, %arg1, %c0_i32_14 : i32
    %21 = arith.extui %20 : i1 to i32
    %c0_i32_15 = arith.constant 0 : i32
    %22 = arith.cmpi ne, %21, %c0_i32_15 : i32
    scf.if %22 {
      %c0_20 = arith.constant 0 : index
      %c0_21 = arith.constant 0 : index
      %31 = vector.load %arg8[%c0_20, %c0_21] : memref<2x128xf32, #tpu.memory_space<vmem>>, vector<2x128xf32>
      %cst_22 = arith.constant dense<0.000000e+00> : vector<128xf32>
      %32 = vector.multi_reduction <add>, %14, %cst_22 [0] : vector<4x128xf32> to vector<128xf32>
      %33 = vector.shape_cast %32 : vector<128xf32> to vector<1x128xf32>
      %34 = arith.mulf %14, %14 : vector<4x128xf32>
      %cst_23 = arith.constant dense<0.000000e+00> : vector<128xf32>
      %35 = vector.multi_reduction <add>, %34, %cst_23 [0] : vector<4x128xf32> to vector<128xf32>
      %36 = vector.shape_cast %35 : vector<128xf32> to vector<1x128xf32>
      %37 = tpu.concatenate %33, %36 in 0 : vector<1x128xf32>, vector<1x128xf32> -> vector<2x128xf32>
      %38 = arith.addf %31, %37 : vector<2x128xf32>
      %c0_24 = arith.constant 0 : index
      %c0_25 = arith.constant 0 : index
      %39 = vector.load %arg8[%c0_24, %c0_25] : memref<2x128xf32, #tpu.memory_space<vmem>>, vector<2x128xf32>
      tpu.vector_store %arg8[%c0_24, %c0_25], %38 {strides = array<i32>} : memref<2x128xf32, #tpu.memory_space<vmem>>, vector<2x128xf32>,
    } else {
    }
    %c1_i32 = arith.constant 1 : i32
    %23 = arith.cmpi eq, %arg1, %c1_i32 : i32
    %c0_i32_16 = arith.constant 0 : i32
    %24 = arith.cmpi eq, %arg2, %c0_i32_16 : i32
    %25 = arith.andi %23, %24 : i1
    %26 = arith.extui %25 : i1 to i32
    %c0_i32_17 = arith.constant 0 : i32
    %27 = arith.cmpi ne, %26, %c0_i32_17 : i32
    scf.if %27 {
      %c0_20 = arith.constant 0 : index
      %c0_21 = arith.constant 0 : index
      %31 = vector.load %arg8[%c0_20, %c0_21] : memref<2x128xf32, #tpu.memory_space<vmem>>, vector<1x128xf32>
      %cst_22 = arith.constant 1.250000e-01 : f32
      %32 = vector.broadcast %cst_22 : f32 to vector<1x128xf32>
      %33 = arith.mulf %31, %32 : vector<1x128xf32>
      %c1 = arith.constant 1 : index
      %c0_23 = arith.constant 0 : index
      %34 = vector.load %arg8[%c1, %c0_23] : memref<2x128xf32, #tpu.memory_space<vmem>>, vector<1x128xf32>
      %cst_24 = arith.constant 1.250000e-01 : f32
      %35 = vector.broadcast %cst_24 : f32 to vector<1x128xf32>
      %36 = arith.mulf %34, %35 : vector<1x128xf32>
      %37 = arith.mulf %33, %33 : vector<1x128xf32>
      %38 = arith.subf %36, %37 : vector<1x128xf32>
      %cst_25 = arith.constant 9.99999974E-6 : f32
      %39 = vector.broadcast %cst_25 : f32 to vector<1x128xf32>
      %40 = arith.addf %38, %39 : vector<1x128xf32>
      %41 = math.rsqrt %40 : vector<1x128xf32>
      %c1_26 = arith.constant 1 : index
      %c0_27 = arith.constant 0 : index
      %42 = vector.load %arg6[%c1_26, %c0_27] : memref<3x128xf32, #tpu.memory_space<vmem>>, vector<1x128xf32>
      %43 = arith.mulf %42, %41 : vector<1x128xf32>
      %c2_28 = arith.constant 2 : index
      %c0_29 = arith.constant 0 : index
      %44 = vector.load %arg6[%c2_28, %c0_29] : memref<3x128xf32, #tpu.memory_space<vmem>>, vector<1x128xf32>
      %45 = arith.mulf %33, %43 : vector<1x128xf32>
      %46 = arith.subf %44, %45 : vector<1x128xf32>
      %47 = tpu.concatenate %43, %46 in 0 : vector<1x128xf32>, vector<1x128xf32> -> vector<2x128xf32>
      %c0_30 = arith.constant 0 : index
      %c0_31 = arith.constant 0 : index
      %48 = vector.load %arg9[%c0_30, %c0_31] : memref<2x128xf32, #tpu.memory_space<vmem>>, vector<2x128xf32>
      tpu.vector_store %arg9[%c0_30, %c0_31], %47 {strides = array<i32>} : memref<2x128xf32, #tpu.memory_space<vmem>>, vector<2x128xf32>,
    } else {
    }
    %c1_i32_18 = arith.constant 1 : i32
    %28 = arith.cmpi eq, %arg1, %c1_i32_18 : i32
    %29 = arith.extui %28 : i1 to i32
    %c0_i32_19 = arith.constant 0 : i32
    %30 = arith.cmpi ne, %29, %c0_i32_19 : i32
    scf.if %30 {
      %c0_20 = arith.constant 0 : index
      %c0_21 = arith.constant 0 : index
      %31 = vector.load %arg9[%c0_20, %c0_21] : memref<2x128xf32, #tpu.memory_space<vmem>>, vector<1x128xf32>
      %32 = vector.broadcast %31 : vector<1x128xf32> to vector<4x128xf32>
      %33 = arith.mulf %14, %32 : vector<4x128xf32>
      %c1 = arith.constant 1 : index
      %c0_22 = arith.constant 0 : index
      %34 = vector.load %arg9[%c1, %c0_22] : memref<2x128xf32, #tpu.memory_space<vmem>>, vector<1x128xf32>
      %35 = vector.broadcast %34 : vector<1x128xf32> to vector<4x128xf32>
      %36 = arith.addf %33, %35 : vector<4x128xf32>
      %c0_23 = arith.constant 0 : index
      %c0_24 = arith.constant 0 : index
      %c0_25 = arith.constant 0 : index
      %37 = vector.load %arg7[%c0_23, %c0_24, %c0_25] : memref<1x4x128xf32, #tpu.memory_space<vmem>>, vector<1x4x128xf32>
      %38 = vector.shape_cast %37 : vector<1x4x128xf32> to vector<4x128xf32>
      %39 = vector.shape_cast %36 : vector<4x128xf32> to vector<1x4x128xf32>
      tpu.vector_store %arg7[%c0_23, %c0_24, %c0_25], %39 {strides = array<i32>} : memref<1x4x128xf32, #tpu.memory_space<vmem>>, vector<1x4x128xf32>,
    } else {
    }
    return
  }
  func.func @transform_0(%arg0: i32, %arg1: i32, %arg2: i32) -> (i32, i32, i32) {
    %c0_i32 = arith.constant 0 : i32
    %c0_i32_0 = arith.constant 0 : i32
    %c0_i32_1 = arith.constant 0 : i32
    return %arg2, %c0_i32, %c0_i32_0 : i32, i32, i32
  }
  func.func @transform_1(%arg0: i32, %arg1: i32, %arg2: i32) -> (i32, i32) {
    %c0_i32 = arith.constant 0 : i32
    %c0_i32_0 = arith.constant 0 : i32
    return %c0_i32, %arg0 : i32, i32
  }
  func.func @transform_2(%arg0: i32, %arg1: i32, %arg2: i32) -> (i32, i32) {
    %c0_i32 = arith.constant 0 : i32
    %c0_i32_0 = arith.constant 0 : i32
    return %c0_i32, %arg0 : i32, i32
  }
  func.func @transform_3(%arg0: i32, %arg1: i32, %arg2: i32) -> (i32, i32) {
    %c0_i32 = arith.constant 0 : i32
    %c0_i32_0 = arith.constant 0 : i32
    return %c0_i32, %arg0 : i32, i32
  }
  func.func @transform_4(%arg0: i32, %arg1: i32, %arg2: i32) -> (i32, i32, i32) {
    %c0_i32 = arith.constant 0 : i32
    %c0_i32_0 = arith.constant 0 : i32
    return %arg2, %c0_i32, %arg0 : i32, i32, i32
  }
}

</mosaic_0001>

<llo_original>
// kernel: encoder_forward.4
$region0: #{encoder_forward.4}
  #allocation0 [shape = 'u32[]', space=smem, size = 0x4, offset = 0x4, fixed_abs, tag = 'smem constant byte address 0x4 - core index']
  #allocation1 [shape = 'u32[144,128]{1,0:T(1,128)}', space=vmem, size = 0x12000, scoped, tag = 'internal scratch']
  #allocation2 [shape = 'f32[2,128]{1,0:T(2,128)}', space=vmem, size = 0x400, scoped, tag = 'scratch operand']
  #allocation3 [shape = 'f32[2,128]{1,0:T(2,128)}', space=vmem, size = 0x400, scoped, tag = 'scratch operand']
  %s0 = inlined_call_operand.vmem [shape: bf16[2,272,32], index: 0, kind: input, shape index: {}]
  %s1 = inlined_call_operand.vmem [shape: bf16[32,128], index: 1, kind: input, shape index: {}]
  %s2 = inlined_call_operand.vmem [shape: bf16[32,128], index: 2, kind: input, shape index: {}]
  %s3 = inlined_call_operand.vmem [shape: f32[3,128], index: 3, kind: input, shape index: {}]
  %s4 = inlined_call_operand.vmem [shape: bf16[2,256,128], index: 4, kind: output, shape index: {}]
  %s5 = sld [smem:[#allocation0]]
  $region65: #{encoder_forward.4} parent=0
    _
  %s7 = ssub.s32 1, %s5
  %s8 = scalar_select 0, %s7, %s5
  loop: start=0, step=1, limit=6
  $region2: #{encoder_forward.4} parent=0 // loop_pre_header
    _
  $region3: #{encoder_forward.4} parent=0 // loop_header
    %s10 = sphi 0, %s14
    %p11 = scmp.ge.s32.totalorder %s10, 6
    %s17 = sphi 0, %s36
    %s18 = sphi 0, %s32
    %s19 = sphi 0, %s28
    %s20 = sphi 0, %s17
    %s21 = sphi 0, %s18
    %s22 = sphi 0, %s19
    %s23 = sphi 0, %s20
    %s24 = sphi 0, %s21
    %s25 = sphi 0, %s22
    %s39 = sphi 0, %s41
    %s42 = sphi 0, %s39
    %s43 = sphi 0, %s42
    %s59 = sphi 0, %s43
    %s65 = sphi 0, %s67
    %s68 = sphi 0, %s65
    %s69 = sphi 0, %s68
    %s85 = sphi 0, %s69
    %s91 = sphi 0, %s93
    %s94 = sphi 0, %s91
    %s95 = sphi 0, %s94
    %s111 = sphi 0, %s95
    %s117 = sphi 0, %s119
    %s120 = sphi 0, %s117
    %s121 = sphi 0, %s120
    %s137 = sphi 0, %s121
    %s145 = sphi 0, %s147
    %s148 = sphi 0, %s145
    %s149 = sphi 0, %s148
    %s165 = sphi 0, %s149
  $region4: #{encoder_forward.4} parent=0 // loop_header_branch
    %13 = sbr.rel (%p11) target = $region8
  $region5: #{encoder_forward.4} parent=0 // loop_body
    %s15 = ssub.s32 %s10, 1
    %s16 = ssub.s32 %s10, 2
    %s26 = sadd.s32 1, %s19
    %p27 = scmp.ge.s32.totalorder %s26, 2
    %s28 = scalar_select %p27, 0, %s26
    %s29 = sadd.s32 1, %s18
    %s30 = scalar_select %p27, %s29, %s18
    %p31 = scmp.ge.s32.totalorder %s30, 2
    %s32 = scalar_select %p31, 0, %s30
    %s33 = sadd.s32 1, %s17
    %s34 = scalar_select %p31, %s33, %s17
    %p35 = scmp.ge.s32.totalorder %s34, 1
    %s36 = scalar_select %p35, 0, %s34
    %s37 = ssub.s32 %s19, %s28
    %p38 = scmp.eq.s32.totalorder %s37, 0
    %s40 = sadd.s32 %s39, 1
    %s41 = scalar_select %p38, %s39, %s40
    %p44 = pneg %p38
    %p45 = scmp.eq.s32.totalorder %s10, 3
    %p46 = por %p44, %p45
    %p47 = scmp.ne.s32.totalorder %s39, %s42
    %p48 = scmp.eq.s32.totalorder %s10, 0
    %p49 = por %p47, %p48
    %p50 = scmp.ne.s32.totalorder %s39, %s42
    %p51 = scmp.eq.s32.totalorder %s15, 3
    %p52 = por %p50, %p51
    %p53 = scmp.ne.s32.totalorder %s42, %s43
    %p54 = scmp.eq.s32.totalorder %s15, 0
    %p55 = por %p53, %p54
    %p56 = scmp.ne.s32.totalorder %s42, %s43
    %p57 = scmp.eq.s32.totalorder %s16, 3
    %p58 = por %p56, %p57
    %p60 = scmp.ne.s32.totalorder %s43, %s59
    %p61 = scmp.eq.s32.totalorder %s16, 0
    %p62 = por %p60, %p61
    %s63 = ssub.s32 %s17, %s36
    %p64 = scmp.eq.s32.totalorder %s63, 0
    %s66 = sadd.s32 %s65, 1
    %s67 = scalar_select %p64, %s65, %s66
    %p70 = pneg %p64
    %p71 = scmp.eq.s32.totalorder %s10, 3
    %p72 = por %p70, %p71
    %p73 = scmp.ne.s32.totalorder %s65, %s68
    %p74 = scmp.eq.s32.totalorder %s10, 0
    %p75 = por %p73, %p74
    %p76 = scmp.ne.s32.totalorder %s65, %s68
    %p77 = scmp.eq.s32.totalorder %s15, 3
    %p78 = por %p76, %p77
    %p79 = scmp.ne.s32.totalorder %s68, %s69
    %p80 = scmp.eq.s32.totalorder %s15, 0
    %p81 = por %p79, %p80
    %p82 = scmp.ne.s32.totalorder %s68, %s69
    %p83 = scmp.eq.s32.totalorder %s16, 3
    %p84 = por %p82, %p83
    %p86 = scmp.ne.s32.totalorder %s69, %s85
    %p87 = scmp.eq.s32.totalorder %s16, 0
    %p88 = por %p86, %p87
    %s89 = ssub.s32 %s17, %s36
    %p90 = scmp.eq.s32.totalorder %s89, 0
    %s92 = sadd.s32 %s91, 1
    %s93 = scalar_select %p90, %s91, %s92
    %p96 = pneg %p90
    %p97 = scmp.eq.s32.totalorder %s10, 3
    %p98 = por %p96, %p97
    %p99 = scmp.ne.s32.totalorder %s91, %s94
    %p100 = scmp.eq.s32.totalorder %s10, 0
    %p101 = por %p99, %p100
    %p102 = scmp.ne.s32.totalorder %s91, %s94
    %p103 = scmp.eq.s32.totalorder %s15, 3
    %p104 = por %p102, %p103
    %p105 = scmp.ne.s32.totalorder %s94, %s95
    %p106 = scmp.eq.s32.totalorder %s15, 0
    %p107 = por %p105, %p106
    %p108 = scmp.ne.s32.totalorder %s94, %s95
    %p109 = scmp.eq.s32.totalorder %s16, 3
    %p110 = por %p108, %p109
    %p112 = scmp.ne.s32.totalorder %s95, %s111
    %p113 = scmp.eq.s32.totalorder %s16, 0
    %p114 = por %p112, %p113
    %s115 = ssub.s32 %s17, %s36
    %p116 = scmp.eq.s32.totalorder %s115, 0
    %s118 = sadd.s32 %s117, 1
    %s119 = scalar_select %p116, %s117, %s118
    %p122 = pneg %p116
    %p123 = scmp.eq.s32.totalorder %s10, 3
    %p124 = por %p122, %p123
    %p125 = scmp.ne.s32.totalorder %s117, %s120
    %p126 = scmp.eq.s32.totalorder %s10, 0
    %p127 = por %p125, %p126
    %p128 = scmp.ne.s32.totalorder %s117, %s120
    %p129 = scmp.eq.s32.totalorder %s15, 3
    %p130 = por %p128, %p129
    %p131 = scmp.ne.s32.totalorder %s120, %s121
    %p132 = scmp.eq.s32.totalorder %s15, 0
    %p133 = por %p131, %p132
    %p134 = scmp.ne.s32.totalorder %s120, %s121
    %p135 = scmp.eq.s32.totalorder %s16, 3
    %p136 = por %p134, %p135
    %p138 = scmp.ne.s32.totalorder %s121, %s137
    %p139 = scmp.eq.s32.totalorder %s16, 0
    %p140 = por %p138, %p139
    %s141 = ssub.s32 %s19, %s28
    %s142 = ssub.s32 %s17, %s36
    %s143 = sor.u32 %s141, %s142
    %p144 = scmp.eq.s32.totalorder %s143, 0
    %s146 = sadd.s32 %s145, 1
    %s147 = scalar_select %p144, %s145, %s146
    %p150 = pneg %p144
    %p151 = scmp.eq.s32.totalorder %s10, 3
    %p152 = por %p150, %p151
    %p153 = scmp.ne.s32.totalorder %s145, %s148
    %p154 = scmp.eq.s32.totalorder %s10, 0
    %p155 = por %p153, %p154
    %p156 = scmp.ne.s32.totalorder %s145, %s148
    %p157 = scmp.eq.s32.totalorder %s15, 3
    %p158 = por %p156, %p157
    %p159 = scmp.ne.s32.totalorder %s148, %s149
    %p160 = scmp.eq.s32.totalorder %s15, 0
    %p161 = por %p159, %p160
    %p162 = scmp.ne.s32.totalorder %s148, %s149
    %p163 = scmp.eq.s32.totalorder %s16, 3
    %p164 = por %p162, %p163
    %p166 = scmp.ne.s32.totalorder %s149, %s165
    %p167 = scmp.eq.s32.totalorder %s16, 0
    %p168 = por %p166, %p167
    %p169 = scmp.le.s32.totalorder 1, %s10
    %p170 = scmp.lt.s32.totalorder %s10, 5
    %p171 = pnand %p169, %p170
    %p172 = pneg %p171
    // Predicated region
    $region9: #{encoder_forward.4} parent=5 // pred_check
      _
    $region10: #{encoder_forward.4} parent=5 // pred_check_branch
      %174 = sbr.rel (%p171) target = $region12
    $region11: #{encoder_forward.4} parent=5 // pred_region
      %s175 = ssub.s32 %s10, 1
      // Predicated region
      $region13: #{encoder_forward.4} parent=11 // pred_check
        %p176 = pneg %p81
      $region14: #{encoder_forward.4} parent=11 // pred_check_branch
        %178 = sbr.rel (%p176) target = $region16
      $region15: #{encoder_forward.4} parent=11 // pred_region
        %p179 = scmp.lt.s32.totalorder %s20, 0
        %s180 = scalar_select %p179, %s20, 0
        %s181 = smul.addr %s180, 4
        %s182 = scalar_lea.vmem %s1, %s181
      $region16: #{encoder_forward.4} parent=11 // pred_fallthru
        _
      // Predicated region
      $region17: #{encoder_forward.4} parent=11 // pred_check
        %p183 = pneg %p107
      $region18: #{encoder_forward.4} parent=11 // pred_check_branch
        %185 = sbr.rel (%p183) target = $region20
      $region19: #{encoder_forward.4} parent=11 // pred_region
        %p186 = scmp.lt.s32.totalorder %s20, 0
        %s187 = scalar_select %p186, %s20, 0
        %s188 = smul.addr %s187, 4
        %s189 = scalar_lea.vmem %s2, %s188
      $region20: #{encoder_forward.4} parent=11 // pred_fallthru
        _
      // Predicated region
      $region21: #{encoder_forward.4} parent=11 // pred_check
        %p190 = pneg %p133
      $region22: #{encoder_forward.4} parent=11 // pred_check_branch
        %192 = sbr.rel (%p190) target = $region24
      $region23: #{encoder_forward.4} parent=11 // pred_region
        %p193 = scmp.lt.s32.totalorder %s20, 0
        %s194 = scalar_select %p193, %s20, 0
        %s195 = smul.addr %s194, 4
        %s196 = scalar_lea.vmem %s3, %s195
      $region24: #{encoder_forward.4} parent=11 // pred_fallthru
        _
    $region12: #{encoder_forward.4} parent=5 // pred_fallthru
      _
    %p197 = scmp.lt.s32.totalorder %s10, 4
    // Predicated region
    $region25: #{encoder_forward.4} parent=5 // pred_check
      %p198 = pneg %p197
    $region26: #{encoder_forward.4} parent=5 // pred_check_branch
      %200 = sbr.rel (%p198) target = $region28
    $region27: #{encoder_forward.4} parent=5 // pred_region
      // Predicated region
      $region29: #{encoder_forward.4} parent=27 // pred_check
        %p201 = pneg %p49
      $region30: #{encoder_forward.4} parent=27 // pred_check_branch
        %203 = sbr.rel (%p201) target = $region32
      $region31: #{encoder_forward.4} parent=27 // pred_region
        %p204 = scmp.lt.s32.totalorder %s19, 1
        %s205 = scalar_select %p204, %s19, 1
        %s206 = smul.addr %s205, 34
        %s207 = smul.addr %s206, 4
        %s208 = scalar_lea.vmem %s0, %s207
      $region32: #{encoder_forward.4} parent=27 // pred_fallthru
        _
    $region28: #{encoder_forward.4} parent=5 // pred_fallthru
      _
    %p209 = scmp.le.s32.totalorder 1, %s10
    %p210 = scmp.lt.s32.totalorder %s10, 5
    %p211 = pnand %p209, %p210
    %p212 = pneg %p211
    // Predicated region
    $region33: #{encoder_forward.4} parent=5 // pred_check
      _
    $region34: #{encoder_forward.4} parent=5 // pred_check_branch
      %214 = sbr.rel (%p211) target = $region36
    $region35: #{encoder_forward.4} parent=5 // pred_region
      %s215 = ssub.s32 %s10, 1
      %p216 = scmp.lt.s32.totalorder %s22, 1
      %s217 = scalar_select %p216, %s22, 1
      %s218 = smul.addr %s217, 34
      %s219 = smul.addr %s218, 4
      %s220 = scalar_lea.vmem %s0, %s219
      %p221 = pneg %p55
      %p222 = pneg %p52
      %p223 = scmp.lt.s32.totalorder %s20, 0
      %s224 = scalar_select %p223, %s20, 0
      %s225 = smul.addr %s224, 4
      %s226 = scalar_lea.vmem %s1, %s225
      %p227 = pneg %p81
      %p228 = pneg %p78
      %p229 = scmp.lt.s32.totalorder %s20, 0
      %s230 = scalar_select %p229, %s20, 0
      %s231 = smul.addr %s230, 4
      %s232 = scalar_lea.vmem %s2, %s231
      %p233 = pneg %p107
      %p234 = pneg %p104
      %p235 = scmp.lt.s32.totalorder %s20, 0
      %s236 = scalar_select %p235, %s20, 0
      %s237 = smul.addr %s236, 4
      %s238 = scalar_lea.vmem %s3, %s237
      %p239 = pneg %p133
      %p240 = pneg %p130
      %p241 = pneg %p161
      %p242 = pneg %p158
      %p243 = scmp.lt.s32.totalorder %s22, 1
      %s244 = scalar_select %p243, %s22, 1
      %p245 = scmp.lt.s32.totalorder %s20, 0
      %s246 = scalar_select %p245, %s20, 0
      %s247 = smul.addr %s244, 32
      %s248 = sadd.s32 %s246, %s247
      %s249 = smul.addr %s248, 4
      %s250 = scalar_lea.vmem %s4, %s249
      %p251 = scmp.lt.s32.totalorder %s22, 1
      %s252 = scalar_select %p251, %s22, 1
      %s253 = smul.addr %s252, 34
      %s254 = smul.addr %s253, 4
      %s255 = scalar_lea.vmem %s0, %s254
      %p256 = scmp.lt.s32.totalorder %s20, 0
      %s257 = scalar_select %p256, %s20, 0
      %s258 = smul.addr %s257, 4
      %s259 = scalar_lea.vmem %s1, %s258
      %p260 = scmp.lt.s32.totalorder %s20, 0
      %s261 = scalar_select %p260, %s20, 0
      %s262 = smul.addr %s261, 4
      %s263 = scalar_lea.vmem %s2, %s262
      %p264 = scmp.lt.s32.totalorder %s20, 0
      %s265 = scalar_select %p264, %s20, 0
      %s266 = smul.addr %s265, 4
      %s267 = scalar_lea.vmem %s3, %s266
      %p268 = scmp.lt.s32.totalorder %s22, 1
      %s269 = scalar_select %p268, %s22, 1
      %p270 = scmp.lt.s32.totalorder %s20, 0
      %s271 = scalar_select %p270, %s20, 0
      %s272 = smul.addr %s269, 32
      %s273 = sadd.s32 %s271, %s272
      %s274 = smul.addr %s273, 4
      %s275 = scalar_lea.vmem %s4, %s274
      %v277 = vld [vmem:[%s255] sm:$0xf]
      %v278 = vld [vmem:[%s255 + $0x4] sm:$0xf]
      %v279 = vld [vmem:[%s255 + $0x8] sm:$0xf]
      %v280 = vld [vmem:[%s255 + $0xc] sm:$0xf]
      %v281 = vld [vmem:[%s255 + $0x10] sm:$0xf]
      %v282 = vld [vmem:[%s255 + $0x14] sm:$0xf]
      %v283 = vld [vmem:[%s255 + $0x18] sm:$0xf]
      %v284 = vld [vmem:[%s255 + $0x1c] sm:$0xf]
      %v285 = vld [vmem:[%s255 + $0x20] sm:$0xf]
      %v286 = vld [vmem:[%s255 + $0x24] sm:$0xf]
      %v287 = vld [vmem:[%s255 + $0x28] sm:$0xf]
      %v288 = vld [vmem:[%s255 + $0x2c] sm:$0xf]
      %v289 = vld [vmem:[%s255 + $0x30] sm:$0xf]
      %v290 = vld [vmem:[%s255 + $0x34] sm:$0xf]
      %v291 = vld [vmem:[%s255 + $0x38] sm:$0xf]
      %v292 = vld [vmem:[%s255 + $0x3c] sm:$0xf]
      %v293 = vld [vmem:[%s255 + $0x40] sm:$0xf]
      %v294 = vld [vmem:[%s255 + $0x44] sm:$0xf]
      %v295 = vld [vmem:[%s255 + $0x48] sm:$0xf]
      %v296 = vld [vmem:[%s255 + $0x4c] sm:$0xf]
      %v297 = vld [vmem:[%s255 + $0x50] sm:$0xf]
      %v298 = vld [vmem:[%s255 + $0x54] sm:$0xf]
      %v299 = vld [vmem:[%s255 + $0x58] sm:$0xf]
      %v300 = vld [vmem:[%s255 + $0x5c] sm:$0xf]
      %v301 = vld [vmem:[%s255 + $0x60] sm:$0xf]
      %v302 = vld [vmem:[%s255 + $0x64] sm:$0xf]
      %v303 = vld [vmem:[%s255 + $0x68] sm:$0xf]
      %v304 = vld [vmem:[%s255 + $0x6c] sm:$0xf]
      %v305 = vld [vmem:[%s255 + $0x70] sm:$0xf]
      %v306 = vld [vmem:[%s255 + $0x74] sm:$0xf]
      %v307 = vld [vmem:[%s255 + $0x78] sm:$0xf]
      %v308 = vld [vmem:[%s255 + $0x7c] sm:$0xf]
      %v309 = vld [vmem:[%s255 + $0x80] sm:$0xf]
      %v310 = vld [vmem:[%s255 + $0x84] sm:$0xf]
      %v311 = vld [vmem:[%s259] sm:$0xf]
      %v312 = vld [vmem:[%s259 + $0x4] sm:$0xf]
      %v313 = vld [vmem:[%s259 + $0x8] sm:$0xf]
      %v314 = vld [vmem:[%s259 + $0xc] sm:$0xf]
      %v315 = vld [vmem:[%s263] sm:$0xf]
      %v316 = vld [vmem:[%s263 + $0x4] sm:$0xf]
      %v317 = vld [vmem:[%s263 + $0x8] sm:$0xf]
      %v318 = vld [vmem:[%s263 + $0xc] sm:$0xf]
      %v351 = vunpack.c.l.b16 %v279
      %v352 = vunpack.c.l.b16 %v280
      %v353 = vunpack.c.l.b16 %v281
      %v354 = vunpack.c.l.b16 %v282
      %v355 = vunpack.c.l.b16 %v283
      %v356 = vunpack.c.l.b16 %v284
      %v357 = vunpack.c.l.b16 %v285
      %v358 = vunpack.c.l.b16 %v286
      %v359 = vunpack.c.l.b16 %v287
      %v360 = vunpack.c.l.b16 %v288
      %v361 = vunpack.c.l.b16 %v289
      %v362 = vunpack.c.l.b16 %v290
      %v363 = vunpack.c.l.b16 %v291
      %v364 = vunpack.c.l.b16 %v292
      %v365 = vunpack.c.l.b16 %v293
      %v366 = vunpack.c.l.b16 %v294
      %v367 = vunpack.c.l.b16 %v295
      %v368 = vunpack.c.l.b16 %v296
      %v369 = vunpack.c.l.b16 %v297
      %v370 = vunpack.c.l.b16 %v298
      %v371 = vunpack.c.l.b16 %v299
      %v372 = vunpack.c.l.b16 %v300
      %v373 = vunpack.c.l.b16 %v301
      %v374 = vunpack.c.l.b16 %v302
      %v375 = vunpack.c.l.b16 %v303
      %v376 = vunpack.c.l.b16 %v304
      %v377 = vunpack.c.l.b16 %v305
      %v378 = vunpack.c.l.b16 %v306
      %v379 = vunpack.c.l.b16 %v307
      %v380 = vunpack.c.l.b16 %v308
      %v381 = vunpack.c.l.b16 %v309
      %v382 = vunpack.c.l.b16 %v310
      %v383 = vpack.c.b16 %v352, %v351
      %v384 = vpack.c.b16 %v354, %v353
      %v385 = vpack.c.b16 %v356, %v355
      %v386 = vpack.c.b16 %v358, %v357
      %v387 = vpack.c.b16 %v360, %v359
      %v388 = vpack.c.b16 %v362, %v361
      %v389 = vpack.c.b16 %v364, %v363
      %v390 = vpack.c.b16 %v366, %v365
      %v391 = vpack.c.b16 %v368, %v367
      %v392 = vpack.c.b16 %v370, %v369
      %v393 = vpack.c.b16 %v372, %v371
      %v394 = vpack.c.b16 %v374, %v373
      %v395 = vpack.c.b16 %v376, %v375
      %v396 = vpack.c.b16 %v378, %v377
      %v397 = vpack.c.b16 %v380, %v379
      %v398 = vpack.c.b16 %v382, %v381
      %v403 = vunpack.c.l.b16 %v315
      %v404 = vunpack.c.l.b16 %v316
      %v405 = vunpack.c.l.b16 %v317
      %v406 = vunpack.c.l.b16 %v318
      %v407 = vpack.c.b16 %v404, %v403
      %v408 = vpack.c.b16 %v406, %v405
      %vm411 = vcmask 261120
      %v413 = vsel %vm411, %v383, 0
      %v416 = vsel %vm411, %v384, 0
      %v419 = vsel %vm411, %v385, 0
      %v422 = vsel %vm411, %v386, 0
      %v425 = vsel %vm411, %v387, 0
      %v428 = vsel %vm411, %v388, 0
      %v431 = vsel %vm411, %v389, 0
      %v434 = vsel %vm411, %v390, 0
      %v437 = vsel %vm411, %v391, 0
      %v440 = vsel %vm411, %v392, 0
      %v443 = vsel %vm411, %v393, 0
      %v446 = vsel %vm411, %v394, 0
      %v449 = vsel %vm411, %v395, 0
      %v452 = vsel %vm411, %v396, 0
      %v455 = vsel %vm411, %v397, 0
      %v458 = vsel %vm411, %v398, 0
      %460 = vmatprep.subr.bf16.mxu0 0
      %461 = vmatpush1.bf16.msra.mxu0 %v407
      %462 = vmatprep.subr.bf16.mxu0 0
      %463 = vmatpush1.bf16.msra.mxu0 %v408
      %464 = vmatprep.subr.bf16.mxu0 0
      %465 = vmatpush1.bf16.msra.mxu0 0
      %466 = vmatprep.subr.bf16.mxu0 0
      %467 = vmatpush1.bf16.msra.mxu0 0
      %468 = vmatprep.subr.bf16.mxu0 0
      %469 = vmatpush1.bf16.msra.mxu0 0
      %470 = vmatprep.subr.bf16.mxu0 0
      %471 = vmatpush1.bf16.msra.mxu0 0
      %472 = vmatprep.subr.bf16.mxu0 0
      %473 = vmatpush1.bf16.msra.mxu0 0
      %474 = vmatprep.subr.bf16.mxu0 0
      %475 = vmatpush1.bf16.msra.mxu0 0
      %476 = vmatprep.subr.bf16.mxu0 0
      %477 = vmatpush1.bf16.msra.mxu0 0
      %478 = vmatprep.subr.bf16.mxu0 0
      %479 = vmatpush1.bf16.msra.mxu0 0
      %480 = vmatprep.subr.bf16.mxu0 0
      %481 = vmatpush1.bf16.msra.mxu0 0
      %482 = vmatprep.subr.bf16.mxu0 0
      %483 = vmatpush1.bf16.msra.mxu0 0
      %484 = vmatprep.subr.bf16.mxu0 0
      %485 = vmatpush1.bf16.msra.mxu0 0
      %486 = vmatprep.subr.bf16.mxu0 0
      %487 = vmatpush1.bf16.msra.mxu0 0
      %488 = vmatprep.subr.bf16.mxu0 0
      %489 = vmatpush1.bf16.msra.mxu0 0
      %490 = vmatprep.subr.bf16.mxu0 0
      %491 = vmatpush1.bf16.msra.mxu0 0
      %492 = vmatprep.mubr.bf16.mxu0 0
      %493 = vmatmul.mubr.bf16.gmra.mrb[0].mxu0 %v413
      %v494 = vpop.f32.mrb[0].mxu0
      %v495 = vadd.f32 0.0, %v494
      %v496 = vpop.f32.mrb[0].mxu0
      %v497 = vpop.f32.mrb[0].mxu0
      %v498 = vadd.f32 0.0, %v497
      %v499 = vpop.f32.mrb[0].mxu0
      %500 = vmatprep.mubr.bf16.mxu0 0
      %501 = vmatmul.mubr.bf16.gmra.mrb[0].mxu0 %v416
      %v502 = vpop.f32.mrb[0].mxu0
      %v503 = vadd.f32 0.0, %v502
      %v504 = vpop.f32.mrb[0].mxu0
      %v505 = vpop.f32.mrb[0].mxu0
      %v506 = vadd.f32 0.0, %v505
      %v507 = vpop.f32.mrb[0].mxu0
      %508 = vmatprep.mubr.bf16.mxu0 0
      %509 = vmatmul.mubr.bf16.gmra.mrb[0].mxu0 %v419
      %v510 = vpop.f32.mrb[0].mxu0
      %v511 = vadd.f32 0.0, %v510
      %v512 = vpop.f32.mrb[0].mxu0
      %v513 = vpop.f32.mrb[0].mxu0
      %v514 = vadd.f32 0.0, %v513
      %v515 = vpop.f32.mrb[0].mxu0
      %516 = vmatprep.mubr.bf16.mxu0 0
      %517 = vmatmul.mubr.bf16.gmra.mrb[0].mxu0 %v422
      %v518 = vpop.f32.mrb[0].mxu0
      %v519 = vadd.f32 0.0, %v518
      %v520 = vpop.f32.mrb[0].mxu0
      %v521 = vpop.f32.mrb[0].mxu0
      %v522 = vadd.f32 0.0, %v521
      %v523 = vpop.f32.mrb[0].mxu0
      %524 = vmatprep.mubr.bf16.mxu0 0
      %525 = vmatmul.mubr.bf16.gmra.mrb[0].mxu0 %v425
      %v526 = vpop.f32.mrb[0].mxu0
      %v527 = vadd.f32 0.0, %v526
      %v528 = vpop.f32.mrb[0].mxu0
      %v529 = vpop.f32.mrb[0].mxu0
      %v530 = vadd.f32 0.0, %v529
      %v531 = vpop.f32.mrb[0].mxu0
      %532 = vmatprep.mubr.bf16.mxu0 0
      %533 = vmatmul.mubr.bf16.gmra.mrb[0].mxu0 %v428
      %v534 = vpop.f32.mrb[0].mxu0
      %v535 = vadd.f32 0.0, %v534
      %v536 = vpop.f32.mrb[0].mxu0
      %v537 = vpop.f32.mrb[0].mxu0
      %v538 = vadd.f32 0.0, %v537
      %v539 = vpop.f32.mrb[0].mxu0
      %540 = vmatprep.mubr.bf16.mxu0 0
      %541 = vmatmul.mubr.bf16.gmra.mrb[0].mxu0 %v431
      %v542 = vpop.f32.mrb[0].mxu0
      %v543 = vadd.f32 0.0, %v542
      %v544 = vpop.f32.mrb[0].mxu0
      %v545 = vpop.f32.mrb[0].mxu0
      %v546 = vadd.f32 0.0, %v545
      %v547 = vpop.f32.mrb[0].mxu0
      %548 = vmatprep.mubr.bf16.mxu0 0
      %549 = vmatmul.mubr.bf16.gmra.mrb[0].mxu0 %v434
      %v550 = vpop.f32.mrb[0].mxu0
      %v551 = vadd.f32 0.0, %v550
      %v552 = vpop.f32.mrb[0].mxu0
      %v553 = vpop.f32.mrb[0].mxu0
      %v554 = vadd.f32 0.0, %v553
      %v555 = vpop.f32.mrb[0].mxu0
      %556 = vmatprep.mubr.bf16.mxu0 0
      %557 = vmatmul.mubr.bf16.gmra.mrb[0].mxu0 %v437
      %v558 = vpop.f32.mrb[0].mxu0
      %v559 = vadd.f32 0.0, %v558
      %v560 = vpop.f32.mrb[0].mxu0
      %v561 = vpop.f32.mrb[0].mxu0
      %v562 = vadd.f32 0.0, %v561
      %v563 = vpop.f32.mrb[0].mxu0
      %564 = vmatprep.mubr.bf16.mxu0 0
      %565 = vmatmul.mubr.bf16.gmra.mrb[0].mxu0 %v440
      %v566 = vpop.f32.mrb[0].mxu0
      %v567 = vadd.f32 0.0, %v566
      %v568 = vpop.f32.mrb[0].mxu0
      %v569 = vpop.f32.mrb[0].mxu0
      %v570 = vadd.f32 0.0, %v569
      %v571 = vpop.f32.mrb[0].mxu0
      %572 = vmatprep.mubr.bf16.mxu0 0
      %573 = vmatmul.mubr.bf16.gmra.mrb[0].mxu0 %v443
      %v574 = vpop.f32.mrb[0].mxu0
      %v575 = vadd.f32 0.0, %v574
      %v576 = vpop.f32.mrb[0].mxu0
      %v577 = vpop.f32.mrb[0].mxu0
      %v578 = vadd.f32 0.0, %v577
      %v579 = vpop.f32.mrb[0].mxu0
      %580 = vmatprep.mubr.bf16.mxu0 0
      %581 = vmatmul.mubr.bf16.gmra.mrb[0].mxu0 %v446
      %v582 = vpop.f32.mrb[0].mxu0
      %v583 = vadd.f32 0.0, %v582
      %v584 = vpop.f32.mrb[0].mxu0
      %v585 = vpop.f32.mrb[0].mxu0
      %v586 = vadd.f32 0.0, %v585
      %v587 = vpop.f32.mrb[0].mxu0
      %588 = vmatprep.mubr.bf16.mxu0 0
      %589 = vmatmul.mubr.bf16.gmra.mrb[0].mxu0 %v449
      %v590 = vpop.f32.mrb[0].mxu0
      %v591 = vadd.f32 0.0, %v590
      %v592 = vpop.f32.mrb[0].mxu0
      %v593 = vpop.f32.mrb[0].mxu0
      %v594 = vadd.f32 0.0, %v593
      %v595 = vpop.f32.mrb[0].mxu0
      %596 = vmatprep.mubr.bf16.mxu0 0
      %597 = vmatmul.mubr.bf16.gmra.mrb[0].mxu0 %v452
      %v598 = vpop.f32.mrb[0].mxu0
      %v599 = vadd.f32 0.0, %v598
      %v600 = vpop.f32.mrb[0].mxu0
      %v601 = vpop.f32.mrb[0].mxu0
      %v602 = vadd.f32 0.0, %v601
      %v603 = vpop.f32.mrb[0].mxu0
      %604 = vmatprep.mubr.bf16.mxu0 0
      %605 = vmatmul.mubr.bf16.gmra.mrb[0].mxu0 %v455
      %v606 = vpop.f32.mrb[0].mxu0
      %v607 = vadd.f32 0.0, %v606
      %v608 = vpop.f32.mrb[0].mxu0
      %v609 = vpop.f32.mrb[0].mxu0
      %v610 = vadd.f32 0.0, %v609
      %v611 = vpop.f32.mrb[0].mxu0
      %612 = vmatprep.mubr.bf16.mxu0 0
      %613 = vmatmul.mubr.bf16.gmra.mrb[0].mxu0 %v458
      %v614 = vpop.f32.mrb[0].mxu0
      %v615 = vadd.f32 0.0, %v614
      %v616 = vpop.f32.mrb[0].mxu0
      %v617 = vpop.f32.mrb[0].mxu0
      %v618 = vadd.f32 0.0, %v617
      %v619 = vpop.f32.mrb[0].mxu0
      %620 = vdwg.mxu0
      %v623 = vunpack.c.l.b16 %v277
      %v624 = vunpack.c.l.b16 %v278
      %v625 = vpack.c.b16 %v624, %v623
      %v630 = vunpack.c.l.b16 %v311
      %v631 = vunpack.c.l.b16 %v312
      %v632 = vunpack.c.l.b16 %v313
      %v633 = vunpack.c.l.b16 %v314
      %v634 = vpack.c.b16 %v631, %v630
      %v635 = vpack.c.b16 %v633, %v632
      %v639 = vsel %vm411, %v625, 0
      %641 = vmatprep.subr.bf16.mxu0 0
      %642 = vmatpush1.bf16.msra.mxu0 %v634
      %643 = vmatprep.subr.bf16.mxu0 0
      %644 = vmatpush1.bf16.msra.mxu0 %v635
      %645 = vmatprep.subr.bf16.mxu0 0
      %646 = vmatpush1.bf16.msra.mxu0 0
      %647 = vmatprep.subr.bf16.mxu0 0
      %648 = vmatpush1.bf16.msra.mxu0 0
      %649 = vmatprep.subr.bf16.mxu0 0
      %650 = vmatpush1.bf16.msra.mxu0 0
      %651 = vmatprep.subr.bf16.mxu0 0
      %652 = vmatpush1.bf16.msra.mxu0 0
      %653 = vmatprep.subr.bf16.mxu0 0
      %654 = vmatpush1.bf16.msra.mxu0 0
      %655 = vmatprep.subr.bf16.mxu0 0
      %656 = vmatpush1.bf16.msra.mxu0 0
      %657 = vmatprep.subr.bf16.mxu0 0
      %658 = vmatpush1.bf16.msra.mxu0 0
      %659 = vmatprep.subr.bf16.mxu0 0
      %660 = vmatpush1.bf16.msra.mxu0 0
      %661 = vmatprep.subr.bf16.mxu0 0
      %662 = vmatpush1.bf16.msra.mxu0 0
      %663 = vmatprep.subr.bf16.mxu0 0
      %664 = vmatpush1.bf16.msra.mxu0 0
      %665 = vmatprep.subr.bf16.mxu0 0
      %666 = vmatpush1.bf16.msra.mxu0 0
      %667 = vmatprep.subr.bf16.mxu0 0
      %668 = vmatpush1.bf16.msra.mxu0 0
      %669 = vmatprep.subr.bf16.mxu0 0
      %670 = vmatpush1.bf16.msra.mxu0 0
      %671 = vmatprep.subr.bf16.mxu0 0
      %672 = vmatpush1.bf16.msra.mxu0 0
      %673 = vmatprep.mubr.bf16.mxu0 0
      %674 = vmatmul.mubr.bf16.gmra.mrb[0].mxu0 %v639
      %v675 = vpop.f32.mrb[0].mxu0
      %v676 = vadd.f32 %v495, %v675
      %v677 = vpop.f32.mrb[0].mxu0
      %v678 = vpop.f32.mrb[0].mxu0
      %v679 = vadd.f32 %v498, %v678
      %v680 = vpop.f32.mrb[0].mxu0
      %681 = vmatprep.mubr.bf16.mxu0 0
      %682 = vmatmul.mubr.bf16.gmra.mrb[0].mxu0 %v413
      %v683 = vpop.f32.mrb[0].mxu0
      %v684 = vadd.f32 %v503, %v683
      %v685 = vpop.f32.mrb[0].mxu0
      %v686 = vpop.f32.mrb[0].mxu0
      %v687 = vadd.f32 %v506, %v686
      %v688 = vpop.f32.mrb[0].mxu0
      %689 = vmatprep.mubr.bf16.mxu0 0
      %690 = vmatmul.mubr.bf16.gmra.mrb[0].mxu0 %v416
      %v691 = vpop.f32.mrb[0].mxu0
      %v692 = vadd.f32 %v511, %v691
      %v693 = vpop.f32.mrb[0].mxu0
      %v694 = vpop.f32.mrb[0].mxu0
      %v695 = vadd.f32 %v514, %v694
      %v696 = vpop.f32.mrb[0].mxu0
      %697 = vmatprep.mubr.bf16.mxu0 0
      %698 = vmatmul.mubr.bf16.gmra.mrb[0].mxu0 %v419
      %v699 = vpop.f32.mrb[0].mxu0
      %v700 = vadd.f32 %v519, %v699
      %v701 = vpop.f32.mrb[0].mxu0
      %v702 = vpop.f32.mrb[0].mxu0
      %v703 = vadd.f32 %v522, %v702
      %v704 = vpop.f32.mrb[0].mxu0
      %705 = vmatprep.mubr.bf16.mxu0 0
      %706 = vmatmul.mubr.bf16.gmra.mrb[0].mxu0 %v422
      %v707 = vpop.f32.mrb[0].mxu0
      %v708 = vadd.f32 %v527, %v707
      %v709 = vpop.f32.mrb[0].mxu0
      %v710 = vpop.f32.mrb[0].mxu0
      %v711 = vadd.f32 %v530, %v710
      %v712 = vpop.f32.mrb[0].mxu0
      %713 = vmatprep.mubr.bf16.mxu0 0
      %714 = vmatmul.mubr.bf16.gmra.mrb[0].mxu0 %v425
      %v715 = vpop.f32.mrb[0].mxu0
      %v716 = vadd.f32 %v535, %v715
      %v717 = vpop.f32.mrb[0].mxu0
      %v718 = vpop.f32.mrb[0].mxu0
      %v719 = vadd.f32 %v538, %v718
      %v720 = vpop.f32.mrb[0].mxu0
      %721 = vmatprep.mubr.bf16.mxu0 0
      %722 = vmatmul.mubr.bf16.gmra.mrb[0].mxu0 %v428
      %v723 = vpop.f32.mrb[0].mxu0
      %v724 = vadd.f32 %v543, %v723
      %v725 = vpop.f32.mrb[0].mxu0
      %v726 = vpop.f32.mrb[0].mxu0
      %v727 = vadd.f32 %v546, %v726
      %v728 = vpop.f32.mrb[0].mxu0
      %729 = vmatprep.mubr.bf16.mxu0 0
      %730 = vmatmul.mubr.bf16.gmra.mrb[0].mxu0 %v431
      %v731 = vpop.f32.mrb[0].mxu0
      %v732 = vadd.f32 %v551, %v731
      %v733 = vpop.f32.mrb[0].mxu0
      %v734 = vpop.f32.mrb[0].mxu0
      %v735 = vadd.f32 %v554, %v734
      %v736 = vpop.f32.mrb[0].mxu0
      %737 = vmatprep.mubr.bf16.mxu0 0
      %738 = vmatmul.mubr.bf16.gmra.mrb[0].mxu0 %v434
      %v739 = vpop.f32.mrb[0].mxu0
      %v740 = vadd.f32 %v559, %v739
      %v741 = vpop.f32.mrb[0].mxu0
      %v742 = vpop.f32.mrb[0].mxu0
      %v743 = vadd.f32 %v562, %v742
      %v744 = vpop.f32.mrb[0].mxu0
      %745 = vmatprep.mubr.bf16.mxu0 0
      %746 = vmatmul.mubr.bf16.gmra.mrb[0].mxu0 %v437
      %v747 = vpop.f32.mrb[0].mxu0
      %v748 = vadd.f32 %v567, %v747
      %v749 = vpop.f32.mrb[0].mxu0
      %v750 = vpop.f32.mrb[0].mxu0
      %v751 = vadd.f32 %v570, %v750
      %v752 = vpop.f32.mrb[0].mxu0
      %753 = vmatprep.mubr.bf16.mxu0 0
      %754 = vmatmul.mubr.bf16.gmra.mrb[0].mxu0 %v440
      %v755 = vpop.f32.mrb[0].mxu0
      %v756 = vadd.f32 %v575, %v755
      %v757 = vpop.f32.mrb[0].mxu0
      %v758 = vpop.f32.mrb[0].mxu0
      %v759 = vadd.f32 %v578, %v758
      %v760 = vpop.f32.mrb[0].mxu0
      %761 = vmatprep.mubr.bf16.mxu0 0
      %762 = vmatmul.mubr.bf16.gmra.mrb[0].mxu0 %v443
      %v763 = vpop.f32.mrb[0].mxu0
      %v764 = vadd.f32 %v583, %v763
      %v765 = vpop.f32.mrb[0].mxu0
      %v766 = vpop.f32.mrb[0].mxu0
      %v767 = vadd.f32 %v586, %v766
      %v768 = vpop.f32.mrb[0].mxu0
      %769 = vmatprep.mubr.bf16.mxu0 0
      %770 = vmatmul.mubr.bf16.gmra.mrb[0].mxu0 %v446
      %v771 = vpop.f32.mrb[0].mxu0
      %v772 = vadd.f32 %v591, %v771
      %v773 = vpop.f32.mrb[0].mxu0
      %v774 = vpop.f32.mrb[0].mxu0
      %v775 = vadd.f32 %v594, %v774
      %v776 = vpop.f32.mrb[0].mxu0
      %777 = vmatprep.mubr.bf16.mxu0 0
      %778 = vmatmul.mubr.bf16.gmra.mrb[0].mxu0 %v449
      %v779 = vpop.f32.mrb[0].mxu0
      %v780 = vadd.f32 %v599, %v779
      %v781 = vpop.f32.mrb[0].mxu0
      %v782 = vpop.f32.mrb[0].mxu0
      %v783 = vadd.f32 %v602, %v782
      %v784 = vpop.f32.mrb[0].mxu0
      %785 = vmatprep.mubr.bf16.mxu0 0
      %786 = vmatmul.mubr.bf16.gmra.mrb[0].mxu0 %v452
      %v787 = vpop.f32.mrb[0].mxu0
      %v788 = vadd.f32 %v607, %v787
      %v789 = vpop.f32.mrb[0].mxu0
      %v790 = vpop.f32.mrb[0].mxu0
      %v791 = vadd.f32 %v610, %v790
      %v792 = vpop.f32.mrb[0].mxu0
      %793 = vmatprep.mubr.bf16.mxu0 0
      %794 = vmatmul.mubr.bf16.gmra.mrb[0].mxu0 %v455
      %v795 = vpop.f32.mrb[0].mxu0
      %v796 = vadd.f32 %v615, %v795
      %v797 = vpop.f32.mrb[0].mxu0
      %v798 = vpop.f32.mrb[0].mxu0
      %v799 = vadd.f32 %v618, %v798
      %v800 = vpop.f32.mrb[0].mxu0
      %801 = vdwg.mxu0
      %v802 = vld [vmem:[%s267] sm:$0x1]
      %v803 = vlaneseq
      %v804 = vshrl.u32 %v803, 7
      %v805 = vsub.s32 0, %v804
      %v806 = vrot.slane %v802, %v805
      %v807 = vadd.f32 %v676, %v806
      %v808 = vadd.f32 %v679, %v806
      %v809 = vadd.f32 %v684, %v806
      %v810 = vadd.f32 %v687, %v806
      %v811 = vadd.f32 %v692, %v806
      %v812 = vadd.f32 %v695, %v806
      %v813 = vadd.f32 %v700, %v806
      %v814 = vadd.f32 %v703, %v806
      %v815 = vadd.f32 %v708, %v806
      %v816 = vadd.f32 %v711, %v806
      %v817 = vadd.f32 %v716, %v806
      %v818 = vadd.f32 %v719, %v806
      %v819 = vadd.f32 %v724, %v806
      %v820 = vadd.f32 %v727, %v806
      %v821 = vadd.f32 %v732, %v806
      %v822 = vadd.f32 %v735, %v806
      %v823 = vadd.f32 %v740, %v806
      %v824 = vadd.f32 %v743, %v806
      %v825 = vadd.f32 %v748, %v806
      %v826 = vadd.f32 %v751, %v806
      %v827 = vadd.f32 %v756, %v806
      %v828 = vadd.f32 %v759, %v806
      %v829 = vadd.f32 %v764, %v806
      %v830 = vadd.f32 %v767, %v806
      %v831 = vadd.f32 %v772, %v806
      %v832 = vadd.f32 %v775, %v806
      %v833 = vadd.f32 %v780, %v806
      %v834 = vadd.f32 %v783, %v806
      %v835 = vadd.f32 %v788, %v806
      %v836 = vadd.f32 %v791, %v806
      %v837 = vadd.f32 %v796, %v806
      %v838 = vadd.f32 %v799, %v806
      %v839 = vmul.f32 %v807, 0.2
      %v840 = vmul.f32 %v808, 0.2
      %v841 = vmul.f32 %v809, 0.2
      %v842 = vmul.f32 %v810, 0.2
      %v843 = vmul.f32 %v811, 0.2
      %v844 = vmul.f32 %v812, 0.2
      %v845 = vmul.f32 %v813, 0.2
      %v846 = vmul.f32 %v814, 0.2
      %v847 = vmul.f32 %v815, 0.2
      %v848 = vmul.f32 %v816, 0.2
      %v849 = vmul.f32 %v817, 0.2
      %v850 = vmul.f32 %v818, 0.2
      %v851 = vmul.f32 %v819, 0.2
      %v852 = vmul.f32 %v820, 0.2
      %v853 = vmul.f32 %v821, 0.2
      %v854 = vmul.f32 %v822, 0.2
      %v855 = vmul.f32 %v823, 0.2
      %v856 = vmul.f32 %v824, 0.2
      %v857 = vmul.f32 %v825, 0.2
      %v858 = vmul.f32 %v826, 0.2
      %v859 = vmul.f32 %v827, 0.2
      %v860 = vmul.f32 %v828, 0.2
      %v861 = vmul.f32 %v829, 0.2
      %v862 = vmul.f32 %v830, 0.2
      %v863 = vmul.f32 %v831, 0.2
      %v864 = vmul.f32 %v832, 0.2
      %v865 = vmul.f32 %v833, 0.2
      %v866 = vmul.f32 %v834, 0.2
      %v867 = vmul.f32 %v835, 0.2
      %v868 = vmul.f32 %v836, 0.2
      %v869 = vmul.f32 %v837, 0.2
      %v870 = vmul.f32 %v838, 0.2
      %v871 = vmax.f32 %v807, %v839
      %v872 = vmax.f32 %v808, %v840
      %v873 = vmax.f32 %v809, %v841
      %v874 = vmax.f32 %v810, %v842
      %v875 = vmax.f32 %v811, %v843
      %v876 = vmax.f32 %v812, %v844
      %v877 = vmax.f32 %v813, %v845
      %v878 = vmax.f32 %v814, %v846
      %v879 = vmax.f32 %v815, %v847
      %v880 = vmax.f32 %v816, %v848
      %v881 = vmax.f32 %v817, %v849
      %v882 = vmax.f32 %v818, %v850
      %v883 = vmax.f32 %v819, %v851
      %v884 = vmax.f32 %v820, %v852
      %v885 = vmax.f32 %v821, %v853
      %v886 = vmax.f32 %v822, %v854
      %v887 = vmax.f32 %v823, %v855
      %v888 = vmax.f32 %v824, %v856
      %v889 = vmax.f32 %v825, %v857
      %v890 = vmax.f32 %v826, %v858
      %v891 = vmax.f32 %v827, %v859
      %v892 = vmax.f32 %v828, %v860
      %v893 = vmax.f32 %v829, %v861
      %v894 = vmax.f32 %v830, %v862
      %v895 = vmax.f32 %v831, %v863
      %v896 = vmax.f32 %v832, %v864
      %v897 = vmax.f32 %v833, %v865
      %v898 = vmax.f32 %v834, %v866
      %v899 = vmax.f32 %v835, %v867
      %v900 = vmax.f32 %v836, %v868
      %v901 = vmax.f32 %v837, %v869
      %v902 = vmax.f32 %v838, %v870
      %p903 = scmp.eq.s32.totalorder %s21, 0
      %p904 = scmp.eq.s32.totalorder %s22, 0
      %p905 = pnand %p903, %p904
      %p906 = pneg %p905
      // Predicated region
      $region37: #{encoder_forward.4} parent=35 // pred_check
        _
      $region38: #{encoder_forward.4} parent=35 // pred_check_branch
        %908 = sbr.rel (%p905) target = $region40
      $region39: #{encoder_forward.4} parent=35 // pred_region
        %909 = vst [vmem:[#allocation2] sm:$0x3] 0.0
      $region40: #{encoder_forward.4} parent=35 // pred_fallthru
        _
      // Predicated region
      $region41: #{encoder_forward.4} parent=35 // pred_check
        %p910 = pneg %p903
      $region42: #{encoder_forward.4} parent=35 // pred_check_branch
        %912 = sbr.rel (%p910) target = $region44
      $region43: #{encoder_forward.4} parent=35 // pred_region
        %v913 = vld [vmem:[#allocation2] sm:$0x3]
        %v914 = vadd.f32 %v871, %v872
        %v915 = vadd.f32 %v914, %v873
        %v916 = vadd.f32 %v915, %v874
        %v917 = vadd.f32 %v916, %v875
        %v918 = vadd.f32 %v917, %v876
        %v919 = vadd.f32 %v918, %v877
        %v920 = vadd.f32 %v919, %v878
        %v921 = vadd.f32 %v920, %v879
        %v922 = vadd.f32 %v921, %v880
        %v923 = vadd.f32 %v922, %v881
        %v924 = vadd.f32 %v923, %v882
        %v925 = vadd.f32 %v924, %v883
        %v926 = vadd.f32 %v925, %v884
        %v927 = vadd.f32 %v926, %v885
        %v928 = vadd.f32 %v927, %v886
        %v929 = vadd.f32 %v928, %v887
        %v930 = vadd.f32 %v929, %v888
        %v931 = vadd.f32 %v930, %v889
        %v932 = vadd.f32 %v931, %v890
        %v933 = vadd.f32 %v932, %v891
        %v934 = vadd.f32 %v933, %v892
        %v935 = vadd.f32 %v934, %v893
        %v936 = vadd.f32 %v935, %v894
        %v937 = vadd.f32 %v936, %v895
        %v938 = vadd.f32 %v937, %v896
        %v939 = vadd.f32 %v938, %v897
        %v940 = vadd.f32 %v939, %v898
        %v941 = vadd.f32 %v940, %v899
        %v942 = vadd.f32 %v941, %v900
        %v943 = vadd.f32 %v942, %v901
        %v944 = vadd.f32 %v943, %v902
        %v945 = vrot.slane %v944, 4
        %v946 = vadd.f32 %v944, %v945
        %v947 = vrot.slane %v946, 2
        %v948 = vadd.f32 %v946, %v947
        %v949 = vrot.slane %v948, 1
        %v950 = vadd.f32 %v948, %v949
        %v951 = vmul.f32 %v871, %v871
        %v952 = vmul.f32 %v872, %v872
        %v953 = vmul.f32 %v873, %v873
        %v954 = vmul.f32 %v874, %v874
        %v955 = vmul.f32 %v875, %v875
        %v956 = vmul.f32 %v876, %v876
        %v957 = vmul.f32 %v877, %v877
        %v958 = vmul.f32 %v878, %v878
        %v959 = vmul.f32 %v879, %v879
        %v960 = vmul.f32 %v880, %v880
        %v961 = vmul.f32 %v881, %v881
        %v962 = vmul.f32 %v882, %v882
        %v963 = vmul.f32 %v883, %v883
        %v964 = vmul.f32 %v884, %v884
        %v965 = vmul.f32 %v885, %v885
        %v966 = vmul.f32 %v886, %v886
        %v967 = vmul.f32 %v887, %v887
        %v968 = vmul.f32 %v888, %v888
        %v969 = vmul.f32 %v889, %v889
        %v970 = vmul.f32 %v890, %v890
        %v971 = vmul.f32 %v891, %v891
        %v972 = vmul.f32 %v892, %v892
        %v973 = vmul.f32 %v893, %v893
        %v974 = vmul.f32 %v894, %v894
        %v975 = vmul.f32 %v895, %v895
        %v976 = vmul.f32 %v896, %v896
        %v977 = vmul.f32 %v897, %v897
        %v978 = vmul.f32 %v898, %v898
        %v979 = vmul.f32 %v899, %v899
        %v980 = vmul.f32 %v900, %v900
        %v981 = vmul.f32 %v901, %v901
        %v982 = vmul.f32 %v902, %v902
        %v983 = vadd.f32 %v951, %v952
        %v984 = vadd.f32 %v983, %v953
        %v985 = vadd.f32 %v984, %v954
        %v986 = vadd.f32 %v985, %v955
        %v987 = vadd.f32 %v986, %v956
        %v988 = vadd.f32 %v987, %v957
        %v989 = vadd.f32 %v988, %v958
        %v990 = vadd.f32 %v989, %v959
        %v991 = vadd.f32 %v990, %v960
        %v992 = vadd.f32 %v991, %v961
        %v993 = vadd.f32 %v992, %v962
        %v994 = vadd.f32 %v993, %v963
        %v995 = vadd.f32 %v994, %v964
        %v996 = vadd.f32 %v995, %v965
        %v997 = vadd.f32 %v996, %v966
        %v998 = vadd.f32 %v997, %v967
        %v999 = vadd.f32 %v998, %v968
        %v1000 = vadd.f32 %v999, %v969
        %v1001 = vadd.f32 %v1000, %v970
        %v1002 = vadd.f32 %v1001, %v971
        %v1003 = vadd.f32 %v1002, %v972
        %v1004 = vadd.f32 %v1003, %v973
        %v1005 = vadd.f32 %v1004, %v974
        %v1006 = vadd.f32 %v1005, %v975
        %v1007 = vadd.f32 %v1006, %v976
        %v1008 = vadd.f32 %v1007, %v977
        %v1009 = vadd.f32 %v1008, %v978
        %v1010 = vadd.f32 %v1009, %v979
        %v1011 = vadd.f32 %v1010, %v980
        %v1012 = vadd.f32 %v1011, %v981
        %v1013 = vadd.f32 %v1012, %v982
        %v1014 = vrot.slane %v1013, 4
        %v1015 = vadd.f32 %v1013, %v1014
        %v1016 = vrot.slane %v1015, 2
        %v1017 = vadd.f32 %v1015, %v1016
        %v1018 = vrot.slane %v1017, 1
        %v1019 = vadd.f32 %v1017, %v1018
        %vm1020 = vcmask 1040384
        %v1021 = vsel %vm1020, %v950, %v1019
        %v1022 = vadd.f32 %v913, %v1021
        %1023 = vst [vmem:[#allocation2] sm:$0x3] %v1022
      $region44: #{encoder_forward.4} parent=35 // pred_fallthru
        _
      %p1024 = scmp.eq.s32.totalorder %s21, 1
      %p1025 = pnand %p1024, %p904
      %p1026 = pneg %p1025
      // Predicated region
      $region45: #{encoder_forward.4} parent=35 // pred_check
        _
      $region46: #{encoder_forward.4} parent=35 // pred_check_branch
        %1028 = sbr.rel (%p1025) target = $region48
      $region47: #{encoder_forward.4} parent=35 // pred_region
        %v1029 = vld [vmem:[#allocation2] sm:$0x1]
        %v1030 = vmul.f32 %v1029, 0.001953125
        %v1031 = vld [vmem:[#allocation2 + $0x1] sm:$0x1]
        %v1032 = vmul.f32 %v1031, 0.001953125
        %v1033 = vmul.f32 %v1030, %v1030
        %v1034 = vsub.f32 %v1032, %v1033
        %v1035 = vadd.f32 %v1034, 1e-05
        %v1036 = vrsqrt.pop %v1035
        %v1037 = vld [vmem:[%s267 + $0x1] sm:$0x1]
        %v1038 = vmul.f32 %v1037, %v1036
        %v1039 = vld [vmem:[%s267 + $0x2] sm:$0x1]
        %v1040 = vmul.f32 %v1030, %v1038
        %v1041 = vsub.f32 %v1039, %v1040
        %v1043 = vrot.slane %v1041, 7
        %vm1045 = vcmask 1040384
        %v1046 = vsel %vm1045, %v1038, %v1043
        %1047 = vst [vmem:[#allocation3] sm:$0x3] %v1046
      $region48: #{encoder_forward.4} parent=35 // pred_fallthru
        _
      // Predicated region
      $region49: #{encoder_forward.4} parent=35 // pred_check
        %p1048 = pneg %p1024
      $region50: #{encoder_forward.4} parent=35 // pred_check_branch
        %1050 = sbr.rel (%p1048) target = $region52
      $region51: #{encoder_forward.4} parent=35 // pred_region
        %v1051 = vld [vmem:[#allocation3] sm:$0x1]
        %v1052 = vlaneseq
        %v1053 = vshrl.u32 %v1052, 7
        %v1054 = vsub.s32 0, %v1053
        %v1055 = vrot.slane %v1051, %v1054
        %v1056 = vmul.f32 %v871, %v1055
        %v1057 = vmul.f32 %v872, %v1055
        %v1058 = vmul.f32 %v873, %v1055
        %v1059 = vmul.f32 %v874, %v1055
        %v1060 = vmul.f32 %v875, %v1055
        %v1061 = vmul.f32 %v876, %v1055
        %v1062 = vmul.f32 %v877, %v1055
        %v1063 = vmul.f32 %v878, %v1055
        %v1064 = vmul.f32 %v879, %v1055
        %v1065 = vmul.f32 %v880, %v1055
        %v1066 = vmul.f32 %v881, %v1055
        %v1067 = vmul.f32 %v882, %v1055
        %v1068 = vmul.f32 %v883, %v1055
        %v1069 = vmul.f32 %v884, %v1055
        %v1070 = vmul.f32 %v885, %v1055
        %v1071 = vmul.f32 %v886, %v1055
        %v1072 = vmul.f32 %v887, %v1055
        %v1073 = vmul.f32 %v888, %v1055
        %v1074 = vmul.f32 %v889, %v1055
        %v1075 = vmul.f32 %v890, %v1055
        %v1076 = vmul.f32 %v891, %v1055
        %v1077 = vmul.f32 %v892, %v1055
        %v1078 = vmul.f32 %v893, %v1055
        %v1079 = vmul.f32 %v894, %v1055
        %v1080 = vmul.f32 %v895, %v1055
        %v1081 = vmul.f32 %v896, %v1055
        %v1082 = vmul.f32 %v897, %v1055
        %v1083 = vmul.f32 %v898, %v1055
        %v1084 = vmul.f32 %v899, %v1055
        %v1085 = vmul.f32 %v900, %v1055
        %v1086 = vmul.f32 %v901, %v1055
        %v1087 = vmul.f32 %v902, %v1055
        %v1088 = vld [vmem:[#allocation3 + $0x1] sm:$0x1]
        %v1089 = vlaneseq
        %v1090 = vshrl.u32 %v1089, 7
        %v1091 = vsub.s32 0, %v1090
        %v1092 = vrot.slane %v1088, %v1091
        %v1093 = vadd.f32 %v1056, %v1092
        %v1094 = vadd.f32 %v1057, %v1092
        %v1095 = vadd.f32 %v1058, %v1092
        %v1096 = vadd.f32 %v1059, %v1092
        %v1097 = vadd.f32 %v1060, %v1092
        %v1098 = vadd.f32 %v1061, %v1092
        %v1099 = vadd.f32 %v1062, %v1092
        %v1100 = vadd.f32 %v1063, %v1092
        %v1101 = vadd.f32 %v1064, %v1092
        %v1102 = vadd.f32 %v1065, %v1092
        %v1103 = vadd.f32 %v1066, %v1092
        %v1104 = vadd.f32 %v1067, %v1092
        %v1105 = vadd.f32 %v1068, %v1092
        %v1106 = vadd.f32 %v1069, %v1092
        %v1107 = vadd.f32 %v1070, %v1092
        %v1108 = vadd.f32 %v1071, %v1092
        %v1109 = vadd.f32 %v1072, %v1092
        %v1110 = vadd.f32 %v1073, %v1092
        %v1111 = vadd.f32 %v1074, %v1092
        %v1112 = vadd.f32 %v1075, %v1092
        %v1113 = vadd.f32 %v1076, %v1092
        %v1114 = vadd.f32 %v1077, %v1092
        %v1115 = vadd.f32 %v1078, %v1092
        %v1116 = vadd.f32 %v1079, %v1092
        %v1117 = vadd.f32 %v1080, %v1092
        %v1118 = vadd.f32 %v1081, %v1092
        %v1119 = vadd.f32 %v1082, %v1092
        %v1120 = vadd.f32 %v1083, %v1092
        %v1121 = vadd.f32 %v1084, %v1092
        %v1122 = vadd.f32 %v1085, %v1092
        %v1123 = vadd.f32 %v1086, %v1092
        %v1124 = vadd.f32 %v1087, %v1092
        %v1125 = vpack.c.bf16 %v1094, %v1093
        %v1126 = vpack.c.bf16 %v1096, %v1095
        %v1127 = vpack.c.bf16 %v1098, %v1097
        %v1128 = vpack.c.bf16 %v1100, %v1099
        %v1129 = vpack.c.bf16 %v1102, %v1101
        %v1130 = vpack.c.bf16 %v1104, %v1103
        %v1131 = vpack.c.bf16 %v1106, %v1105
        %v1132 = vpack.c.bf16 %v1108, %v1107
        %v1133 = vpack.c.bf16 %v1110, %v1109
        %v1134 = vpack.c.bf16 %v1112, %v1111
        %v1135 = vpack.c.bf16 %v1114, %v1113
        %v1136 = vpack.c.bf16 %v1116, %v1115
        %v1137 = vpack.c.bf16 %v1118, %v1117
        %v1138 = vpack.c.bf16 %v1120, %v1119
        %v1139 = vpack.c.bf16 %v1122, %v1121
        %v1140 = vpack.c.bf16 %v1124, %v1123
        %v1157 = vunpack.c.l.b16 %v1125
        %v1158 = vunpack.c.h.b16 %v1125
        %v1159 = vunpack.c.l.b16 %v1126
        %v1160 = vunpack.c.h.b16 %v1126
        %v1161 = vunpack.c.l.b16 %v1127
        %v1162 = vunpack.c.h.b16 %v1127
        %v1163 = vunpack.c.l.b16 %v1128
        %v1164 = vunpack.c.h.b16 %v1128
        %v1165 = vunpack.c.l.b16 %v1129
        %v1166 = vunpack.c.h.b16 %v1129
        %v1167 = vunpack.c.l.b16 %v1130
        %v1168 = vunpack.c.h.b16 %v1130
        %v1169 = vunpack.c.l.b16 %v1131
        %v1170 = vunpack.c.h.b16 %v1131
        %v1171 = vunpack.c.l.b16 %v1132
        %v1172 = vunpack.c.h.b16 %v1132
        %v1173 = vunpack.c.l.b16 %v1133
        %v1174 = vunpack.c.h.b16 %v1133
        %v1175 = vunpack.c.l.b16 %v1134
        %v1176 = vunpack.c.h.b16 %v1134
        %v1177 = vunpack.c.l.b16 %v1135
        %v1178 = vunpack.c.h.b16 %v1135
        %v1179 = vunpack.c.l.b16 %v1136
        %v1180 = vunpack.c.h.b16 %v1136
        %v1181 = vunpack.c.l.b16 %v1137
        %v1182 = vunpack.c.h.b16 %v1137
        %v1183 = vunpack.c.l.b16 %v1138
        %v1184 = vunpack.c.h.b16 %v1138
        %v1185 = vunpack.c.l.b16 %v1139
        %v1186 = vunpack.c.h.b16 %v1139
        %v1187 = vunpack.c.l.b16 %v1140
        %v1188 = vunpack.c.h.b16 %v1140
        %v1189 = vpack.c.b16 %v1157, %v1157
        %v1190 = vpack.c.b16 %v1158, %v1158
        %v1191 = vpack.c.b16 %v1159, %v1159
        %v1192 = vpack.c.b16 %v1160, %v1160
        %v1193 = vpack.c.b16 %v1161, %v1161
        %v1194 = vpack.c.b16 %v1162, %v1162
        %v1195 = vpack.c.b16 %v1163, %v1163
        %v1196 = vpack.c.b16 %v1164, %v1164
        %v1197 = vpack.c.b16 %v1165, %v1165
        %v1198 = vpack.c.b16 %v1166, %v1166
        %v1199 = vpack.c.b16 %v1167, %v1167
        %v1200 = vpack.c.b16 %v1168, %v1168
        %v1201 = vpack.c.b16 %v1169, %v1169
        %v1202 = vpack.c.b16 %v1170, %v1170
        %v1203 = vpack.c.b16 %v1171, %v1171
        %v1204 = vpack.c.b16 %v1172, %v1172
        %v1205 = vpack.c.b16 %v1173, %v1173
        %v1206 = vpack.c.b16 %v1174, %v1174
        %v1207 = vpack.c.b16 %v1175, %v1175
        %v1208 = vpack.c.b16 %v1176, %v1176
        %v1209 = vpack.c.b16 %v1177, %v1177
        %v1210 = vpack.c.b16 %v1178, %v1178
        %v1211 = vpack.c.b16 %v1179, %v1179
        %v1212 = vpack.c.b16 %v1180, %v1180
        %v1213 = vpack.c.b16 %v1181, %v1181
        %v1214 = vpack.c.b16 %v1182, %v1182
        %v1215 = vpack.c.b16 %v1183, %v1183
        %v1216 = vpack.c.b16 %v1184, %v1184
        %v1217 = vpack.c.b16 %v1185, %v1185
        %v1218 = vpack.c.b16 %v1186, %v1186
        %v1219 = vpack.c.b16 %v1187, %v1187
        %v1220 = vpack.c.b16 %v1188, %v1188
        %1253 = vst [vmem:[%s275] sm:$0xf] %v1189
        %1254 = vst [vmem:[%s275 + $0x4] sm:$0xf] %v1190
        %1255 = vst [vmem:[%s275 + $0x8] sm:$0xf] %v1191
        %1256 = vst [vmem:[%s275 + $0xc] sm:$0xf] %v1192
        %1257 = vst [vmem:[%s275 + $0x10] sm:$0xf] %v1193
        %1258 = vst [vmem:[%s275 + $0x14] sm:$0xf] %v1194
        %1259 = vst [vmem:[%s275 + $0x18] sm:$0xf] %v1195
        %1260 = vst [vmem:[%s275 + $0x1c] sm:$0xf] %v1196
        %1261 = vst [vmem:[%s275 + $0x20] sm:$0xf] %v1197
        %1262 = vst [vmem:[%s275 + $0x24] sm:$0xf] %v1198
        %1263 = vst [vmem:[%s275 + $0x28] sm:$0xf] %v1199
        %1264 = vst [vmem:[%s275 + $0x2c] sm:$0xf] %v1200
        %1265 = vst [vmem:[%s275 + $0x30] sm:$0xf] %v1201
        %1266 = vst [vmem:[%s275 + $0x34] sm:$0xf] %v1202
        %1267 = vst [vmem:[%s275 + $0x38] sm:$0xf] %v1203
        %1268 = vst [vmem:[%s275 + $0x3c] sm:$0xf] %v1204
        %1269 = vst [vmem:[%s275 + $0x40] sm:$0xf] %v1205
        %1270 = vst [vmem:[%s275 + $0x44] sm:$0xf] %v1206
        %1271 = vst [vmem:[%s275 + $0x48] sm:$0xf] %v1207
        %1272 = vst [vmem:[%s275 + $0x4c] sm:$0xf] %v1208
        %1273 = vst [vmem:[%s275 + $0x50] sm:$0xf] %v1209
        %1274 = vst [vmem:[%s275 + $0x54] sm:$0xf] %v1210
        %1275 = vst [vmem:[%s275 + $0x58] sm:$0xf] %v1211
        %1276 = vst [vmem:[%s275 + $0x5c] sm:$0xf] %v1212
        %1277 = vst [vmem:[%s275 + $0x60] sm:$0xf] %v1213
        %1278 = vst [vmem:[%s275 + $0x64] sm:$0xf] %v1214
        %1279 = vst [vmem:[%s275 + $0x68] sm:$0xf] %v1215
        %1280 = vst [vmem:[%s275 + $0x6c] sm:$0xf] %v1216
        %1281 = vst [vmem:[%s275 + $0x70] sm:$0xf] %v1217
        %1282 = vst [vmem:[%s275 + $0x74] sm:$0xf] %v1218
        %1283 = vst [vmem:[%s275 + $0x78] sm:$0xf] %v1219
        %1284 = vst [vmem:[%s275 + $0x7c] sm:$0xf] %v1220
      $region52: #{encoder_forward.4} parent=35 // pred_fallthru
        _
      %p1285 = scmp.lt.s32.totalorder %s22, 1
      %s1286 = scalar_select %p1285, %s22, 1
      %p1287 = scmp.lt.s32.totalorder %s20, 0
      %s1288 = scalar_select %p1287, %s20, 0
      %s1289 = smul.addr %s1286, 32
      %s1290 = sadd.s32 %s1288, %s1289
      %s1291 = smul.addr %s1290, 4
      %s1292 = scalar_lea.vmem %s4, %s1291
      // Predicated region
      $region53: #{encoder_forward.4} parent=35 // pred_check
        %p1293 = pneg %p158
      $region54: #{encoder_forward.4} parent=35 // pred_check_branch
        %1295 = sbr.rel (%p1293) target = $region56
      $region55: #{encoder_forward.4} parent=35 // pred_region
        _
      $region56: #{encoder_forward.4} parent=35 // pred_fallthru
        _
    $region36: #{encoder_forward.4} parent=5 // pred_fallthru
      _
    %p1296 = scmp.le.s32.totalorder 2, %s10
    // Predicated region
    $region57: #{encoder_forward.4} parent=5 // pred_check
      %p1297 = pneg %p1296
    $region58: #{encoder_forward.4} parent=5 // pred_check_branch
      %1299 = sbr.rel (%p1297) target = $region60
    $region59: #{encoder_forward.4} parent=5 // pred_region
      %s1300 = ssub.s32 %s10, 2
      // Predicated region
      $region61: #{encoder_forward.4} parent=59 // pred_check
        %p1301 = pneg %p164
      $region62: #{encoder_forward.4} parent=59 // pred_check_branch
        %1303 = sbr.rel (%p1301) target = $region64
      $region63: #{encoder_forward.4} parent=59 // pred_region
        %p1304 = scmp.lt.s32.totalorder %s25, 1
        %s1305 = scalar_select %p1304, %s25, 1
        %p1306 = scmp.lt.s32.totalorder %s23, 0
        %s1307 = scalar_select %p1306, %s23, 0
        %s1308 = smul.addr %s1305, 32
        %s1309 = sadd.s32 %s1307, %s1308
        %s1310 = smul.addr %s1309, 4
        %s1311 = scalar_lea.vmem %s4, %s1310
      $region64: #{encoder_forward.4} parent=59 // pred_fallthru
        _
    $region60: #{encoder_forward.4} parent=5 // pred_fallthru
      _
  $region6: #{encoder_forward.4} parent=0 // loop_footer
    %s14 = sadd.s32 1, %s10
  $region7: #{encoder_forward.4} parent=0 // loop_footer_branch
    %9 = sbr.rel target = $region3
  $region8: #{encoder_forward.4} parent=0 // loop_exit
    _

// kernel: encoder_forward.5
$region0: #{encoder_forward.5}
  #allocation0 [shape = 'u32[]', space=smem, size = 0x4, offset = 0x4, fixed_abs, tag = 'smem constant byte address 0x4 - core index']
  #allocation1 [shape = 'u32[144,128]{1,0:T(1,128)}', space=vmem, size = 0x12000, scoped, tag = 'internal scratch']
  #allocation2 [shape = 'f32[2,128]{1,0:T(2,128)}', space=vmem, size = 0x400, scoped, tag = 'scratch operand']
  #allocation3 [shape = 'f32[2,128]{1,0:T(2,128)}', space=vmem, size = 0x400, scoped, tag = 'scratch operand']
  %s0 = inlined_call_operand.vmem [shape: bf16[2,72,64], index: 0, kind: input, shape index: {}]
  %s1 = inlined_call_operand.vmem [shape: bf16[64,128], index: 1, kind: input, shape index: {}]
  %s2 = inlined_call_operand.vmem [shape: bf16[64,128], index: 2, kind: input, shape index: {}]
  %s3 = inlined_call_operand.vmem [shape: f32[3,128], index: 3, kind: input, shape index: {}]
  %s4 = inlined_call_operand.vmem [shape: bf16[2,64,128], index: 4, kind: output, shape index: {}]
  %s5 = sld [smem:[#allocation0]]
  $region65: #{encoder_forward.5} parent=0
    _
  %s7 = ssub.s32 1, %s5
  %s8 = scalar_select 0, %s7, %s5
  loop: start=0, step=1, limit=6
  $region2: #{encoder_forward.5} parent=0 // loop_pre_header
    _
  $region3: #{encoder_forward.5} parent=0 // loop_header
    %s10 = sphi 0, %s14
    %p11 = scmp.ge.s32.totalorder %s10, 6
    %s17 = sphi 0, %s36
    %s18 = sphi 0, %s32
    %s19 = sphi 0, %s28
    %s20 = sphi 0, %s17
    %s21 = sphi 0, %s18
    %s22 = sphi 0, %s19
    %s23 = sphi 0, %s20
    %s24 = sphi 0, %s21
    %s25 = sphi 0, %s22
    %s39 = sphi 0, %s41
    %s42 = sphi 0, %s39
    %s43 = sphi 0, %s42
    %s59 = sphi 0, %s43
    %s65 = sphi 0, %s67
    %s68 = sphi 0, %s65
    %s69 = sphi 0, %s68
    %s85 = sphi 0, %s69
    %s91 = sphi 0, %s93
    %s94 = sphi 0, %s91
    %s95 = sphi 0, %s94
    %s111 = sphi 0, %s95
    %s117 = sphi 0, %s119
    %s120 = sphi 0, %s117
    %s121 = sphi 0, %s120
    %s137 = sphi 0, %s121
    %s145 = sphi 0, %s147
    %s148 = sphi 0, %s145
    %s149 = sphi 0, %s148
    %s165 = sphi 0, %s149
  $region4: #{encoder_forward.5} parent=0 // loop_header_branch
    %13 = sbr.rel (%p11) target = $region8
  $region5: #{encoder_forward.5} parent=0 // loop_body
    %s15 = ssub.s32 %s10, 1
    %s16 = ssub.s32 %s10, 2
    %s26 = sadd.s32 1, %s19
    %p27 = scmp.ge.s32.totalorder %s26, 2
    %s28 = scalar_select %p27, 0, %s26
    %s29 = sadd.s32 1, %s18
    %s30 = scalar_select %p27, %s29, %s18
    %p31 = scmp.ge.s32.totalorder %s30, 2
    %s32 = scalar_select %p31, 0, %s30
    %s33 = sadd.s32 1, %s17
    %s34 = scalar_select %p31, %s33, %s17
    %p35 = scmp.ge.s32.totalorder %s34, 1
    %s36 = scalar_select %p35, 0, %s34
    %s37 = ssub.s32 %s19, %s28
    %p38 = scmp.eq.s32.totalorder %s37, 0
    %s40 = sadd.s32 %s39, 1
    %s41 = scalar_select %p38, %s39, %s40
    %p44 = pneg %p38
    %p45 = scmp.eq.s32.totalorder %s10, 3
    %p46 = por %p44, %p45
    %p47 = scmp.ne.s32.totalorder %s39, %s42
    %p48 = scmp.eq.s32.totalorder %s10, 0
    %p49 = por %p47, %p48
    %p50 = scmp.ne.s32.totalorder %s39, %s42
    %p51 = scmp.eq.s32.totalorder %s15, 3
    %p52 = por %p50, %p51
    %p53 = scmp.ne.s32.totalorder %s42, %s43
    %p54 = scmp.eq.s32.totalorder %s15, 0
    %p55 = por %p53, %p54
    %p56 = scmp.ne.s32.totalorder %s42, %s43
    %p57 = scmp.eq.s32.totalorder %s16, 3
    %p58 = por %p56, %p57
    %p60 = scmp.ne.s32.totalorder %s43, %s59
    %p61 = scmp.eq.s32.totalorder %s16, 0
    %p62 = por %p60, %p61
    %s63 = ssub.s32 %s17, %s36
    %p64 = scmp.eq.s32.totalorder %s63, 0
    %s66 = sadd.s32 %s65, 1
    %s67 = scalar_select %p64, %s65, %s66
    %p70 = pneg %p64
    %p71 = scmp.eq.s32.totalorder %s10, 3
    %p72 = por %p70, %p71
    %p73 = scmp.ne.s32.totalorder %s65, %s68
    %p74 = scmp.eq.s32.totalorder %s10, 0
    %p75 = por %p73, %p74
    %p76 = scmp.ne.s32.totalorder %s65, %s68
    %p77 = scmp.eq.s32.totalorder %s15, 3
    %p78 = por %p76, %p77
    %p79 = scmp.ne.s32.totalorder %s68, %s69
    %p80 = scmp.eq.s32.totalorder %s15, 0
    %p81 = por %p79, %p80
    %p82 = scmp.ne.s32.totalorder %s68, %s69
    %p83 = scmp.eq.s32.totalorder %s16, 3
    %p84 = por %p82, %p83
    %p86 = scmp.ne.s32.totalorder %s69, %s85
    %p87 = scmp.eq.s32.totalorder %s16, 0
    %p88 = por %p86, %p87
    %s89 = ssub.s32 %s17, %s36
    %p90 = scmp.eq.s32.totalorder %s89, 0
    %s92 = sadd.s32 %s91, 1
    %s93 = scalar_select %p90, %s91, %s92
    %p96 = pneg %p90
    %p97 = scmp.eq.s32.totalorder %s10, 3
    %p98 = por %p96, %p97
    %p99 = scmp.ne.s32.totalorder %s91, %s94
    %p100 = scmp.eq.s32.totalorder %s10, 0
    %p101 = por %p99, %p100
    %p102 = scmp.ne.s32.totalorder %s91, %s94
    %p103 = scmp.eq.s32.totalorder %s15, 3
    %p104 = por %p102, %p103
    %p105 = scmp.ne.s32.totalorder %s94, %s95
    %p106 = scmp.eq.s32.totalorder %s15, 0
    %p107 = por %p105, %p106
    %p108 = scmp.ne.s32.totalorder %s94, %s95
    %p109 = scmp.eq.s32.totalorder %s16, 3
    %p110 = por %p108, %p109
    %p112 = scmp.ne.s32.totalorder %s95, %s111
    %p113 = scmp.eq.s32.totalorder %s16, 0
    %p114 = por %p112, %p113
    %s115 = ssub.s32 %s17, %s36
    %p116 = scmp.eq.s32.totalorder %s115, 0
    %s118 = sadd.s32 %s117, 1
    %s119 = scalar_select %p116, %s117, %s118
    %p122 = pneg %p116
    %p123 = scmp.eq.s32.totalorder %s10, 3
    %p124 = por %p122, %p123
    %p125 = scmp.ne.s32.totalorder %s117, %s120
    %p126 = scmp.eq.s32.totalorder %s10, 0
    %p127 = por %p125, %p126
    %p128 = scmp.ne.s32.totalorder %s117, %s120
    %p129 = scmp.eq.s32.totalorder %s15, 3
    %p130 = por %p128, %p129
    %p131 = scmp.ne.s32.totalorder %s120, %s121
    %p132 = scmp.eq.s32.totalorder %s15, 0
    %p133 = por %p131, %p132
    %p134 = scmp.ne.s32.totalorder %s120, %s121
    %p135 = scmp.eq.s32.totalorder %s16, 3
    %p136 = por %p134, %p135
    %p138 = scmp.ne.s32.totalorder %s121, %s137
    %p139 = scmp.eq.s32.totalorder %s16, 0
    %p140 = por %p138, %p139
    %s141 = ssub.s32 %s19, %s28
    %s142 = ssub.s32 %s17, %s36
    %s143 = sor.u32 %s141, %s142
    %p144 = scmp.eq.s32.totalorder %s143, 0
    %s146 = sadd.s32 %s145, 1
    %s147 = scalar_select %p144, %s145, %s146
    %p150 = pneg %p144
    %p151 = scmp.eq.s32.totalorder %s10, 3
    %p152 = por %p150, %p151
    %p153 = scmp.ne.s32.totalorder %s145, %s148
    %p154 = scmp.eq.s32.totalorder %s10, 0
    %p155 = por %p153, %p154
    %p156 = scmp.ne.s32.totalorder %s145, %s148
    %p157 = scmp.eq.s32.totalorder %s15, 3
    %p158 = por %p156, %p157
    %p159 = scmp.ne.s32.totalorder %s148, %s149
    %p160 = scmp.eq.s32.totalorder %s15, 0
    %p161 = por %p159, %p160
    %p162 = scmp.ne.s32.totalorder %s148, %s149
    %p163 = scmp.eq.s32.totalorder %s16, 3
    %p164 = por %p162, %p163
    %p166 = scmp.ne.s32.totalorder %s149, %s165
    %p167 = scmp.eq.s32.totalorder %s16, 0
    %p168 = por %p166, %p167
    %p169 = scmp.le.s32.totalorder 1, %s10
    %p170 = scmp.lt.s32.totalorder %s10, 5
    %p171 = pnand %p169, %p170
    %p172 = pneg %p171
    // Predicated region
    $region9: #{encoder_forward.5} parent=5 // pred_check
      _
    $region10: #{encoder_forward.5} parent=5 // pred_check_branch
      %174 = sbr.rel (%p171) target = $region12
    $region11: #{encoder_forward.5} parent=5 // pred_region
      %s175 = ssub.s32 %s10, 1
      // Predicated region
      $region13: #{encoder_forward.5} parent=11 // pred_check
        %p176 = pneg %p81
      $region14: #{encoder_forward.5} parent=11 // pred_check_branch
        %178 = sbr.rel (%p176) target = $region16
      $region15: #{encoder_forward.5} parent=11 // pred_region
        %p179 = scmp.lt.s32.totalorder %s20, 0
        %s180 = scalar_select %p179, %s20, 0
        %s181 = smul.addr %s180, 4
        %s182 = scalar_lea.vmem %s1, %s181
      $region16: #{encoder_forward.5} parent=11 // pred_fallthru
        _
      // Predicated region
      $region17: #{encoder_forward.5} parent=11 // pred_check
        %p183 = pneg %p107
      $region18: #{encoder_forward.5} parent=11 // pred_check_branch
        %185 = sbr.rel (%p183) target = $region20
      $region19: #{encoder_forward.5} parent=11 // pred_region
        %p186 = scmp.lt.s32.totalorder %s20, 0
        %s187 = scalar_select %p186, %s20, 0
        %s188 = smul.addr %s187, 4
        %s189 = scalar_lea.vmem %s2, %s188
      $region20: #{encoder_forward.5} parent=11 // pred_fallthru
        _
      // Predicated region
      $region21: #{encoder_forward.5} parent=11 // pred_check
        %p190 = pneg %p133
      $region22: #{encoder_forward.5} parent=11 // pred_check_branch
        %192 = sbr.rel (%p190) target = $region24
      $region23: #{encoder_forward.5} parent=11 // pred_region
        %p193 = scmp.lt.s32.totalorder %s20, 0
        %s194 = scalar_select %p193, %s20, 0
        %s195 = smul.addr %s194, 4
        %s196 = scalar_lea.vmem %s3, %s195
      $region24: #{encoder_forward.5} parent=11 // pred_fallthru
        _
    $region12: #{encoder_forward.5} parent=5 // pred_fallthru
      _
    %p197 = scmp.lt.s32.totalorder %s10, 4
    // Predicated region
    $region25: #{encoder_forward.5} parent=5 // pred_check
      %p198 = pneg %p197
    $region26: #{encoder_forward.5} parent=5 // pred_check_branch
      %200 = sbr.rel (%p198) target = $region28
    $region27: #{encoder_forward.5} parent=5 // pred_region
      // Predicated region
      $region29: #{encoder_forward.5} parent=27 // pred_check
        %p201 = pneg %p49
      $region30: #{encoder_forward.5} parent=27 // pred_check_branch
        %203 = sbr.rel (%p201) target = $region32
      $region31: #{encoder_forward.5} parent=27 // pred_region
        %p204 = scmp.lt.s32.totalorder %s19, 1
        %s205 = scalar_select %p204, %s19, 1
        %s206 = smul.addr %s205, 9
        %s207 = smul.addr %s206, 4
        %s208 = scalar_lea.vmem %s0, %s207
      $region32: #{encoder_forward.5} parent=27 // pred_fallthru
        _
    $region28: #{encoder_forward.5} parent=5 // pred_fallthru
      _
    %p209 = scmp.le.s32.totalorder 1, %s10
    %p210 = scmp.lt.s32.totalorder %s10, 5
    %p211 = pnand %p209, %p210
    %p212 = pneg %p211
    // Predicated region
    $region33: #{encoder_forward.5} parent=5 // pred_check
      _
    $region34: #{encoder_forward.5} parent=5 // pred_check_branch
      %214 = sbr.rel (%p211) target = $region36
    $region35: #{encoder_forward.5} parent=5 // pred_region
      %s215 = ssub.s32 %s10, 1
      %p216 = scmp.lt.s32.totalorder %s22, 1
      %s217 = scalar_select %p216, %s22, 1
      %s218 = smul.addr %s217, 9
      %s219 = smul.addr %s218, 4
      %s220 = scalar_lea.vmem %s0, %s219
      %p221 = pneg %p55
      %p222 = pneg %p52
      %p223 = scmp.lt.s32.totalorder %s20, 0
      %s224 = scalar_select %p223, %s20, 0
      %s225 = smul.addr %s224, 4
      %s226 = scalar_lea.vmem %s1, %s225
      %p227 = pneg %p81
      %p228 = pneg %p78
      %p229 = scmp.lt.s32.totalorder %s20, 0
      %s230 = scalar_select %p229, %s20, 0
      %s231 = smul.addr %s230, 4
      %s232 = scalar_lea.vmem %s2, %s231
      %p233 = pneg %p107
      %p234 = pneg %p104
      %p235 = scmp.lt.s32.totalorder %s20, 0
      %s236 = scalar_select %p235, %s20, 0
      %s237 = smul.addr %s236, 4
      %s238 = scalar_lea.vmem %s3, %s237
      %p239 = pneg %p133
      %p240 = pneg %p130
      %p241 = pneg %p161
      %p242 = pneg %p158
      %p243 = scmp.lt.s32.totalorder %s22, 1
      %s244 = scalar_select %p243, %s22, 1
      %p245 = scmp.lt.s32.totalorder %s20, 0
      %s246 = scalar_select %p245, %s20, 0
      %s247 = smul.addr %s244, 8
      %s248 = sadd.s32 %s246, %s247
      %s249 = smul.addr %s248, 4
      %s250 = scalar_lea.vmem %s4, %s249
      %p251 = scmp.lt.s32.totalorder %s22, 1
      %s252 = scalar_select %p251, %s22, 1
      %s253 = smul.addr %s252, 9
      %s254 = smul.addr %s253, 4
      %s255 = scalar_lea.vmem %s0, %s254
      %p256 = scmp.lt.s32.totalorder %s20, 0
      %s257 = scalar_select %p256, %s20, 0
      %s258 = smul.addr %s257, 4
      %s259 = scalar_lea.vmem %s1, %s258
      %p260 = scmp.lt.s32.totalorder %s20, 0
      %s261 = scalar_select %p260, %s20, 0
      %s262 = smul.addr %s261, 4
      %s263 = scalar_lea.vmem %s2, %s262
      %p264 = scmp.lt.s32.totalorder %s20, 0
      %s265 = scalar_select %p264, %s20, 0
      %s266 = smul.addr %s265, 4
      %s267 = scalar_lea.vmem %s3, %s266
      %p268 = scmp.lt.s32.totalorder %s22, 1
      %s269 = scalar_select %p268, %s22, 1
      %p270 = scmp.lt.s32.totalorder %s20, 0
      %s271 = scalar_select %p270, %s20, 0
      %s272 = smul.addr %s269, 8
      %s273 = sadd.s32 %s271, %s272
      %s274 = smul.addr %s273, 4
      %s275 = scalar_lea.vmem %s4, %s274
      %v277 = vld [vmem:[%s255] sm:$0xf]
      %v278 = vld [vmem:[%s255 + $0x4] sm:$0xf]
      %v279 = vld [vmem:[%s255 + $0x8] sm:$0xf]
      %v280 = vld [vmem:[%s255 + $0xc] sm:$0xf]
      %v281 = vld [vmem:[%s255 + $0x10] sm:$0xf]
      %v282 = vld [vmem:[%s255 + $0x14] sm:$0xf]
      %v283 = vld [vmem:[%s255 + $0x18] sm:$0xf]
      %v284 = vld [vmem:[%s255 + $0x1c] sm:$0xf]
      %v285 = vld [vmem:[%s255 + $0x20] sm:$0xf]
      %v286 = vld [vmem:[%s259] sm:$0xf]
      %v287 = vld [vmem:[%s259 + $0x4] sm:$0xf]
      %v288 = vld [vmem:[%s259 + $0x8] sm:$0xf]
      %v289 = vld [vmem:[%s259 + $0xc] sm:$0xf]
      %v290 = vld [vmem:[%s259 + $0x10] sm:$0xf]
      %v291 = vld [vmem:[%s259 + $0x14] sm:$0xf]
      %v292 = vld [vmem:[%s259 + $0x18] sm:$0xf]
      %v293 = vld [vmem:[%s259 + $0x1c] sm:$0xf]
      %v294 = vld [vmem:[%s263] sm:$0xf]
      %v295 = vld [vmem:[%s263 + $0x4] sm:$0xf]
      %v296 = vld [vmem:[%s263 + $0x8] sm:$0xf]
      %v297 = vld [vmem:[%s263 + $0xc] sm:$0xf]
      %v298 = vld [vmem:[%s263 + $0x10] sm:$0xf]
      %v299 = vld [vmem:[%s263 + $0x14] sm:$0xf]
      %v300 = vld [vmem:[%s263 + $0x18] sm:$0xf]
      %v301 = vld [vmem:[%s263 + $0x1c] sm:$0xf]
      %v310 = vunpack.c.l.b16 %v278
      %v311 = vunpack.c.l.b16 %v279
      %v312 = vunpack.c.l.b16 %v280
      %v313 = vunpack.c.l.b16 %v281
      %v314 = vunpack.c.l.b16 %v282
      %v315 = vunpack.c.l.b16 %v283
      %v316 = vunpack.c.l.b16 %v284
      %v317 = vunpack.c.l.b16 %v285
      %v318 = vpack.c.b16 %v311, %v310
      %v319 = vpack.c.b16 %v313, %v312
      %v320 = vpack.c.b16 %v315, %v314
      %v321 = vpack.c.b16 %v317, %v316
      %v330 = vunpack.c.l.b16 %v294
      %v331 = vunpack.c.l.b16 %v295
      %v332 = vunpack.c.l.b16 %v296
      %v333 = vunpack.c.l.b16 %v297
      %v334 = vunpack.c.l.b16 %v298
      %v335 = vunpack.c.l.b16 %v299
      %v336 = vunpack.c.l.b16 %v300
      %v337 = vunpack.c.l.b16 %v301
      %v338 = vpack.c.b16 %v331, %v330
      %v339 = vpack.c.b16 %v333, %v332
      %v340 = vpack.c.b16 %v335, %v334
      %v341 = vpack.c.b16 %v337, %v336
      %vm346 = vcmask 523264
      %v348 = vsel %vm346, %v318, 0
      %v351 = vsel %vm346, %v319, 0
      %v354 = vsel %vm346, %v320, 0
      %v357 = vsel %vm346, %v321, 0
      %359 = vmatprep.subr.bf16.mxu0 0
      %360 = vmatpush1.bf16.msra.mxu0 %v338
      %361 = vmatprep.subr.bf16.mxu0 0
      %362 = vmatpush1.bf16.msra.mxu0 %v339
      %363 = vmatprep.subr.bf16.mxu0 0
      %364 = vmatpush1.bf16.msra.mxu0 %v340
      %365 = vmatprep.subr.bf16.mxu0 0
      %366 = vmatpush1.bf16.msra.mxu0 %v341
      %367 = vmatprep.subr.bf16.mxu0 0
      %368 = vmatpush1.bf16.msra.mxu0 0
      %369 = vmatprep.subr.bf16.mxu0 0
      %370 = vmatpush1.bf16.msra.mxu0 0
      %371 = vmatprep.subr.bf16.mxu0 0
      %372 = vmatpush1.bf16.msra.mxu0 0
      %373 = vmatprep.subr.bf16.mxu0 0
      %374 = vmatpush1.bf16.msra.mxu0 0
      %375 = vmatprep.subr.bf16.mxu0 0
      %376 = vmatpush1.bf16.msra.mxu0 0
      %377 = vmatprep.subr.bf16.mxu0 0
      %378 = vmatpush1.bf16.msra.mxu0 0
      %379 = vmatprep.subr.bf16.mxu0 0
      %380 = vmatpush1.bf16.msra.mxu0 0
      %381 = vmatprep.subr.bf16.mxu0 0
      %382 = vmatpush1.bf16.msra.mxu0 0
      %383 = vmatprep.subr.bf16.mxu0 0
      %384 = vmatpush1.bf16.msra.mxu0 0
      %385 = vmatprep.subr.bf16.mxu0 0
      %386 = vmatpush1.bf16.msra.mxu0 0
      %387 = vmatprep.subr.bf16.mxu0 0
      %388 = vmatpush1.bf16.msra.mxu0 0
      %389 = vmatprep.subr.bf16.mxu0 0
      %390 = vmatpush1.bf16.msra.mxu0 0
      %391 = vmatprep.mubr.bf16.mxu0 0
      %392 = vmatmul.mubr.bf16.gmra.mrb[0].mxu0 %v348
      %v393 = vpop.f32.mrb[0].mxu0
      %v394 = vadd.f32 0.0, %v393
      %v395 = vpop.f32.mrb[0].mxu0
      %v396 = vpop.f32.mrb[0].mxu0
      %v397 = vadd.f32 0.0, %v396
      %v398 = vpop.f32.mrb[0].mxu0
      %399 = vmatprep.mubr.bf16.mxu0 0
      %400 = vmatmul.mubr.bf16.gmra.mrb[0].mxu0 %v351
      %v401 = vpop.f32.mrb[0].mxu0
      %v402 = vadd.f32 0.0, %v401
      %v403 = vpop.f32.mrb[0].mxu0
      %v404 = vpop.f32.mrb[0].mxu0
      %v405 = vadd.f32 0.0, %v404
      %v406 = vpop.f32.mrb[0].mxu0
      %407 = vmatprep.mubr.bf16.mxu0 0
      %408 = vmatmul.mubr.bf16.gmra.mrb[0].mxu0 %v354
      %v409 = vpop.f32.mrb[0].mxu0
      %v410 = vadd.f32 0.0, %v409
      %v411 = vpop.f32.mrb[0].mxu0
      %v412 = vpop.f32.mrb[0].mxu0
      %v413 = vadd.f32 0.0, %v412
      %v414 = vpop.f32.mrb[0].mxu0
      %415 = vmatprep.mubr.bf16.mxu0 0
      %416 = vmatmul.mubr.bf16.gmra.mrb[0].mxu0 %v357
      %v417 = vpop.f32.mrb[0].mxu0
      %v418 = vadd.f32 0.0, %v417
      %v419 = vpop.f32.mrb[0].mxu0
      %v420 = vpop.f32.mrb[0].mxu0
      %v421 = vadd.f32 0.0, %v420
      %v422 = vpop.f32.mrb[0].mxu0
      %423 = vdwg.mxu0
      %v425 = vunpack.c.l.b16 %v277
      %v426 = vpack.c.b16 %v310, %v425
      %v427 = vpack.c.b16 %v312, %v311
      %v428 = vpack.c.b16 %v314, %v313
      %v429 = vpack.c.b16 %v316, %v315
      %v438 = vunpack.c.l.b16 %v286
      %v439 = vunpack.c.l.b16 %v287
      %v440 = vunpack.c.l.b16 %v288
      %v441 = vunpack.c.l.b16 %v289
      %v442 = vunpack.c.l.b16 %v290
      %v443 = vunpack.c.l.b16 %v291
      %v444 = vunpack.c.l.b16 %v292
      %v445 = vunpack.c.l.b16 %v293
      %v446 = vpack.c.b16 %v439, %v438
      %v447 = vpack.c.b16 %v441, %v440
      %v448 = vpack.c.b16 %v443, %v442
      %v449 = vpack.c.b16 %v445, %v444
      %v455 = vsel %vm346, %v426, 0
      %v458 = vsel %vm346, %v427, 0
      %v461 = vsel %vm346, %v428, 0
      %v464 = vsel %vm346, %v429, 0
      %466 = vmatprep.subr.bf16.mxu0 0
      %467 = vmatpush1.bf16.msra.mxu0 %v446
      %468 = vmatprep.subr.bf16.mxu0 0
      %469 = vmatpush1.bf16.msra.mxu0 %v447
      %470 = vmatprep.subr.bf16.mxu0 0
      %471 = vmatpush1.bf16.msra.mxu0 %v448
      %472 = vmatprep.subr.bf16.mxu0 0
      %473 = vmatpush1.bf16.msra.mxu0 %v449
      %474 = vmatprep.subr.bf16.mxu0 0
      %475 = vmatpush1.bf16.msra.mxu0 0
      %476 = vmatprep.subr.bf16.mxu0 0
      %477 = vmatpush1.bf16.msra.mxu0 0
      %478 = vmatprep.subr.bf16.mxu0 0
      %479 = vmatpush1.bf16.msra.mxu0 0
      %480 = vmatprep.subr.bf16.mxu0 0
      %481 = vmatpush1.bf16.msra.mxu0 0
      %482 = vmatprep.subr.bf16.mxu0 0
      %483 = vmatpush1.bf16.msra.mxu0 0
      %484 = vmatprep.subr.bf16.mxu0 0
      %485 = vmatpush1.bf16.msra.mxu0 0
      %486 = vmatprep.subr.bf16.mxu0 0
      %487 = vmatpush1.bf16.msra.mxu0 0
      %488 = vmatprep.subr.bf16.mxu0 0
      %489 = vmatpush1.bf16.msra.mxu0 0
      %490 = vmatprep.subr.bf16.mxu0 0
      %491 = vmatpush1.bf16.msra.mxu0 0
      %492 = vmatprep.subr.bf16.mxu0 0
      %493 = vmatpush1.bf16.msra.mxu0 0
      %494 = vmatprep.subr.bf16.mxu0 0
      %495 = vmatpush1.bf16.msra.mxu0 0
      %496 = vmatprep.subr.bf16.mxu0 0
      %497 = vmatpush1.bf16.msra.mxu0 0
      %498 = vmatprep.mubr.bf16.mxu0 0
      %499 = vmatmul.mubr.bf16.gmra.mrb[0].mxu0 %v455
      %v500 = vpop.f32.mrb[0].mxu0
      %v501 = vadd.f32 %v394, %v500
      %v502 = vpop.f32.mrb[0].mxu0
      %v503 = vpop.f32.mrb[0].mxu0
      %v504 = vadd.f32 %v397, %v503
      %v505 = vpop.f32.mrb[0].mxu0
      %506 = vmatprep.mubr.bf16.mxu0 0
      %507 = vmatmul.mubr.bf16.gmra.mrb[0].mxu0 %v458
      %v508 = vpop.f32.mrb[0].mxu0
      %v509 = vadd.f32 %v402, %v508
      %v510 = vpop.f32.mrb[0].mxu0
      %v511 = vpop.f32.mrb[0].mxu0
      %v512 = vadd.f32 %v405, %v511
      %v513 = vpop.f32.mrb[0].mxu0
      %514 = vmatprep.mubr.bf16.mxu0 0
      %515 = vmatmul.mubr.bf16.gmra.mrb[0].mxu0 %v461
      %v516 = vpop.f32.mrb[0].mxu0
      %v517 = vadd.f32 %v410, %v516
      %v518 = vpop.f32.mrb[0].mxu0
      %v519 = vpop.f32.mrb[0].mxu0
      %v520 = vadd.f32 %v413, %v519
      %v521 = vpop.f32.mrb[0].mxu0
      %522 = vmatprep.mubr.bf16.mxu0 0
      %523 = vmatmul.mubr.bf16.gmra.mrb[0].mxu0 %v464
      %v524 = vpop.f32.mrb[0].mxu0
      %v525 = vadd.f32 %v418, %v524
      %v526 = vpop.f32.mrb[0].mxu0
      %v527 = vpop.f32.mrb[0].mxu0
      %v528 = vadd.f32 %v421, %v527
      %v529 = vpop.f32.mrb[0].mxu0
      %530 = vdwg.mxu0
      %v531 = vld [vmem:[%s267] sm:$0x1]
      %v532 = vlaneseq
      %v533 = vshrl.u32 %v532, 7
      %v534 = vsub.s32 0, %v533
      %v535 = vrot.slane %v531, %v534
      %v536 = vadd.f32 %v501, %v535
      %v537 = vadd.f32 %v504, %v535
      %v538 = vadd.f32 %v509, %v535
      %v539 = vadd.f32 %v512, %v535
      %v540 = vadd.f32 %v517, %v535
      %v541 = vadd.f32 %v520, %v535
      %v542 = vadd.f32 %v525, %v535
      %v543 = vadd.f32 %v528, %v535
      %v544 = vmul.f32 %v536, 0.2
      %v545 = vmul.f32 %v537, 0.2
      %v546 = vmul.f32 %v538, 0.2
      %v547 = vmul.f32 %v539, 0.2
      %v548 = vmul.f32 %v540, 0.2
      %v549 = vmul.f32 %v541, 0.2
      %v550 = vmul.f32 %v542, 0.2
      %v551 = vmul.f32 %v543, 0.2
      %v552 = vmax.f32 %v536, %v544
      %v553 = vmax.f32 %v537, %v545
      %v554 = vmax.f32 %v538, %v546
      %v555 = vmax.f32 %v539, %v547
      %v556 = vmax.f32 %v540, %v548
      %v557 = vmax.f32 %v541, %v549
      %v558 = vmax.f32 %v542, %v550
      %v559 = vmax.f32 %v543, %v551
      %p560 = scmp.eq.s32.totalorder %s21, 0
      %p561 = scmp.eq.s32.totalorder %s22, 0
      %p562 = pnand %p560, %p561
      %p563 = pneg %p562
      // Predicated region
      $region37: #{encoder_forward.5} parent=35 // pred_check
        _
      $region38: #{encoder_forward.5} parent=35 // pred_check_branch
        %565 = sbr.rel (%p562) target = $region40
      $region39: #{encoder_forward.5} parent=35 // pred_region
        %566 = vst [vmem:[#allocation2] sm:$0x3] 0.0
      $region40: #{encoder_forward.5} parent=35 // pred_fallthru
        _
      // Predicated region
      $region41: #{encoder_forward.5} parent=35 // pred_check
        %p567 = pneg %p560
      $region42: #{encoder_forward.5} parent=35 // pred_check_branch
        %569 = sbr.rel (%p567) target = $region44
      $region43: #{encoder_forward.5} parent=35 // pred_region
        %v570 = vld [vmem:[#allocation2] sm:$0x3]
        %v571 = vadd.f32 %v552, %v553
        %v572 = vadd.f32 %v571, %v554
        %v573 = vadd.f32 %v572, %v555
        %v574 = vadd.f32 %v573, %v556
        %v575 = vadd.f32 %v574, %v557
        %v576 = vadd.f32 %v575, %v558
        %v577 = vadd.f32 %v576, %v559
        %v578 = vrot.slane %v577, 4
        %v579 = vadd.f32 %v577, %v578
        %v580 = vrot.slane %v579, 2
        %v581 = vadd.f32 %v579, %v580
        %v582 = vrot.slane %v581, 1
        %v583 = vadd.f32 %v581, %v582
        %v584 = vmul.f32 %v552, %v552
        %v585 = vmul.f32 %v553, %v553
        %v586 = vmul.f32 %v554, %v554
        %v587 = vmul.f32 %v555, %v555
        %v588 = vmul.f32 %v556, %v556
        %v589 = vmul.f32 %v557, %v557
        %v590 = vmul.f32 %v558, %v558
        %v591 = vmul.f32 %v559, %v559
        %v592 = vadd.f32 %v584, %v585
        %v593 = vadd.f32 %v592, %v586
        %v594 = vadd.f32 %v593, %v587
        %v595 = vadd.f32 %v594, %v588
        %v596 = vadd.f32 %v595, %v589
        %v597 = vadd.f32 %v596, %v590
        %v598 = vadd.f32 %v597, %v591
        %v599 = vrot.slane %v598, 4
        %v600 = vadd.f32 %v598, %v599
        %v601 = vrot.slane %v600, 2
        %v602 = vadd.f32 %v600, %v601
        %v603 = vrot.slane %v602, 1
        %v604 = vadd.f32 %v602, %v603
        %vm605 = vcmask 1040384
        %v606 = vsel %vm605, %v583, %v604
        %v607 = vadd.f32 %v570, %v606
        %608 = vst [vmem:[#allocation2] sm:$0x3] %v607
      $region44: #{encoder_forward.5} parent=35 // pred_fallthru
        _
      %p609 = scmp.eq.s32.totalorder %s21, 1
      %p610 = pnand %p609, %p561
      %p611 = pneg %p610
      // Predicated region
      $region45: #{encoder_forward.5} parent=35 // pred_check
        _
      $region46: #{encoder_forward.5} parent=35 // pred_check_branch
        %613 = sbr.rel (%p610) target = $region48
      $region47: #{encoder_forward.5} parent=35 // pred_region
        %v614 = vld [vmem:[#allocation2] sm:$0x1]
        %v615 = vmul.f32 %v614, 0.0078125
        %v616 = vld [vmem:[#allocation2 + $0x1] sm:$0x1]
        %v617 = vmul.f32 %v616, 0.0078125
        %v618 = vmul.f32 %v615, %v615
        %v619 = vsub.f32 %v617, %v618
        %v620 = vadd.f32 %v619, 1e-05
        %v621 = vrsqrt.pop %v620
        %v622 = vld [vmem:[%s267 + $0x1] sm:$0x1]
        %v623 = vmul.f32 %v622, %v621
        %v624 = vld [vmem:[%s267 + $0x2] sm:$0x1]
        %v625 = vmul.f32 %v615, %v623
        %v626 = vsub.f32 %v624, %v625
        %v628 = vrot.slane %v626, 7
        %vm630 = vcmask 1040384
        %v631 = vsel %vm630, %v623, %v628
        %632 = vst [vmem:[#allocation3] sm:$0x3] %v631
      $region48: #{encoder_forward.5} parent=35 // pred_fallthru
        _
      // Predicated region
      $region49: #{encoder_forward.5} parent=35 // pred_check
        %p633 = pneg %p609
      $region50: #{encoder_forward.5} parent=35 // pred_check_branch
        %635 = sbr.rel (%p633) target = $region52
      $region51: #{encoder_forward.5} parent=35 // pred_region
        %v636 = vld [vmem:[#allocation3] sm:$0x1]
        %v637 = vlaneseq
        %v638 = vshrl.u32 %v637, 7
        %v639 = vsub.s32 0, %v638
        %v640 = vrot.slane %v636, %v639
        %v641 = vmul.f32 %v552, %v640
        %v642 = vmul.f32 %v553, %v640
        %v643 = vmul.f32 %v554, %v640
        %v644 = vmul.f32 %v555, %v640
        %v645 = vmul.f32 %v556, %v640
        %v646 = vmul.f32 %v557, %v640
        %v647 = vmul.f32 %v558, %v640
        %v648 = vmul.f32 %v559, %v640
        %v649 = vld [vmem:[#allocation3 + $0x1] sm:$0x1]
        %v650 = vlaneseq
        %v651 = vshrl.u32 %v650, 7
        %v652 = vsub.s32 0, %v651
        %v653 = vrot.slane %v649, %v652
        %v654 = vadd.f32 %v641, %v653
        %v655 = vadd.f32 %v642, %v653
        %v656 = vadd.f32 %v643, %v653
        %v657 = vadd.f32 %v644, %v653
        %v658 = vadd.f32 %v645, %v653
        %v659 = vadd.f32 %v646, %v653
        %v660 = vadd.f32 %v647, %v653
        %v661 = vadd.f32 %v648, %v653
        %v662 = vpack.c.bf16 %v655, %v654
        %v663 = vpack.c.bf16 %v657, %v656
        %v664 = vpack.c.bf16 %v659, %v658
        %v665 = vpack.c.bf16 %v661, %v660
        %v670 = vunpack.c.l.b16 %v662
        %v671 = vunpack.c.h.b16 %v662
        %v672 = vunpack.c.l.b16 %v663
        %v673 = vunpack.c.h.b16 %v663
        %v674 = vunpack.c.l.b16 %v664
        %v675 = vunpack.c.h.b16 %v664
        %v676 = vunpack.c.l.b16 %v665
        %v677 = vunpack.c.h.b16 %v665
        %v678 = vpack.c.b16 %v670, %v670
        %v679 = vpack.c.b16 %v671, %v671
        %v680 = vpack.c.b16 %v672, %v672
        %v681 = vpack.c.b16 %v673, %v673
        %v682 = vpack.c.b16 %v674, %v674
        %v683 = vpack.c.b16 %v675, %v675
        %v684 = vpack.c.b16 %v676, %v676
        %v685 = vpack.c.b16 %v677, %v677
        %694 = vst [vmem:[%s275] sm:$0xf] %v678
        %695 = vst [vmem:[%s275 + $0x4] sm:$0xf] %v679
        %696 = vst [vmem:[%s275 + $0x8] sm:$0xf] %v680
        %697 = vst [vmem:[%s275 + $0xc] sm:$0xf] %v681
        %698 = vst [vmem:[%s275 + $0x10] sm:$0xf] %v682
        %699 = vst [vmem:[%s275 + $0x14] sm:$0xf] %v683
        %700 = vst [vmem:[%s275 + $0x18] sm:$0xf] %v684
        %701 = vst [vmem:[%s275 + $0x1c] sm:$0xf] %v685
      $region52: #{encoder_forward.5} parent=35 // pred_fallthru
        _
      %p702 = scmp.lt.s32.totalorder %s22, 1
      %s703 = scalar_select %p702, %s22, 1
      %p704 = scmp.lt.s32.totalorder %s20, 0
      %s705 = scalar_select %p704, %s20, 0
      %s706 = smul.addr %s703, 8
      %s707 = sadd.s32 %s705, %s706
      %s708 = smul.addr %s707, 4
      %s709 = scalar_lea.vmem %s4, %s708
      // Predicated region
      $region53: #{encoder_forward.5} parent=35 // pred_check
        %p710 = pneg %p158
      $region54: #{encoder_forward.5} parent=35 // pred_check_branch
        %712 = sbr.rel (%p710) target = $region56
      $region55: #{encoder_forward.5} parent=35 // pred_region
        _
      $region56: #{encoder_forward.5} parent=35 // pred_fallthru
        _
    $region36: #{encoder_forward.5} parent=5 // pred_fallthru
      _
    %p713 = scmp.le.s32.totalorder 2, %s10
    // Predicated region
    $region57: #{encoder_forward.5} parent=5 // pred_check
      %p714 = pneg %p713
    $region58: #{encoder_forward.5} parent=5 // pred_check_branch
      %716 = sbr.rel (%p714) target = $region60
    $region59: #{encoder_forward.5} parent=5 // pred_region
      %s717 = ssub.s32 %s10, 2
      // Predicated region
      $region61: #{encoder_forward.5} parent=59 // pred_check
        %p718 = pneg %p164
      $region62: #{encoder_forward.5} parent=59 // pred_check_branch
        %720 = sbr.rel (%p718) target = $region64
      $region63: #{encoder_forward.5} parent=59 // pred_region
        %p721 = scmp.lt.s32.totalorder %s25, 1
        %s722 = scalar_select %p721, %s25, 1
        %p723 = scmp.lt.s32.totalorder %s23, 0
        %s724 = scalar_select %p723, %s23, 0
        %s725 = smul.addr %s722, 8
        %s726 = sadd.s32 %s724, %s725
        %s727 = smul.addr %s726, 4
        %s728 = scalar_lea.vmem %s4, %s727
      $region64: #{encoder_forward.5} parent=59 // pred_fallthru
        _
    $region60: #{encoder_forward.5} parent=5 // pred_fallthru
      _
  $region6: #{encoder_forward.5} parent=0 // loop_footer
    %s14 = sadd.s32 1, %s10
  $region7: #{encoder_forward.5} parent=0 // loop_footer_branch
    %9 = sbr.rel target = $region3
  $region8: #{encoder_forward.5} parent=0 // loop_exit
    _

// kernel: encoder_forward.6
$region0: #{encoder_forward.6}
  #allocation0 [shape = 'u32[]', space=smem, size = 0x4, offset = 0x4, fixed_abs, tag = 'smem constant byte address 0x4 - core index']
  #allocation1 [shape = 'u32[144,128]{1,0:T(1,128)}', space=vmem, size = 0x12000, scoped, tag = 'internal scratch']
  #allocation2 [shape = 'f32[2,128]{1,0:T(2,128)}', space=vmem, size = 0x400, scoped, tag = 'scratch operand']
  #allocation3 [shape = 'f32[2,128]{1,0:T(2,128)}', space=vmem, size = 0x400, scoped, tag = 'scratch operand']
  %s0 = inlined_call_operand.vmem [shape: bf16[2,20,128], index: 0, kind: input, shape index: {}]
  %s1 = inlined_call_operand.vmem [shape: bf16[128,128], index: 1, kind: input, shape index: {}]
  %s2 = inlined_call_operand.vmem [shape: bf16[128,128], index: 2, kind: input, shape index: {}]
  %s3 = inlined_call_operand.vmem [shape: f32[3,128], index: 3, kind: input, shape index: {}]
  %s4 = inlined_call_operand.vmem [shape: bf16[2,16,128], index: 4, kind: output, shape index: {}]
  %s5 = sld [smem:[#allocation0]]
  $region65: #{encoder_forward.6} parent=0
    _
  %s7 = ssub.s32 1, %s5
  %s8 = scalar_select 0, %s7, %s5
  loop: start=0, step=1, limit=6
  $region2: #{encoder_forward.6} parent=0 // loop_pre_header
    _
  $region3: #{encoder_forward.6} parent=0 // loop_header
    %s10 = sphi 0, %s14
    %p11 = scmp.ge.s32.totalorder %s10, 6
    %s17 = sphi 0, %s36
    %s18 = sphi 0, %s32
    %s19 = sphi 0, %s28
    %s20 = sphi 0, %s17
    %s21 = sphi 0, %s18
    %s22 = sphi 0, %s19
    %s23 = sphi 0, %s20
    %s24 = sphi 0, %s21
    %s25 = sphi 0, %s22
    %s39 = sphi 0, %s41
    %s42 = sphi 0, %s39
    %s43 = sphi 0, %s42
    %s59 = sphi 0, %s43
    %s65 = sphi 0, %s67
    %s68 = sphi 0, %s65
    %s69 = sphi 0, %s68
    %s85 = sphi 0, %s69
    %s91 = sphi 0, %s93
    %s94 = sphi 0, %s91
    %s95 = sphi 0, %s94
    %s111 = sphi 0, %s95
    %s117 = sphi 0, %s119
    %s120 = sphi 0, %s117
    %s121 = sphi 0, %s120
    %s137 = sphi 0, %s121
    %s145 = sphi 0, %s147
    %s148 = sphi 0, %s145
    %s149 = sphi 0, %s148
    %s165 = sphi 0, %s149
  $region4: #{encoder_forward.6} parent=0 // loop_header_branch
    %13 = sbr.rel (%p11) target = $region8
  $region5: #{encoder_forward.6} parent=0 // loop_body
    %s15 = ssub.s32 %s10, 1
    %s16 = ssub.s32 %s10, 2
    %s26 = sadd.s32 1, %s19
    %p27 = scmp.ge.s32.totalorder %s26, 2
    %s28 = scalar_select %p27, 0, %s26
    %s29 = sadd.s32 1, %s18
    %s30 = scalar_select %p27, %s29, %s18
    %p31 = scmp.ge.s32.totalorder %s30, 2
    %s32 = scalar_select %p31, 0, %s30
    %s33 = sadd.s32 1, %s17
    %s34 = scalar_select %p31, %s33, %s17
    %p35 = scmp.ge.s32.totalorder %s34, 1
    %s36 = scalar_select %p35, 0, %s34
    %s37 = ssub.s32 %s19, %s28
    %p38 = scmp.eq.s32.totalorder %s37, 0
    %s40 = sadd.s32 %s39, 1
    %s41 = scalar_select %p38, %s39, %s40
    %p44 = pneg %p38
    %p45 = scmp.eq.s32.totalorder %s10, 3
    %p46 = por %p44, %p45
    %p47 = scmp.ne.s32.totalorder %s39, %s42
    %p48 = scmp.eq.s32.totalorder %s10, 0
    %p49 = por %p47, %p48
    %p50 = scmp.ne.s32.totalorder %s39, %s42
    %p51 = scmp.eq.s32.totalorder %s15, 3
    %p52 = por %p50, %p51
    %p53 = scmp.ne.s32.totalorder %s42, %s43
    %p54 = scmp.eq.s32.totalorder %s15, 0
    %p55 = por %p53, %p54
    %p56 = scmp.ne.s32.totalorder %s42, %s43
    %p57 = scmp.eq.s32.totalorder %s16, 3
    %p58 = por %p56, %p57
    %p60 = scmp.ne.s32.totalorder %s43, %s59
    %p61 = scmp.eq.s32.totalorder %s16, 0
    %p62 = por %p60, %p61
    %s63 = ssub.s32 %s17, %s36
    %p64 = scmp.eq.s32.totalorder %s63, 0
    %s66 = sadd.s32 %s65, 1
    %s67 = scalar_select %p64, %s65, %s66
    %p70 = pneg %p64
    %p71 = scmp.eq.s32.totalorder %s10, 3
    %p72 = por %p70, %p71
    %p73 = scmp.ne.s32.totalorder %s65, %s68
    %p74 = scmp.eq.s32.totalorder %s10, 0
    %p75 = por %p73, %p74
    %p76 = scmp.ne.s32.totalorder %s65, %s68
    %p77 = scmp.eq.s32.totalorder %s15, 3
    %p78 = por %p76, %p77
    %p79 = scmp.ne.s32.totalorder %s68, %s69
    %p80 = scmp.eq.s32.totalorder %s15, 0
    %p81 = por %p79, %p80
    %p82 = scmp.ne.s32.totalorder %s68, %s69
    %p83 = scmp.eq.s32.totalorder %s16, 3
    %p84 = por %p82, %p83
    %p86 = scmp.ne.s32.totalorder %s69, %s85
    %p87 = scmp.eq.s32.totalorder %s16, 0
    %p88 = por %p86, %p87
    %s89 = ssub.s32 %s17, %s36
    %p90 = scmp.eq.s32.totalorder %s89, 0
    %s92 = sadd.s32 %s91, 1
    %s93 = scalar_select %p90, %s91, %s92
    %p96 = pneg %p90
    %p97 = scmp.eq.s32.totalorder %s10, 3
    %p98 = por %p96, %p97
    %p99 = scmp.ne.s32.totalorder %s91, %s94
    %p100 = scmp.eq.s32.totalorder %s10, 0
    %p101 = por %p99, %p100
    %p102 = scmp.ne.s32.totalorder %s91, %s94
    %p103 = scmp.eq.s32.totalorder %s15, 3
    %p104 = por %p102, %p103
    %p105 = scmp.ne.s32.totalorder %s94, %s95
    %p106 = scmp.eq.s32.totalorder %s15, 0
    %p107 = por %p105, %p106
    %p108 = scmp.ne.s32.totalorder %s94, %s95
    %p109 = scmp.eq.s32.totalorder %s16, 3
    %p110 = por %p108, %p109
    %p112 = scmp.ne.s32.totalorder %s95, %s111
    %p113 = scmp.eq.s32.totalorder %s16, 0
    %p114 = por %p112, %p113
    %s115 = ssub.s32 %s17, %s36
    %p116 = scmp.eq.s32.totalorder %s115, 0
    %s118 = sadd.s32 %s117, 1
    %s119 = scalar_select %p116, %s117, %s118
    %p122 = pneg %p116
    %p123 = scmp.eq.s32.totalorder %s10, 3
    %p124 = por %p122, %p123
    %p125 = scmp.ne.s32.totalorder %s117, %s120
    %p126 = scmp.eq.s32.totalorder %s10, 0
    %p127 = por %p125, %p126
    %p128 = scmp.ne.s32.totalorder %s117, %s120
    %p129 = scmp.eq.s32.totalorder %s15, 3
    %p130 = por %p128, %p129
    %p131 = scmp.ne.s32.totalorder %s120, %s121
    %p132 = scmp.eq.s32.totalorder %s15, 0
    %p133 = por %p131, %p132
    %p134 = scmp.ne.s32.totalorder %s120, %s121
    %p135 = scmp.eq.s32.totalorder %s16, 3
    %p136 = por %p134, %p135
    %p138 = scmp.ne.s32.totalorder %s121, %s137
    %p139 = scmp.eq.s32.totalorder %s16, 0
    %p140 = por %p138, %p139
    %s141 = ssub.s32 %s19, %s28
    %s142 = ssub.s32 %s17, %s36
    %s143 = sor.u32 %s141, %s142
    %p144 = scmp.eq.s32.totalorder %s143, 0
    %s146 = sadd.s32 %s145, 1
    %s147 = scalar_select %p144, %s145, %s146
    %p150 = pneg %p144
    %p151 = scmp.eq.s32.totalorder %s10, 3
    %p152 = por %p150, %p151
    %p153 = scmp.ne.s32.totalorder %s145, %s148
    %p154 = scmp.eq.s32.totalorder %s10, 0
    %p155 = por %p153, %p154
    %p156 = scmp.ne.s32.totalorder %s145, %s148
    %p157 = scmp.eq.s32.totalorder %s15, 3
    %p158 = por %p156, %p157
    %p159 = scmp.ne.s32.totalorder %s148, %s149
    %p160 = scmp.eq.s32.totalorder %s15, 0
    %p161 = por %p159, %p160
    %p162 = scmp.ne.s32.totalorder %s148, %s149
    %p163 = scmp.eq.s32.totalorder %s16, 3
    %p164 = por %p162, %p163
    %p166 = scmp.ne.s32.totalorder %s149, %s165
    %p167 = scmp.eq.s32.totalorder %s16, 0
    %p168 = por %p166, %p167
    %p169 = scmp.le.s32.totalorder 1, %s10
    %p170 = scmp.lt.s32.totalorder %s10, 5
    %p171 = pnand %p169, %p170
    %p172 = pneg %p171
    // Predicated region
    $region9: #{encoder_forward.6} parent=5 // pred_check
      _
    $region10: #{encoder_forward.6} parent=5 // pred_check_branch
      %174 = sbr.rel (%p171) target = $region12
    $region11: #{encoder_forward.6} parent=5 // pred_region
      %s175 = ssub.s32 %s10, 1
      // Predicated region
      $region13: #{encoder_forward.6} parent=11 // pred_check
        %p176 = pneg %p81
      $region14: #{encoder_forward.6} parent=11 // pred_check_branch
        %178 = sbr.rel (%p176) target = $region16
      $region15: #{encoder_forward.6} parent=11 // pred_region
        %p179 = scmp.lt.s32.totalorder %s20, 0
        %s180 = scalar_select %p179, %s20, 0
        %s181 = smul.addr %s180, 4
        %s182 = scalar_lea.vmem %s1, %s181
      $region16: #{encoder_forward.6} parent=11 // pred_fallthru
        _
      // Predicated region
      $region17: #{encoder_forward.6} parent=11 // pred_check
        %p183 = pneg %p107
      $region18: #{encoder_forward.6} parent=11 // pred_check_branch
        %185 = sbr.rel (%p183) target = $region20
      $region19: #{encoder_forward.6} parent=11 // pred_region
        %p186 = scmp.lt.s32.totalorder %s20, 0
        %s187 = scalar_select %p186, %s20, 0
        %s188 = smul.addr %s187, 4
        %s189 = scalar_lea.vmem %s2, %s188
      $region20: #{encoder_forward.6} parent=11 // pred_fallthru
        _
      // Predicated region
      $region21: #{encoder_forward.6} parent=11 // pred_check
        %p190 = pneg %p133
      $region22: #{encoder_forward.6} parent=11 // pred_check_branch
        %192 = sbr.rel (%p190) target = $region24
      $region23: #{encoder_forward.6} parent=11 // pred_region
        %p193 = scmp.lt.s32.totalorder %s20, 0
        %s194 = scalar_select %p193, %s20, 0
        %s195 = smul.addr %s194, 4
        %s196 = scalar_lea.vmem %s3, %s195
      $region24: #{encoder_forward.6} parent=11 // pred_fallthru
        _
    $region12: #{encoder_forward.6} parent=5 // pred_fallthru
      _
    %p197 = scmp.lt.s32.totalorder %s10, 4
    // Predicated region
    $region25: #{encoder_forward.6} parent=5 // pred_check
      %p198 = pneg %p197
    $region26: #{encoder_forward.6} parent=5 // pred_check_branch
      %200 = sbr.rel (%p198) target = $region28
    $region27: #{encoder_forward.6} parent=5 // pred_region
      // Predicated region
      $region29: #{encoder_forward.6} parent=27 // pred_check
        %p201 = pneg %p49
      $region30: #{encoder_forward.6} parent=27 // pred_check_branch
        %203 = sbr.rel (%p201) target = $region32
      $region31: #{encoder_forward.6} parent=27 // pred_region
        %p204 = scmp.lt.s32.totalorder %s19, 1
        %s205 = scalar_select %p204, %s19, 1
        %s206 = smul.addr %s205, 3
        %s207 = smul.addr %s206, 4
        %s208 = scalar_lea.vmem %s0, %s207
      $region32: #{encoder_forward.6} parent=27 // pred_fallthru
        _
    $region28: #{encoder_forward.6} parent=5 // pred_fallthru
      _
    %p209 = scmp.le.s32.totalorder 1, %s10
    %p210 = scmp.lt.s32.totalorder %s10, 5
    %p211 = pnand %p209, %p210
    %p212 = pneg %p211
    // Predicated region
    $region33: #{encoder_forward.6} parent=5 // pred_check
      _
    $region34: #{encoder_forward.6} parent=5 // pred_check_branch
      %214 = sbr.rel (%p211) target = $region36
    $region35: #{encoder_forward.6} parent=5 // pred_region
      %s215 = ssub.s32 %s10, 1
      %p216 = scmp.lt.s32.totalorder %s22, 1
      %s217 = scalar_select %p216, %s22, 1
      %s218 = smul.addr %s217, 3
      %s219 = smul.addr %s218, 4
      %s220 = scalar_lea.vmem %s0, %s219
      %p221 = pneg %p55
      %p222 = pneg %p52
      %p223 = scmp.lt.s32.totalorder %s20, 0
      %s224 = scalar_select %p223, %s20, 0
      %s225 = smul.addr %s224, 4
      %s226 = scalar_lea.vmem %s1, %s225
      %p227 = pneg %p81
      %p228 = pneg %p78
      %p229 = scmp.lt.s32.totalorder %s20, 0
      %s230 = scalar_select %p229, %s20, 0
      %s231 = smul.addr %s230, 4
      %s232 = scalar_lea.vmem %s2, %s231
      %p233 = pneg %p107
      %p234 = pneg %p104
      %p235 = scmp.lt.s32.totalorder %s20, 0
      %s236 = scalar_select %p235, %s20, 0
      %s237 = smul.addr %s236, 4
      %s238 = scalar_lea.vmem %s3, %s237
      %p239 = pneg %p133
      %p240 = pneg %p130
      %p241 = pneg %p161
      %p242 = pneg %p158
      %p243 = scmp.lt.s32.totalorder %s22, 1
      %s244 = scalar_select %p243, %s22, 1
      %p245 = scmp.lt.s32.totalorder %s20, 0
      %s246 = scalar_select %p245, %s20, 0
      %s247 = smul.addr %s244, 2
      %s248 = sadd.s32 %s246, %s247
      %s249 = smul.addr %s248, 4
      %s250 = scalar_lea.vmem %s4, %s249
      %p251 = scmp.lt.s32.totalorder %s22, 1
      %s252 = scalar_select %p251, %s22, 1
      %s253 = smul.addr %s252, 3
      %s254 = smul.addr %s253, 4
      %s255 = scalar_lea.vmem %s0, %s254
      %p256 = scmp.lt.s32.totalorder %s20, 0
      %s257 = scalar_select %p256, %s20, 0
      %s258 = smul.addr %s257, 4
      %s259 = scalar_lea.vmem %s1, %s258
      %p260 = scmp.lt.s32.totalorder %s20, 0
      %s261 = scalar_select %p260, %s20, 0
      %s262 = smul.addr %s261, 4
      %s263 = scalar_lea.vmem %s2, %s262
      %p264 = scmp.lt.s32.totalorder %s20, 0
      %s265 = scalar_select %p264, %s20, 0
      %s266 = smul.addr %s265, 4
      %s267 = scalar_lea.vmem %s3, %s266
      %p268 = scmp.lt.s32.totalorder %s22, 1
      %s269 = scalar_select %p268, %s22, 1
      %p270 = scmp.lt.s32.totalorder %s20, 0
      %s271 = scalar_select %p270, %s20, 0
      %s272 = smul.addr %s269, 2
      %s273 = sadd.s32 %s271, %s272
      %s274 = smul.addr %s273, 4
      %s275 = scalar_lea.vmem %s4, %s274
      %v277 = vld [vmem:[%s255] sm:$0xf]
      %v278 = vld [vmem:[%s255 + $0x4] sm:$0xf]
      %v279 = vld [vmem:[%s255] sm:$0xc]
      %v280 = vld [vmem:[%s255 + $0x8] sm:$0x3]
      %v281 = vld [vmem:[%s259] sm:$0xf]
      %v282 = vld [vmem:[%s259 + $0x4] sm:$0xf]
      %v283 = vld [vmem:[%s259 + $0x8] sm:$0xf]
      %v284 = vld [vmem:[%s259 + $0xc] sm:$0xf]
      %v285 = vld [vmem:[%s259 + $0x10] sm:$0xf]
      %v286 = vld [vmem:[%s259 + $0x14] sm:$0xf]
      %v287 = vld [vmem:[%s259 + $0x18] sm:$0xf]
      %v288 = vld [vmem:[%s259 + $0x1c] sm:$0xf]
      %v289 = vld [vmem:[%s259 + $0x20] sm:$0xf]
      %v290 = vld [vmem:[%s259 + $0x24] sm:$0xf]
      %v291 = vld [vmem:[%s259 + $0x28] sm:$0xf]
      %v292 = vld [vmem:[%s259 + $0x2c] sm:$0xf]
      %v293 = vld [vmem:[%s259 + $0x30] sm:$0xf]
      %v294 = vld [vmem:[%s259 + $0x34] sm:$0xf]
      %v295 = vld [vmem:[%s259 + $0x38] sm:$0xf]
      %v296 = vld [vmem:[%s259 + $0x3c] sm:$0xf]
      %v297 = vld [vmem:[%s263] sm:$0xf]
      %v298 = vld [vmem:[%s263 + $0x4] sm:$0xf]
      %v299 = vld [vmem:[%s263 + $0x8] sm:$0xf]
      %v300 = vld [vmem:[%s263 + $0xc] sm:$0xf]
      %v301 = vld [vmem:[%s263 + $0x10] sm:$0xf]
      %v302 = vld [vmem:[%s263 + $0x14] sm:$0xf]
      %v303 = vld [vmem:[%s263 + $0x18] sm:$0xf]
      %v304 = vld [vmem:[%s263 + $0x1c] sm:$0xf]
      %v305 = vld [vmem:[%s263 + $0x20] sm:$0xf]
      %v306 = vld [vmem:[%s263 + $0x24] sm:$0xf]
      %v307 = vld [vmem:[%s263 + $0x28] sm:$0xf]
      %v308 = vld [vmem:[%s263 + $0x2c] sm:$0xf]
      %v309 = vld [vmem:[%s263 + $0x30] sm:$0xf]
      %v310 = vld [vmem:[%s263 + $0x34] sm:$0xf]
      %v311 = vld [vmem:[%s263 + $0x38] sm:$0xf]
      %v312 = vld [vmem:[%s263 + $0x3c] sm:$0xf]
      %v316 = vunpack.c.l.b16 %v279
      %v317 = vunpack.c.l.b16 %v278
      %v318 = vunpack.c.l.b16 %v280
      %v319 = vpack.c.b16 %v317, %v316
      %v320 = vpack.c.b16 %v318, %v318
      %vm321 = vcmask 1045504
      %v322 = vrot.slane %v319, 2
      %v323 = vrot.slane %v320, 2
      %v324 = vsel %vm321, %v322, %v323
      %v342 = vunpack.c.l.b16 %v297
      %v343 = vunpack.c.l.b16 %v298
      %v344 = vunpack.c.l.b16 %v299
      %v345 = vunpack.c.l.b16 %v300
      %v346 = vunpack.c.l.b16 %v301
      %v347 = vunpack.c.l.b16 %v302
      %v348 = vunpack.c.l.b16 %v303
      %v349 = vunpack.c.l.b16 %v304
      %v350 = vunpack.c.l.b16 %v305
      %v351 = vunpack.c.l.b16 %v306
      %v352 = vunpack.c.l.b16 %v307
      %v353 = vunpack.c.l.b16 %v308
      %v354 = vunpack.c.l.b16 %v309
      %v355 = vunpack.c.l.b16 %v310
      %v356 = vunpack.c.l.b16 %v311
      %v357 = vunpack.c.l.b16 %v312
      %v358 = vpack.c.b16 %v343, %v342
      %v359 = vpack.c.b16 %v345, %v344
      %v360 = vpack.c.b16 %v347, %v346
      %v361 = vpack.c.b16 %v349, %v348
      %v362 = vpack.c.b16 %v351, %v350
      %v363 = vpack.c.b16 %v353, %v352
      %v364 = vpack.c.b16 %v355, %v354
      %v365 = vpack.c.b16 %v357, %v356
      %374 = vmatprep.subr.bf16.mxu0 0
      %375 = vmatpush1.bf16.msra.mxu0 %v358
      %376 = vmatprep.subr.bf16.mxu0 0
      %377 = vmatpush1.bf16.msra.mxu0 %v359
      %378 = vmatprep.subr.bf16.mxu0 0
      %379 = vmatpush1.bf16.msra.mxu0 %v360
      %380 = vmatprep.subr.bf16.mxu0 0
      %381 = vmatpush1.bf16.msra.mxu0 %v361
      %382 = vmatprep.subr.bf16.mxu0 0
      %383 = vmatpush1.bf16.msra.mxu0 %v362
      %384 = vmatprep.subr.bf16.mxu0 0
      %385 = vmatpush1.bf16.msra.mxu0 %v363
      %386 = vmatprep.subr.bf16.mxu0 0
      %387 = vmatpush1.bf16.msra.mxu0 %v364
      %388 = vmatprep.subr.bf16.mxu0 0
      %389 = vmatpush1.bf16.msra.mxu0 %v365
      %390 = vmatprep.subr.bf16.mxu0 0
      %391 = vmatpush1.bf16.msra.mxu0 0
      %392 = vmatprep.subr.bf16.mxu0 0
      %393 = vmatpush1.bf16.msra.mxu0 0
      %394 = vmatprep.subr.bf16.mxu0 0
      %395 = vmatpush1.bf16.msra.mxu0 0
      %396 = vmatprep.subr.bf16.mxu0 0
      %397 = vmatpush1.bf16.msra.mxu0 0
      %398 = vmatprep.subr.bf16.mxu0 0
      %399 = vmatpush1.bf16.msra.mxu0 0
      %400 = vmatprep.subr.bf16.mxu0 0
      %401 = vmatpush1.bf16.msra.mxu0 0
      %402 = vmatprep.subr.bf16.mxu0 0
      %403 = vmatpush1.bf16.msra.mxu0 0
      %404 = vmatprep.subr.bf16.mxu0 0
      %405 = vmatpush1.bf16.msra.mxu0 0
      %406 = vmatprep.mubr.bf16.mxu0 0
      %407 = vmatmul.mubr.bf16.gmra.mrb[0].mxu0 %v324
      %v408 = vpop.f32.mrb[0].mxu0
      %v409 = vadd.f32 0.0, %v408
      %v410 = vpop.f32.mrb[0].mxu0
      %v411 = vpop.f32.mrb[0].mxu0
      %v412 = vadd.f32 0.0, %v411
      %v413 = vpop.f32.mrb[0].mxu0
      %414 = vdwg.mxu0
      %v416 = vunpack.c.l.b16 %v277
      %v417 = vpack.c.b16 %v317, %v416
      %v435 = vunpack.c.l.b16 %v281
      %v436 = vunpack.c.l.b16 %v282
      %v437 = vunpack.c.l.b16 %v283
      %v438 = vunpack.c.l.b16 %v284
      %v439 = vunpack.c.l.b16 %v285
      %v440 = vunpack.c.l.b16 %v286
      %v441 = vunpack.c.l.b16 %v287
      %v442 = vunpack.c.l.b16 %v288
      %v443 = vunpack.c.l.b16 %v289
      %v444 = vunpack.c.l.b16 %v290
      %v445 = vunpack.c.l.b16 %v291
      %v446 = vunpack.c.l.b16 %v292
      %v447 = vunpack.c.l.b16 %v293
      %v448 = vunpack.c.l.b16 %v294
      %v449 = vunpack.c.l.b16 %v295
      %v450 = vunpack.c.l.b16 %v296
      %v451 = vpack.c.b16 %v436, %v435
      %v452 = vpack.c.b16 %v438, %v437
      %v453 = vpack.c.b16 %v440, %v439
      %v454 = vpack.c.b16 %v442, %v441
      %v455 = vpack.c.b16 %v444, %v443
      %v456 = vpack.c.b16 %v446, %v445
      %v457 = vpack.c.b16 %v448, %v447
      %v458 = vpack.c.b16 %v450, %v449
      %467 = vmatprep.subr.bf16.mxu0 0
      %468 = vmatpush1.bf16.msra.mxu0 %v451
      %469 = vmatprep.subr.bf16.mxu0 0
      %470 = vmatpush1.bf16.msra.mxu0 %v452
      %471 = vmatprep.subr.bf16.mxu0 0
      %472 = vmatpush1.bf16.msra.mxu0 %v453
      %473 = vmatprep.subr.bf16.mxu0 0
      %474 = vmatpush1.bf16.msra.mxu0 %v454
      %475 = vmatprep.subr.bf16.mxu0 0
      %476 = vmatpush1.bf16.msra.mxu0 %v455
      %477 = vmatprep.subr.bf16.mxu0 0
      %478 = vmatpush1.bf16.msra.mxu0 %v456
      %479 = vmatprep.subr.bf16.mxu0 0
      %480 = vmatpush1.bf16.msra.mxu0 %v457
      %481 = vmatprep.subr.bf16.mxu0 0
      %482 = vmatpush1.bf16.msra.mxu0 %v458
      %483 = vmatprep.subr.bf16.mxu0 0
      %484 = vmatpush1.bf16.msra.mxu0 0
      %485 = vmatprep.subr.bf16.mxu0 0
      %486 = vmatpush1.bf16.msra.mxu0 0
      %487 = vmatprep.subr.bf16.mxu0 0
      %488 = vmatpush1.bf16.msra.mxu0 0
      %489 = vmatprep.subr.bf16.mxu0 0
      %490 = vmatpush1.bf16.msra.mxu0 0
      %491 = vmatprep.subr.bf16.mxu0 0
      %492 = vmatpush1.bf16.msra.mxu0 0
      %493 = vmatprep.subr.bf16.mxu0 0
      %494 = vmatpush1.bf16.msra.mxu0 0
      %495 = vmatprep.subr.bf16.mxu0 0
      %496 = vmatpush1.bf16.msra.mxu0 0
      %497 = vmatprep.subr.bf16.mxu0 0
      %498 = vmatpush1.bf16.msra.mxu0 0
      %499 = vmatprep.mubr.bf16.mxu0 0
      %500 = vmatmul.mubr.bf16.gmra.mrb[0].mxu0 %v417
      %v501 = vpop.f32.mrb[0].mxu0
      %v502 = vadd.f32 %v409, %v501
      %v503 = vpop.f32.mrb[0].mxu0
      %v504 = vpop.f32.mrb[0].mxu0
      %v505 = vadd.f32 %v412, %v504
      %v506 = vpop.f32.mrb[0].mxu0
      %507 = vdwg.mxu0
      %v508 = vld [vmem:[%s267] sm:$0x1]
      %v509 = vlaneseq
      %v510 = vshrl.u32 %v509, 7
      %v511 = vsub.s32 0, %v510
      %v512 = vrot.slane %v508, %v511
      %v513 = vadd.f32 %v502, %v512
      %v514 = vadd.f32 %v505, %v512
      %v515 = vmul.f32 %v513, 0.2
      %v516 = vmul.f32 %v514, 0.2
      %v517 = vmax.f32 %v513, %v515
      %v518 = vmax.f32 %v514, %v516
      %p519 = scmp.eq.s32.totalorder %s21, 0
      %p520 = scmp.eq.s32.totalorder %s22, 0
      %p521 = pnand %p519, %p520
      %p522 = pneg %p521
      // Predicated region
      $region37: #{encoder_forward.6} parent=35 // pred_check
        _
      $region38: #{encoder_forward.6} parent=35 // pred_check_branch
        %524 = sbr.rel (%p521) target = $region40
      $region39: #{encoder_forward.6} parent=35 // pred_region
        %525 = vst [vmem:[#allocation2] sm:$0x3] 0.0
      $region40: #{encoder_forward.6} parent=35 // pred_fallthru
        _
      // Predicated region
      $region41: #{encoder_forward.6} parent=35 // pred_check
        %p526 = pneg %p519
      $region42: #{encoder_forward.6} parent=35 // pred_check_branch
        %528 = sbr.rel (%p526) target = $region44
      $region43: #{encoder_forward.6} parent=35 // pred_region
        %v529 = vld [vmem:[#allocation2] sm:$0x3]
        %v530 = vadd.f32 %v517, %v518
        %v531 = vrot.slane %v530, 4
        %v532 = vadd.f32 %v530, %v531
        %v533 = vrot.slane %v532, 2
        %v534 = vadd.f32 %v532, %v533
        %v535 = vrot.slane %v534, 1
        %v536 = vadd.f32 %v534, %v535
        %v537 = vmul.f32 %v517, %v517
        %v538 = vmul.f32 %v518, %v518
        %v539 = vadd.f32 %v537, %v538
        %v540 = vrot.slane %v539, 4
        %v541 = vadd.f32 %v539, %v540
        %v542 = vrot.slane %v541, 2
        %v543 = vadd.f32 %v541, %v542
        %v544 = vrot.slane %v543, 1
        %v545 = vadd.f32 %v543, %v544
        %vm546 = vcmask 1040384
        %v547 = vsel %vm546, %v536, %v545
        %v548 = vadd.f32 %v529, %v547
        %549 = vst [vmem:[#allocation2] sm:$0x3] %v548
      $region44: #{encoder_forward.6} parent=35 // pred_fallthru
        _
      %p550 = scmp.eq.s32.totalorder %s21, 1
      %p551 = pnand %p550, %p520
      %p552 = pneg %p551
      // Predicated region
      $region45: #{encoder_forward.6} parent=35 // pred_check
        _
      $region46: #{encoder_forward.6} parent=35 // pred_check_branch
        %554 = sbr.rel (%p551) target = $region48
      $region47: #{encoder_forward.6} parent=35 // pred_region
        %v555 = vld [vmem:[#allocation2] sm:$0x1]
        %v556 = vmul.f32 %v555, 0.03125
        %v557 = vld [vmem:[#allocation2 + $0x1] sm:$0x1]
        %v558 = vmul.f32 %v557, 0.03125
        %v559 = vmul.f32 %v556, %v556
        %v560 = vsub.f32 %v558, %v559
        %v561 = vadd.f32 %v560, 1e-05
        %v562 = vrsqrt.pop %v561
        %v563 = vld [vmem:[%s267 + $0x1] sm:$0x1]
        %v564 = vmul.f32 %v563, %v562
        %v565 = vld [vmem:[%s267 + $0x2] sm:$0x1]
        %v566 = vmul.f32 %v556, %v564
        %v567 = vsub.f32 %v565, %v566
        %v569 = vrot.slane %v567, 7
        %vm571 = vcmask 1040384
        %v572 = vsel %vm571, %v564, %v569
        %573 = vst [vmem:[#allocation3] sm:$0x3] %v572
      $region48: #{encoder_forward.6} parent=35 // pred_fallthru
        _
      // Predicated region
      $region49: #{encoder_forward.6} parent=35 // pred_check
        %p574 = pneg %p550
      $region50: #{encoder_forward.6} parent=35 // pred_check_branch
        %576 = sbr.rel (%p574) target = $region52
      $region51: #{encoder_forward.6} parent=35 // pred_region
        %v577 = vld [vmem:[#allocation3] sm:$0x1]
        %v578 = vlaneseq
        %v579 = vshrl.u32 %v578, 7
        %v580 = vsub.s32 0, %v579
        %v581 = vrot.slane %v577, %v580
        %v582 = vmul.f32 %v517, %v581
        %v583 = vmul.f32 %v518, %v581
        %v584 = vld [vmem:[#allocation3 + $0x1] sm:$0x1]
        %v585 = vlaneseq
        %v586 = vshrl.u32 %v585, 7
        %v587 = vsub.s32 0, %v586
        %v588 = vrot.slane %v584, %v587
        %v589 = vadd.f32 %v582, %v588
        %v590 = vadd.f32 %v583, %v588
        %v591 = vpack.c.bf16 %v590, %v589
        %v593 = vunpack.c.l.b16 %v591
        %v594 = vunpack.c.h.b16 %v591
        %v595 = vpack.c.b16 %v593, %v593
        %v596 = vpack.c.b16 %v594, %v594
        %599 = vst [vmem:[%s275] sm:$0xf] %v595
        %600 = vst [vmem:[%s275 + $0x4] sm:$0xf] %v596
      $region52: #{encoder_forward.6} parent=35 // pred_fallthru
        _
      %p601 = scmp.lt.s32.totalorder %s22, 1
      %s602 = scalar_select %p601, %s22, 1
      %p603 = scmp.lt.s32.totalorder %s20, 0
      %s604 = scalar_select %p603, %s20, 0
      %s605 = smul.addr %s602, 2
      %s606 = sadd.s32 %s604, %s605
      %s607 = smul.addr %s606, 4
      %s608 = scalar_lea.vmem %s4, %s607
      // Predicated region
      $region53: #{encoder_forward.6} parent=35 // pred_check
        %p609 = pneg %p158
      $region54: #{encoder_forward.6} parent=35 // pred_check_branch
        %611 = sbr.rel (%p609) target = $region56
      $region55: #{encoder_forward.6} parent=35 // pred_region
        _
      $region56: #{encoder_forward.6} parent=35 // pred_fallthru
        _
    $region36: #{encoder_forward.6} parent=5 // pred_fallthru
      _
    %p612 = scmp.le.s32.totalorder 2, %s10
    // Predicated region
    $region57: #{encoder_forward.6} parent=5 // pred_check
      %p613 = pneg %p612
    $region58: #{encoder_forward.6} parent=5 // pred_check_branch
      %615 = sbr.rel (%p613) target = $region60
    $region59: #{encoder_forward.6} parent=5 // pred_region
      %s616 = ssub.s32 %s10, 2
      // Predicated region
      $region61: #{encoder_forward.6} parent=59 // pred_check
        %p617 = pneg %p164
      $region62: #{encoder_forward.6} parent=59 // pred_check_branch
        %619 = sbr.rel (%p617) target = $region64
      $region63: #{encoder_forward.6} parent=59 // pred_region
        %p620 = scmp.lt.s32.totalorder %s25, 1
        %s621 = scalar_select %p620, %s25, 1
        %p622 = scmp.lt.s32.totalorder %s23, 0
        %s623 = scalar_select %p622, %s23, 0
        %s624 = smul.addr %s621, 2
        %s625 = sadd.s32 %s623, %s624
        %s626 = smul.addr %s625, 4
        %s627 = scalar_lea.vmem %s4, %s626
      $region64: #{encoder_forward.6} parent=59 // pred_fallthru
        _
    $region60: #{encoder_forward.6} parent=5 // pred_fallthru
      _
  $region6: #{encoder_forward.6} parent=0 // loop_footer
    %s14 = sadd.s32 1, %s10
  $region7: #{encoder_forward.6} parent=0 // loop_footer_branch
    %9 = sbr.rel target = $region3
  $region8: #{encoder_forward.6} parent=0 // loop_exit
    _

// kernel: encoder_forward.7
$region0: #{encoder_forward.7}
  #allocation0 [shape = 'u32[]', space=smem, size = 0x4, offset = 0x4, fixed_abs, tag = 'smem constant byte address 0x4 - core index']
  #allocation1 [shape = 'u32[144,128]{1,0:T(1,128)}', space=vmem, size = 0x12000, scoped, tag = 'internal scratch']
  #allocation2 [shape = 'f32[2,128]{1,0:T(2,128)}', space=vmem, size = 0x400, scoped, tag = 'scratch operand']
  #allocation3 [shape = 'f32[2,128]{1,0:T(2,128)}', space=vmem, size = 0x400, scoped, tag = 'scratch operand']
  %s0 = inlined_call_operand.vmem [shape: bf16[2,6,256], index: 0, kind: input, shape index: {}]
  %s1 = inlined_call_operand.vmem [shape: bf16[256,128], index: 1, kind: input, shape index: {}]
  %s2 = inlined_call_operand.vmem [shape: bf16[256,128], index: 2, kind: input, shape index: {}]
  %s3 = inlined_call_operand.vmem [shape: f32[3,128], index: 3, kind: input, shape index: {}]
  %s4 = inlined_call_operand.vmem [shape: f32[2,4,128], index: 4, kind: output, shape index: {}]
  %s5 = sld [smem:[#allocation0]]
  $region65: #{encoder_forward.7} parent=0
    _
  %s7 = ssub.s32 1, %s5
  %s8 = scalar_select 0, %s7, %s5
  loop: start=0, step=1, limit=6
  $region2: #{encoder_forward.7} parent=0 // loop_pre_header
    _
  $region3: #{encoder_forward.7} parent=0 // loop_header
    %s10 = sphi 0, %s14
    %p11 = scmp.ge.s32.totalorder %s10, 6
    %s17 = sphi 0, %s36
    %s18 = sphi 0, %s32
    %s19 = sphi 0, %s28
    %s20 = sphi 0, %s17
    %s21 = sphi 0, %s18
    %s22 = sphi 0, %s19
    %s23 = sphi 0, %s20
    %s24 = sphi 0, %s21
    %s25 = sphi 0, %s22
    %s39 = sphi 0, %s41
    %s42 = sphi 0, %s39
    %s43 = sphi 0, %s42
    %s59 = sphi 0, %s43
    %s65 = sphi 0, %s67
    %s68 = sphi 0, %s65
    %s69 = sphi 0, %s68
    %s85 = sphi 0, %s69
    %s91 = sphi 0, %s93
    %s94 = sphi 0, %s91
    %s95 = sphi 0, %s94
    %s111 = sphi 0, %s95
    %s117 = sphi 0, %s119
    %s120 = sphi 0, %s117
    %s121 = sphi 0, %s120
    %s137 = sphi 0, %s121
    %s145 = sphi 0, %s147
    %s148 = sphi 0, %s145
    %s149 = sphi 0, %s148
    %s165 = sphi 0, %s149
  $region4: #{encoder_forward.7} parent=0 // loop_header_branch
    %13 = sbr.rel (%p11) target = $region8
  $region5: #{encoder_forward.7} parent=0 // loop_body
    %s15 = ssub.s32 %s10, 1
    %s16 = ssub.s32 %s10, 2
    %s26 = sadd.s32 1, %s19
    %p27 = scmp.ge.s32.totalorder %s26, 2
    %s28 = scalar_select %p27, 0, %s26
    %s29 = sadd.s32 1, %s18
    %s30 = scalar_select %p27, %s29, %s18
    %p31 = scmp.ge.s32.totalorder %s30, 2
    %s32 = scalar_select %p31, 0, %s30
    %s33 = sadd.s32 1, %s17
    %s34 = scalar_select %p31, %s33, %s17
    %p35 = scmp.ge.s32.totalorder %s34, 1
    %s36 = scalar_select %p35, 0, %s34
    %s37 = ssub.s32 %s19, %s28
    %p38 = scmp.eq.s32.totalorder %s37, 0
    %s40 = sadd.s32 %s39, 1
    %s41 = scalar_select %p38, %s39, %s40
    %p44 = pneg %p38
    %p45 = scmp.eq.s32.totalorder %s10, 3
    %p46 = por %p44, %p45
    %p47 = scmp.ne.s32.totalorder %s39, %s42
    %p48 = scmp.eq.s32.totalorder %s10, 0
    %p49 = por %p47, %p48
    %p50 = scmp.ne.s32.totalorder %s39, %s42
    %p51 = scmp.eq.s32.totalorder %s15, 3
    %p52 = por %p50, %p51
    %p53 = scmp.ne.s32.totalorder %s42, %s43
    %p54 = scmp.eq.s32.totalorder %s15, 0
    %p55 = por %p53, %p54
    %p56 = scmp.ne.s32.totalorder %s42, %s43
    %p57 = scmp.eq.s32.totalorder %s16, 3
    %p58 = por %p56, %p57
    %p60 = scmp.ne.s32.totalorder %s43, %s59
    %p61 = scmp.eq.s32.totalorder %s16, 0
    %p62 = por %p60, %p61
    %s63 = ssub.s32 %s17, %s36
    %p64 = scmp.eq.s32.totalorder %s63, 0
    %s66 = sadd.s32 %s65, 1
    %s67 = scalar_select %p64, %s65, %s66
    %p70 = pneg %p64
    %p71 = scmp.eq.s32.totalorder %s10, 3
    %p72 = por %p70, %p71
    %p73 = scmp.ne.s32.totalorder %s65, %s68
    %p74 = scmp.eq.s32.totalorder %s10, 0
    %p75 = por %p73, %p74
    %p76 = scmp.ne.s32.totalorder %s65, %s68
    %p77 = scmp.eq.s32.totalorder %s15, 3
    %p78 = por %p76, %p77
    %p79 = scmp.ne.s32.totalorder %s68, %s69
    %p80 = scmp.eq.s32.totalorder %s15, 0
    %p81 = por %p79, %p80
    %p82 = scmp.ne.s32.totalorder %s68, %s69
    %p83 = scmp.eq.s32.totalorder %s16, 3
    %p84 = por %p82, %p83
    %p86 = scmp.ne.s32.totalorder %s69, %s85
    %p87 = scmp.eq.s32.totalorder %s16, 0
    %p88 = por %p86, %p87
    %s89 = ssub.s32 %s17, %s36
    %p90 = scmp.eq.s32.totalorder %s89, 0
    %s92 = sadd.s32 %s91, 1
    %s93 = scalar_select %p90, %s91, %s92
    %p96 = pneg %p90
    %p97 = scmp.eq.s32.totalorder %s10, 3
    %p98 = por %p96, %p97
    %p99 = scmp.ne.s32.totalorder %s91, %s94
    %p100 = scmp.eq.s32.totalorder %s10, 0
    %p101 = por %p99, %p100
    %p102 = scmp.ne.s32.totalorder %s91, %s94
    %p103 = scmp.eq.s32.totalorder %s15, 3
    %p104 = por %p102, %p103
    %p105 = scmp.ne.s32.totalorder %s94, %s95
    %p106 = scmp.eq.s32.totalorder %s15, 0
    %p107 = por %p105, %p106
    %p108 = scmp.ne.s32.totalorder %s94, %s95
    %p109 = scmp.eq.s32.totalorder %s16, 3
    %p110 = por %p108, %p109
    %p112 = scmp.ne.s32.totalorder %s95, %s111
    %p113 = scmp.eq.s32.totalorder %s16, 0
    %p114 = por %p112, %p113
    %s115 = ssub.s32 %s17, %s36
    %p116 = scmp.eq.s32.totalorder %s115, 0
    %s118 = sadd.s32 %s117, 1
    %s119 = scalar_select %p116, %s117, %s118
    %p122 = pneg %p116
    %p123 = scmp.eq.s32.totalorder %s10, 3
    %p124 = por %p122, %p123
    %p125 = scmp.ne.s32.totalorder %s117, %s120
    %p126 = scmp.eq.s32.totalorder %s10, 0
    %p127 = por %p125, %p126
    %p128 = scmp.ne.s32.totalorder %s117, %s120
    %p129 = scmp.eq.s32.totalorder %s15, 3
    %p130 = por %p128, %p129
    %p131 = scmp.ne.s32.totalorder %s120, %s121
    %p132 = scmp.eq.s32.totalorder %s15, 0
    %p133 = por %p131, %p132
    %p134 = scmp.ne.s32.totalorder %s120, %s121
    %p135 = scmp.eq.s32.totalorder %s16, 3
    %p136 = por %p134, %p135
    %p138 = scmp.ne.s32.totalorder %s121, %s137
    %p139 = scmp.eq.s32.totalorder %s16, 0
    %p140 = por %p138, %p139
    %s141 = ssub.s32 %s19, %s28
    %s142 = ssub.s32 %s17, %s36
    %s143 = sor.u32 %s141, %s142
    %p144 = scmp.eq.s32.totalorder %s143, 0
    %s146 = sadd.s32 %s145, 1
    %s147 = scalar_select %p144, %s145, %s146
    %p150 = pneg %p144
    %p151 = scmp.eq.s32.totalorder %s10, 3
    %p152 = por %p150, %p151
    %p153 = scmp.ne.s32.totalorder %s145, %s148
    %p154 = scmp.eq.s32.totalorder %s10, 0
    %p155 = por %p153, %p154
    %p156 = scmp.ne.s32.totalorder %s145, %s148
    %p157 = scmp.eq.s32.totalorder %s15, 3
    %p158 = por %p156, %p157
    %p159 = scmp.ne.s32.totalorder %s148, %s149
    %p160 = scmp.eq.s32.totalorder %s15, 0
    %p161 = por %p159, %p160
    %p162 = scmp.ne.s32.totalorder %s148, %s149
    %p163 = scmp.eq.s32.totalorder %s16, 3
    %p164 = por %p162, %p163
    %p166 = scmp.ne.s32.totalorder %s149, %s165
    %p167 = scmp.eq.s32.totalorder %s16, 0
    %p168 = por %p166, %p167
    %p169 = scmp.le.s32.totalorder 1, %s10
    %p170 = scmp.lt.s32.totalorder %s10, 5
    %p171 = pnand %p169, %p170
    %p172 = pneg %p171
    // Predicated region
    $region9: #{encoder_forward.7} parent=5 // pred_check
      _
    $region10: #{encoder_forward.7} parent=5 // pred_check_branch
      %174 = sbr.rel (%p171) target = $region12
    $region11: #{encoder_forward.7} parent=5 // pred_region
      %s175 = ssub.s32 %s10, 1
      // Predicated region
      $region13: #{encoder_forward.7} parent=11 // pred_check
        %p176 = pneg %p81
      $region14: #{encoder_forward.7} parent=11 // pred_check_branch
        %178 = sbr.rel (%p176) target = $region16
      $region15: #{encoder_forward.7} parent=11 // pred_region
        %p179 = scmp.lt.s32.totalorder %s20, 0
        %s180 = scalar_select %p179, %s20, 0
        %s181 = smul.addr %s180, 4
        %s182 = scalar_lea.vmem %s1, %s181
      $region16: #{encoder_forward.7} parent=11 // pred_fallthru
        _
      // Predicated region
      $region17: #{encoder_forward.7} parent=11 // pred_check
        %p183 = pneg %p107
      $region18: #{encoder_forward.7} parent=11 // pred_check_branch
        %185 = sbr.rel (%p183) target = $region20
      $region19: #{encoder_forward.7} parent=11 // pred_region
        %p186 = scmp.lt.s32.totalorder %s20, 0
        %s187 = scalar_select %p186, %s20, 0
        %s188 = smul.addr %s187, 4
        %s189 = scalar_lea.vmem %s2, %s188
      $region20: #{encoder_forward.7} parent=11 // pred_fallthru
        _
      // Predicated region
      $region21: #{encoder_forward.7} parent=11 // pred_check
        %p190 = pneg %p133
      $region22: #{encoder_forward.7} parent=11 // pred_check_branch
        %192 = sbr.rel (%p190) target = $region24
      $region23: #{encoder_forward.7} parent=11 // pred_region
        %p193 = scmp.lt.s32.totalorder %s20, 0
        %s194 = scalar_select %p193, %s20, 0
        %s195 = smul.addr %s194, 4
        %s196 = scalar_lea.vmem %s3, %s195
      $region24: #{encoder_forward.7} parent=11 // pred_fallthru
        _
    $region12: #{encoder_forward.7} parent=5 // pred_fallthru
      _
    %p197 = scmp.lt.s32.totalorder %s10, 4
    // Predicated region
    $region25: #{encoder_forward.7} parent=5 // pred_check
      %p198 = pneg %p197
    $region26: #{encoder_forward.7} parent=5 // pred_check_branch
      %200 = sbr.rel (%p198) target = $region28
    $region27: #{encoder_forward.7} parent=5 // pred_region
      // Predicated region
      $region29: #{encoder_forward.7} parent=27 // pred_check
        %p201 = pneg %p49
      $region30: #{encoder_forward.7} parent=27 // pred_check_branch
        %203 = sbr.rel (%p201) target = $region32
      $region31: #{encoder_forward.7} parent=27 // pred_region
        %p204 = scmp.lt.s32.totalorder %s19, 1
        %s205 = scalar_select %p204, %s19, 1
        %s206 = smul.addr %s205, 2
        %s207 = smul.addr %s206, 4
        %s208 = scalar_lea.vmem %s0, %s207
      $region32: #{encoder_forward.7} parent=27 // pred_fallthru
        _
    $region28: #{encoder_forward.7} parent=5 // pred_fallthru
      _
    %p209 = scmp.le.s32.totalorder 1, %s10
    %p210 = scmp.lt.s32.totalorder %s10, 5
    %p211 = pnand %p209, %p210
    %p212 = pneg %p211
    // Predicated region
    $region33: #{encoder_forward.7} parent=5 // pred_check
      _
    $region34: #{encoder_forward.7} parent=5 // pred_check_branch
      %214 = sbr.rel (%p211) target = $region36
    $region35: #{encoder_forward.7} parent=5 // pred_region
      %s215 = ssub.s32 %s10, 1
      %p216 = scmp.lt.s32.totalorder %s22, 1
      %s217 = scalar_select %p216, %s22, 1
      %s218 = smul.addr %s217, 2
      %s219 = smul.addr %s218, 4
      %s220 = scalar_lea.vmem %s0, %s219
      %p221 = pneg %p55
      %p222 = pneg %p52
      %p223 = scmp.lt.s32.totalorder %s20, 0
      %s224 = scalar_select %p223, %s20, 0
      %s225 = smul.addr %s224, 4
      %s226 = scalar_lea.vmem %s1, %s225
      %p227 = pneg %p81
      %p228 = pneg %p78
      %p229 = scmp.lt.s32.totalorder %s20, 0
      %s230 = scalar_select %p229, %s20, 0
      %s231 = smul.addr %s230, 4
      %s232 = scalar_lea.vmem %s2, %s231
      %p233 = pneg %p107
      %p234 = pneg %p104
      %p235 = scmp.lt.s32.totalorder %s20, 0
      %s236 = scalar_select %p235, %s20, 0
      %s237 = smul.addr %s236, 4
      %s238 = scalar_lea.vmem %s3, %s237
      %p239 = pneg %p133
      %p240 = pneg %p130
      %p241 = pneg %p161
      %p242 = pneg %p158
      %p243 = scmp.lt.s32.totalorder %s22, 1
      %s244 = scalar_select %p243, %s22, 1
      %p245 = scmp.lt.s32.totalorder %s20, 0
      %s246 = scalar_select %p245, %s20, 0
      %s247 = sadd.s32 %s246, %s244
      %s248 = smul.addr %s247, 4
      %s249 = scalar_lea.vmem %s4, %s248
      %p250 = scmp.lt.s32.totalorder %s22, 1
      %s251 = scalar_select %p250, %s22, 1
      %s252 = smul.addr %s251, 2
      %s253 = smul.addr %s252, 4
      %s254 = scalar_lea.vmem %s0, %s253
      %p255 = scmp.lt.s32.totalorder %s20, 0
      %s256 = scalar_select %p255, %s20, 0
      %s257 = smul.addr %s256, 4
      %s258 = scalar_lea.vmem %s1, %s257
      %p259 = scmp.lt.s32.totalorder %s20, 0
      %s260 = scalar_select %p259, %s20, 0
      %s261 = smul.addr %s260, 4
      %s262 = scalar_lea.vmem %s2, %s261
      %p263 = scmp.lt.s32.totalorder %s20, 0
      %s264 = scalar_select %p263, %s20, 0
      %s265 = smul.addr %s264, 4
      %s266 = scalar_lea.vmem %s3, %s265
      %p267 = scmp.lt.s32.totalorder %s22, 1
      %s268 = scalar_select %p267, %s22, 1
      %p269 = scmp.lt.s32.totalorder %s20, 0
      %s270 = scalar_select %p269, %s20, 0
      %s271 = sadd.s32 %s270, %s268
      %s272 = smul.addr %s271, 4
      %s273 = scalar_lea.vmem %s4, %s272
      %v275 = vld [vmem:[%s254] sm:$0x33]
      %v276 = vld [vmem:[%s254] sm:$0x66]
      %v277 = vld [vmem:[%s258] sm:$0xf]
      %v278 = vld [vmem:[%s258 + $0x4] sm:$0xf]
      %v279 = vld [vmem:[%s258 + $0x8] sm:$0xf]
      %v280 = vld [vmem:[%s258 + $0xc] sm:$0xf]
      %v281 = vld [vmem:[%s258 + $0x10] sm:$0xf]
      %v282 = vld [vmem:[%s258 + $0x14] sm:$0xf]
      %v283 = vld [vmem:[%s258 + $0x18] sm:$0xf]
      %v284 = vld [vmem:[%s258 + $0x1c] sm:$0xf]
      %v285 = vld [vmem:[%s258 + $0x20] sm:$0xf]
      %v286 = vld [vmem:[%s258 + $0x24] sm:$0xf]
      %v287 = vld [vmem:[%s258 + $0x28] sm:$0xf]
      %v288 = vld [vmem:[%s258 + $0x2c] sm:$0xf]
      %v289 = vld [vmem:[%s258 + $0x30] sm:$0xf]
      %v290 = vld [vmem:[%s258 + $0x34] sm:$0xf]
      %v291 = vld [vmem:[%s258 + $0x38] sm:$0xf]
      %v292 = vld [vmem:[%s258 + $0x3c] sm:$0xf]
      %v293 = vld [vmem:[%s258 + $0x40] sm:$0xf]
      %v294 = vld [vmem:[%s258 + $0x44] sm:$0xf]
      %v295 = vld [vmem:[%s258 + $0x48] sm:$0xf]
      %v296 = vld [vmem:[%s258 + $0x4c] sm:$0xf]
      %v297 = vld [vmem:[%s258 + $0x50] sm:$0xf]
      %v298 = vld [vmem:[%s258 + $0x54] sm:$0xf]
      %v299 = vld [vmem:[%s258 + $0x58] sm:$0xf]
      %v300 = vld [vmem:[%s258 + $0x5c] sm:$0xf]
      %v301 = vld [vmem:[%s258 + $0x60] sm:$0xf]
      %v302 = vld [vmem:[%s258 + $0x64] sm:$0xf]
      %v303 = vld [vmem:[%s258 + $0x68] sm:$0xf]
      %v304 = vld [vmem:[%s258 + $0x6c] sm:$0xf]
      %v305 = vld [vmem:[%s258 + $0x70] sm:$0xf]
      %v306 = vld [vmem:[%s258 + $0x74] sm:$0xf]
      %v307 = vld [vmem:[%s258 + $0x78] sm:$0xf]
      %v308 = vld [vmem:[%s258 + $0x7c] sm:$0xf]
      %v309 = vld [vmem:[%s262] sm:$0xf]
      %v310 = vld [vmem:[%s262 + $0x4] sm:$0xf]
      %v311 = vld [vmem:[%s262 + $0x8] sm:$0xf]
      %v312 = vld [vmem:[%s262 + $0xc] sm:$0xf]
      %v313 = vld [vmem:[%s262 + $0x10] sm:$0xf]
      %v314 = vld [vmem:[%s262 + $0x14] sm:$0xf]
      %v315 = vld [vmem:[%s262 + $0x18] sm:$0xf]
      %v316 = vld [vmem:[%s262 + $0x1c] sm:$0xf]
      %v317 = vld [vmem:[%s262 + $0x20] sm:$0xf]
      %v318 = vld [vmem:[%s262 + $0x24] sm:$0xf]
      %v319 = vld [vmem:[%s262 + $0x28] sm:$0xf]
      %v320 = vld [vmem:[%s262 + $0x2c] sm:$0xf]
      %v321 = vld [vmem:[%s262 + $0x30] sm:$0xf]
      %v322 = vld [vmem:[%s262 + $0x34] sm:$0xf]
      %v323 = vld [vmem:[%s262 + $0x38] sm:$0xf]
      %v324 = vld [vmem:[%s262 + $0x3c] sm:$0xf]
      %v325 = vld [vmem:[%s262 + $0x40] sm:$0xf]
      %v326 = vld [vmem:[%s262 + $0x44] sm:$0xf]
      %v327 = vld [vmem:[%s262 + $0x48] sm:$0xf]
      %v328 = vld [vmem:[%s262 + $0x4c] sm:$0xf]
      %v329 = vld [vmem:[%s262 + $0x50] sm:$0xf]
      %v330 = vld [vmem:[%s262 + $0x54] sm:$0xf]
      %v331 = vld [vmem:[%s262 + $0x58] sm:$0xf]
      %v332 = vld [vmem:[%s262 + $0x5c] sm:$0xf]
      %v333 = vld [vmem:[%s262 + $0x60] sm:$0xf]
      %v334 = vld [vmem:[%s262 + $0x64] sm:$0xf]
      %v335 = vld [vmem:[%s262 + $0x68] sm:$0xf]
      %v336 = vld [vmem:[%s262 + $0x6c] sm:$0xf]
      %v337 = vld [vmem:[%s262 + $0x70] sm:$0xf]
      %v338 = vld [vmem:[%s262 + $0x74] sm:$0xf]
      %v339 = vld [vmem:[%s262 + $0x78] sm:$0xf]
      %v340 = vld [vmem:[%s262 + $0x7c] sm:$0xf]
      %v342 = vunpack.c.l.b16 %v276
      %v343 = vunpack.c.h.b16 %v276
      %v344 = vpack.c.b16 %v342, %v342
      %v345 = vpack.c.b16 %v343, %v343
      %v346 = vrot.slane %v344, 1
      %v347 = vrot.slane %v345, 1
      %v382 = vunpack.c.l.b16 %v309
      %v383 = vunpack.c.l.b16 %v310
      %v384 = vunpack.c.l.b16 %v311
      %v385 = vunpack.c.l.b16 %v312
      %v386 = vunpack.c.l.b16 %v313
      %v387 = vunpack.c.l.b16 %v314
      %v388 = vunpack.c.l.b16 %v315
      %v389 = vunpack.c.l.b16 %v316
      %v390 = vunpack.c.l.b16 %v317
      %v391 = vunpack.c.l.b16 %v318
      %v392 = vunpack.c.l.b16 %v319
      %v393 = vunpack.c.l.b16 %v320
      %v394 = vunpack.c.l.b16 %v321
      %v395 = vunpack.c.l.b16 %v322
      %v396 = vunpack.c.l.b16 %v323
      %v397 = vunpack.c.l.b16 %v324
      %v398 = vunpack.c.l.b16 %v325
      %v399 = vunpack.c.l.b16 %v326
      %v400 = vunpack.c.l.b16 %v327
      %v401 = vunpack.c.l.b16 %v328
      %v402 = vunpack.c.l.b16 %v329
      %v403 = vunpack.c.l.b16 %v330
      %v404 = vunpack.c.l.b16 %v331
      %v405 = vunpack.c.l.b16 %v332
      %v406 = vunpack.c.l.b16 %v333
      %v407 = vunpack.c.l.b16 %v334
      %v408 = vunpack.c.l.b16 %v335
      %v409 = vunpack.c.l.b16 %v336
      %v410 = vunpack.c.l.b16 %v337
      %v411 = vunpack.c.l.b16 %v338
      %v412 = vunpack.c.l.b16 %v339
      %v413 = vunpack.c.l.b16 %v340
      %v414 = vpack.c.b16 %v383, %v382
      %v415 = vpack.c.b16 %v385, %v384
      %v416 = vpack.c.b16 %v387, %v386
      %v417 = vpack.c.b16 %v389, %v388
      %v418 = vpack.c.b16 %v391, %v390
      %v419 = vpack.c.b16 %v393, %v392
      %v420 = vpack.c.b16 %v395, %v394
      %v421 = vpack.c.b16 %v397, %v396
      %v422 = vpack.c.b16 %v399, %v398
      %v423 = vpack.c.b16 %v401, %v400
      %v424 = vpack.c.b16 %v403, %v402
      %v425 = vpack.c.b16 %v405, %v404
      %v426 = vpack.c.b16 %v407, %v406
      %v427 = vpack.c.b16 %v409, %v408
      %v428 = vpack.c.b16 %v411, %v410
      %v429 = vpack.c.b16 %v413, %v412
      %446 = vmatprep.subr.bf16.mxu0 0
      %447 = vmatpush1.bf16.msra.mxu0 %v414
      %448 = vmatprep.subr.bf16.mxu0 0
      %449 = vmatpush1.bf16.msra.mxu0 %v415
      %450 = vmatprep.subr.bf16.mxu0 0
      %451 = vmatpush1.bf16.msra.mxu0 %v416
      %452 = vmatprep.subr.bf16.mxu0 0
      %453 = vmatpush1.bf16.msra.mxu0 %v417
      %454 = vmatprep.subr.bf16.mxu0 0
      %455 = vmatpush1.bf16.msra.mxu0 %v418
      %456 = vmatprep.subr.bf16.mxu0 0
      %457 = vmatpush1.bf16.msra.mxu0 %v419
      %458 = vmatprep.subr.bf16.mxu0 0
      %459 = vmatpush1.bf16.msra.mxu0 %v420
      %460 = vmatprep.subr.bf16.mxu0 0
      %461 = vmatpush1.bf16.msra.mxu0 %v421
      %462 = vmatprep.subr.bf16.mxu0 0
      %463 = vmatpush1.bf16.msra.mxu0 %v422
      %464 = vmatprep.subr.bf16.mxu0 0
      %465 = vmatpush1.bf16.msra.mxu0 %v423
      %466 = vmatprep.subr.bf16.mxu0 0
      %467 = vmatpush1.bf16.msra.mxu0 %v424
      %468 = vmatprep.subr.bf16.mxu0 0
      %469 = vmatpush1.bf16.msra.mxu0 %v425
      %470 = vmatprep.subr.bf16.mxu0 0
      %471 = vmatpush1.bf16.msra.mxu0 %v426
      %472 = vmatprep.subr.bf16.mxu0 0
      %473 = vmatpush1.bf16.msra.mxu0 %v427
      %474 = vmatprep.subr.bf16.mxu0 0
      %475 = vmatpush1.bf16.msra.mxu0 %v428
      %476 = vmatprep.subr.bf16.mxu0 0
      %477 = vmatpush1.bf16.msra.mxu0 %v429
      %478 = vmatprep.mubr.bf16.mxu0 %v347
      %479 = vmatmul.mubr.bf16.gmra.mrb[0].mxu0 %v346
      %v480 = vpop.f32.mrb[0].mxu0
      %v481 = vadd.f32 0.0, %v480
      %v482 = vpop.f32.mrb[0].mxu0
      %v483 = vpop.f32.mrb[0].mxu0
      %v484 = vpop.f32.mrb[0].mxu0
      %485 = vdwg.mxu0
      %v487 = vunpack.c.l.b16 %v275
      %v488 = vunpack.c.h.b16 %v275
      %v489 = vpack.c.b16 %v487, %v487
      %v490 = vpack.c.b16 %v488, %v488
      %v525 = vunpack.c.l.b16 %v277
      %v526 = vunpack.c.l.b16 %v278
      %v527 = vunpack.c.l.b16 %v279
      %v528 = vunpack.c.l.b16 %v280
      %v529 = vunpack.c.l.b16 %v281
      %v530 = vunpack.c.l.b16 %v282
      %v531 = vunpack.c.l.b16 %v283
      %v532 = vunpack.c.l.b16 %v284
      %v533 = vunpack.c.l.b16 %v285
      %v534 = vunpack.c.l.b16 %v286
      %v535 = vunpack.c.l.b16 %v287
      %v536 = vunpack.c.l.b16 %v288
      %v537 = vunpack.c.l.b16 %v289
      %v538 = vunpack.c.l.b16 %v290
      %v539 = vunpack.c.l.b16 %v291
      %v540 = vunpack.c.l.b16 %v292
      %v541 = vunpack.c.l.b16 %v293
      %v542 = vunpack.c.l.b16 %v294
      %v543 = vunpack.c.l.b16 %v295
      %v544 = vunpack.c.l.b16 %v296
      %v545 = vunpack.c.l.b16 %v297
      %v546 = vunpack.c.l.b16 %v298
      %v547 = vunpack.c.l.b16 %v299
      %v548 = vunpack.c.l.b16 %v300
      %v549 = vunpack.c.l.b16 %v301
      %v550 = vunpack.c.l.b16 %v302
      %v551 = vunpack.c.l.b16 %v303
      %v552 = vunpack.c.l.b16 %v304
      %v553 = vunpack.c.l.b16 %v305
      %v554 = vunpack.c.l.b16 %v306
      %v555 = vunpack.c.l.b16 %v307
      %v556 = vunpack.c.l.b16 %v308
      %v557 = vpack.c.b16 %v526, %v525
      %v558 = vpack.c.b16 %v528, %v527
      %v559 = vpack.c.b16 %v530, %v529
      %v560 = vpack.c.b16 %v532, %v531
      %v561 = vpack.c.b16 %v534, %v533
      %v562 = vpack.c.b16 %v536, %v535
      %v563 = vpack.c.b16 %v538, %v537
      %v564 = vpack.c.b16 %v540, %v539
      %v565 = vpack.c.b16 %v542, %v541
      %v566 = vpack.c.b16 %v544, %v543
      %v567 = vpack.c.b16 %v546, %v545
      %v568 = vpack.c.b16 %v548, %v547
      %v569 = vpack.c.b16 %v550, %v549
      %v570 = vpack.c.b16 %v552, %v551
      %v571 = vpack.c.b16 %v554, %v553
      %v572 = vpack.c.b16 %v556, %v555
      %589 = vmatprep.subr.bf16.mxu0 0
      %590 = vmatpush1.bf16.msra.mxu0 %v557
      %591 = vmatprep.subr.bf16.mxu0 0
      %592 = vmatpush1.bf16.msra.mxu0 %v558
      %593 = vmatprep.subr.bf16.mxu0 0
      %594 = vmatpush1.bf16.msra.mxu0 %v559
      %595 = vmatprep.subr.bf16.mxu0 0
      %596 = vmatpush1.bf16.msra.mxu0 %v560
      %597 = vmatprep.subr.bf16.mxu0 0
      %598 = vmatpush1.bf16.msra.mxu0 %v561
      %599 = vmatprep.subr.bf16.mxu0 0
      %600 = vmatpush1.bf16.msra.mxu0 %v562
      %601 = vmatprep.subr.bf16.mxu0 0
      %602 = vmatpush1.bf16.msra.mxu0 %v563
      %603 = vmatprep.subr.bf16.mxu0 0
      %604 = vmatpush1.bf16.msra.mxu0 %v564
      %605 = vmatprep.subr.bf16.mxu0 0
      %606 = vmatpush1.bf16.msra.mxu0 %v565
      %607 = vmatprep.subr.bf16.mxu0 0
      %608 = vmatpush1.bf16.msra.mxu0 %v566
      %609 = vmatprep.subr.bf16.mxu0 0
      %610 = vmatpush1.bf16.msra.mxu0 %v567
      %611 = vmatprep.subr.bf16.mxu0 0
      %612 = vmatpush1.bf16.msra.mxu0 %v568
      %613 = vmatprep.subr.bf16.mxu0 0
      %614 = vmatpush1.bf16.msra.mxu0 %v569
      %615 = vmatprep.subr.bf16.mxu0 0
      %616 = vmatpush1.bf16.msra.mxu0 %v570
      %617 = vmatprep.subr.bf16.mxu0 0
      %618 = vmatpush1.bf16.msra.mxu0 %v571
      %619 = vmatprep.subr.bf16.mxu0 0
      %620 = vmatpush1.bf16.msra.mxu0 %v572
      %621 = vmatprep.mubr.bf16.mxu0 %v490
      %622 = vmatmul.mubr.bf16.gmra.mrb[0].mxu0 %v489
      %v623 = vpop.f32.mrb[0].mxu0
      %v624 = vadd.f32 %v481, %v623
      %v625 = vpop.f32.mrb[0].mxu0
      %v626 = vpop.f32.mrb[0].mxu0
      %v627 = vpop.f32.mrb[0].mxu0
      %628 = vdwg.mxu0
      %v629 = vld [vmem:[%s266] sm:$0x1]
      %v630 = vlaneseq
      %v631 = vshrl.u32 %v630, 7
      %v632 = vsub.s32 0, %v631
      %v633 = vrot.slane %v629, %v632
      %v634 = vadd.f32 %v624, %v633
      %v635 = vmul.f32 %v634, 0.2
      %v636 = vmax.f32 %v634, %v635
      %p637 = scmp.eq.s32.totalorder %s21, 0
      %p638 = scmp.eq.s32.totalorder %s22, 0
      %p639 = pnand %p637, %p638
      %p640 = pneg %p639
      // Predicated region
      $region37: #{encoder_forward.7} parent=35 // pred_check
        _
      $region38: #{encoder_forward.7} parent=35 // pred_check_branch
        %642 = sbr.rel (%p639) target = $region40
      $region39: #{encoder_forward.7} parent=35 // pred_region
        %643 = vst [vmem:[#allocation2] sm:$0x3] 0.0
      $region40: #{encoder_forward.7} parent=35 // pred_fallthru
        _
      // Predicated region
      $region41: #{encoder_forward.7} parent=35 // pred_check
        %p644 = pneg %p637
      $region42: #{encoder_forward.7} parent=35 // pred_check_branch
        %646 = sbr.rel (%p644) target = $region44
      $region43: #{encoder_forward.7} parent=35 // pred_region
        %v647 = vld [vmem:[#allocation2] sm:$0x3]
        %vm648 = vcmask 1043456
        %v649 = vsel %vm648, %v636, 0.0
        %v650 = vrot.slane %v649, 4
        %v651 = vadd.f32 %v649, %v650
        %v652 = vrot.slane %v651, 2
        %v653 = vadd.f32 %v651, %v652
        %v654 = vrot.slane %v653, 1
        %v655 = vadd.f32 %v653, %v654
        %v656 = vmul.f32 %v636, %v636
        %v657 = vsel %vm648, %v656, 0.0
        %v658 = vrot.slane %v657, 4
        %v659 = vadd.f32 %v657, %v658
        %v660 = vrot.slane %v659, 2
        %v661 = vadd.f32 %v659, %v660
        %v662 = vrot.slane %v661, 1
        %v663 = vadd.f32 %v661, %v662
        %vm664 = vcmask 1040384
        %v665 = vsel %vm664, %v655, %v663
        %v666 = vadd.f32 %v647, %v665
        %667 = vst [vmem:[#allocation2] sm:$0x3] %v666
      $region44: #{encoder_forward.7} parent=35 // pred_fallthru
        _
      %p668 = scmp.eq.s32.totalorder %s21, 1
      %p669 = pnand %p668, %p638
      %p670 = pneg %p669
      // Predicated region
      $region45: #{encoder_forward.7} parent=35 // pred_check
        _
      $region46: #{encoder_forward.7} parent=35 // pred_check_branch
        %672 = sbr.rel (%p669) target = $region48
      $region47: #{encoder_forward.7} parent=35 // pred_region
        %v673 = vld [vmem:[#allocation2] sm:$0x1]
        %v674 = vmul.f32 %v673, 0.125
        %v675 = vld [vmem:[#allocation2 + $0x1] sm:$0x1]
        %v676 = vmul.f32 %v675, 0.125
        %v677 = vmul.f32 %v674, %v674
        %v678 = vsub.f32 %v676, %v677
        %v679 = vadd.f32 %v678, 1e-05
        %v680 = vrsqrt.pop %v679
        %v681 = vld [vmem:[%s266 + $0x1] sm:$0x1]
        %v682 = vmul.f32 %v681, %v680
        %v683 = vld [vmem:[%s266 + $0x2] sm:$0x1]
        %v684 = vmul.f32 %v674, %v682
        %v685 = vsub.f32 %v683, %v684
        %v687 = vrot.slane %v685, 7
        %vm689 = vcmask 1040384
        %v690 = vsel %vm689, %v682, %v687
        %691 = vst [vmem:[#allocation3] sm:$0x3] %v690
      $region48: #{encoder_forward.7} parent=35 // pred_fallthru
        _
      // Predicated region
      $region49: #{encoder_forward.7} parent=35 // pred_check
        %p692 = pneg %p668
      $region50: #{encoder_forward.7} parent=35 // pred_check_branch
        %694 = sbr.rel (%p692) target = $region52
      $region51: #{encoder_forward.7} parent=35 // pred_region
        %v695 = vld [vmem:[#allocation3] sm:$0x1]
        %v696 = vlaneseq
        %v697 = vshrl.u32 %v696, 7
        %v698 = vsub.s32 0, %v697
        %v699 = vrot.slane %v695, %v698
        %v700 = vmul.f32 %v636, %v699
        %v701 = vld [vmem:[#allocation3 + $0x1] sm:$0x1]
        %v702 = vlaneseq
        %v703 = vshrl.u32 %v702, 7
        %v704 = vsub.s32 0, %v703
        %v705 = vrot.slane %v701, %v704
        %v706 = vadd.f32 %v700, %v705
        %707 = vst [vmem:[%s273] sm:$0xf] %v706
      $region52: #{encoder_forward.7} parent=35 // pred_fallthru
        _
      %p708 = scmp.lt.s32.totalorder %s22, 1
      %s709 = scalar_select %p708, %s22, 1
      %p710 = scmp.lt.s32.totalorder %s20, 0
      %s711 = scalar_select %p710, %s20, 0
      %s712 = sadd.s32 %s711, %s709
      %s713 = smul.addr %s712, 4
      %s714 = scalar_lea.vmem %s4, %s713
      // Predicated region
      $region53: #{encoder_forward.7} parent=35 // pred_check
        %p715 = pneg %p158
      $region54: #{encoder_forward.7} parent=35 // pred_check_branch
        %717 = sbr.rel (%p715) target = $region56
      $region55: #{encoder_forward.7} parent=35 // pred_region
        _
      $region56: #{encoder_forward.7} parent=35 // pred_fallthru
        _
    $region36: #{encoder_forward.7} parent=5 // pred_fallthru
      _
    %p718 = scmp.le.s32.totalorder 2, %s10
    // Predicated region
    $region57: #{encoder_forward.7} parent=5 // pred_check
      %p719 = pneg %p718
    $region58: #{encoder_forward.7} parent=5 // pred_check_branch
      %721 = sbr.rel (%p719) target = $region60
    $region59: #{encoder_forward.7} parent=5 // pred_region
      %s722 = ssub.s32 %s10, 2
      // Predicated region
      $region61: #{encoder_forward.7} parent=59 // pred_check
        %p723 = pneg %p164
      $region62: #{encoder_forward.7} parent=59 // pred_check_branch
        %725 = sbr.rel (%p723) target = $region64
      $region63: #{encoder_forward.7} parent=59 // pred_region
        %p726 = scmp.lt.s32.totalorder %s25, 1
        %s727 = scalar_select %p726, %s25, 1
        %p728 = scmp.lt.s32.totalorder %s23, 0
        %s729 = scalar_select %p728, %s23, 0
        %s730 = sadd.s32 %s729, %s727
        %s731 = smul.addr %s730, 4
        %s732 = scalar_lea.vmem %s4, %s731
      $region64: #{encoder_forward.7} parent=59 // pred_fallthru
        _
    $region60: #{encoder_forward.7} parent=5 // pred_fallthru
      _
  $region6: #{encoder_forward.7} parent=0 // loop_footer
    %s14 = sadd.s32 1, %s10
  $region7: #{encoder_forward.7} parent=0 // loop_footer_branch
    %9 = sbr.rel target = $region3
  $region8: #{encoder_forward.7} parent=0 // loop_exit
    _

</llo_original>
